<compile_context>
chip_gen: v6e
topology: v6e:2x2x1
jax: 0.10.0
libtpu: 0.0.40
codegen_flags: <defaults>
</compile_context>

<pallas_src>
import functools

import jax
import jax.numpy as jnp
from jax.experimental import pallas as pl
from jax.experimental.pallas import tpu as pltpu

EPS = 1e-5                       # torch.nn.GroupNorm default eps
LANE = 128
VMEM_LIMIT = 32 * 1024 * 1024    # explicit scoped-VMEM limit (v5e default is only 16 MiB)
_SQRT_2_OVER_PI = 0.7978845608028654


# ----------------------------------------------------------------------------
# trace-time helpers
# ----------------------------------------------------------------------------
def _round_up(v, m):
    return ((v + m - 1) // m) * m


def _pick_tile(dim, cap):
    """Largest multiple of 128 <= cap dividing dim (dim must be a multiple of 128)."""
    for t in range(cap, LANE - 1, -LANE):
        if dim % t == 0:
            return t
    return LANE


def _m_tiling(m, cap):
    """Pick an M tile.  Prefer a divisor of m (no pad / slice HBM round trips).
    Returns (padded_m, tile_m)."""
    if m <= cap:
        return m, m                       # full-dim block (legal even if m % 8 != 0)
    for t in range(cap, 7, -8):
        if m % t == 0:
            return m, t
    mp = _round_up(m, 256)                # rare ragged fallback
    return mp, 256


def _pick_hw_chunk(hw, row_elems, elem_bytes=2, max_bytes=2 << 20):
    """HW chunk for the streaming norm/pool kernels.  row_elems = elements per HW row of the
    BLOCK (so the budget accounts for the whole block, incl. the batch dim for the head)."""
    limit = max(8, max_bytes // (row_elems * elem_bytes))
    if hw <= limit:
        return hw
    start = limit - (limit % 8)
    for cand in range(start, 7, -8):
        if hw % cand == 0:
            return cand
    # TODO(synk): hw with no multiple-of-8 divisor under the budget -> single full chunk.
    return hw


def _gelu_tanh(x):
    # tanh-approx GELU; ~1e-3 relative delta vs PyTorch's exact-erf nn.GELU().
    return 0.5 * x * (1.0 + jnp.tanh(_SQRT_2_OVER_PI * (x + 0.044715 * x * x * x)))


# ----------------------------------------------------------------------------
# Kernel 1: channel matmul with fused bias / GELU / residual epilogue.
#   Default path: K collapsed -> one dot per (M,N) tile, grid = (M tiles, N tiles).
#   Fallback (K % 128 == 0 and K > 1536): split-K with f32 VMEM accumulator.
# ----------------------------------------------------------------------------
def _matmul_kernel(x_ref, w_ref, *rest, apply_gelu, has_bias, has_res, split_k):
    idx = 0
    b_ref = rest[idx] if has_bias else None
    idx += int(has_bias)
    res_ref = rest[idx] if has_res else None
    idx += int(has_res)
    o_ref = rest[idx]
    acc_ref = rest[idx + 1] if split_k else None

    def epilogue(y):
        if has_bias:
            y = y + b_ref[...].astype(jnp.float32)
        if apply_gelu:
            y = _gelu_tanh(y)
        if has_res:
            y = y + res_ref[...].astype(jnp.float32)
        o_ref[...] = y.astype(o_ref.dtype)

    if not split_k:
        epilogue(jnp.dot(x_ref[...], w_ref[...], preferred_element_type=jnp.float32))
    else:
        kk = pl.program_id(2)

        @pl.when(kk == 0)
        def _():
            acc_ref[...] = jnp.zeros_like(acc_ref)

        acc_ref[...] += jnp.dot(x_ref[...], w_ref[...], preferred_element_type=jnp.float32)

        @pl.when(kk == pl.num_programs(2) - 1)
        def _():
            epilogue(acc_ref[...])


def pallas_matmul(x, w, bias=None, residual=None, apply_gelu=False, out_dtype=jnp.bfloat16):
    """x: (M, K) bf16, w: (K, N) bf16, bias: (1, N) f32, residual: (M, N) bf16."""
    m, k = x.shape
    k2, n = w.shape
    assert k == k2

    tn = _pick_tile(n, 512) if n % LANE == 0 else n
    split_k = (k % LANE == 0) and (k > 1536)
    tk = _pick_tile(k, 512) if split_k else k

    # Bound the x block to ~4 MiB so double buffering fits the 32 MiB scoped VMEM everywhere.
    cap = 1024
    while cap > 256 and cap * tk * x.dtype.itemsize > (4 << 20):
        cap //= 2
    mp, tm = _m_tiling(m, cap)
    if mp != m:
        x = jnp.pad(x, ((0, mp - m), (0, 0)))
        if residual is not None:
            residual = jnp.pad(residual, ((0, mp - m), (0, 0)))

    has_bias = bias is not None
    has_res = residual is not None

    if split_k:
        grid = (mp // tm, n // tn, k // tk)
        x_spec = pl.BlockSpec((tm, tk), lambda i, j, kk: (i, kk))
        w_spec = pl.BlockSpec((tk, tn), lambda i, j, kk: (kk, j))
        b_spec = pl.BlockSpec((1, tn), lambda i, j, kk: (0, j))
        r_spec = pl.BlockSpec((tm, tn), lambda i, j, kk: (i, j))
        o_spec = pl.BlockSpec((tm, tn), lambda i, j, kk: (i, j))
        scratch = [pltpu.VMEM((tm, tn), jnp.float32)]
        sem = ("parallel", "parallel", "arbitrary")
    else:
        grid = (mp // tm, n // tn)
        x_spec = pl.BlockSpec((tm, k), lambda i, j: (i, 0))
        w_spec = pl.BlockSpec((k, tn), lambda i, j: (0, j))
        b_spec = pl.BlockSpec((1, tn), lambda i, j: (0, j))
        r_spec = pl.BlockSpec((tm, tn), lambda i, j: (i, j))
        o_spec = pl.BlockSpec((tm, tn), lambda i, j: (i, j))
        scratch = []
        sem = ("parallel", "parallel")

    in_specs = [x_spec, w_spec]
    args = [x, w]
    if has_bias:
        in_specs.append(b_spec)
        args.append(bias)
    if has_res:
        in_specs.append(r_spec)
        args.append(residual)

    out = pl.pallas_call(
        functools.partial(_matmul_kernel, apply_gelu=apply_gelu, has_bias=has_bias,
                          has_res=has_res, split_k=split_k),
        out_shape=jax.ShapeDtypeStruct((mp, n), out_dtype),
        grid=grid,
        in_specs=in_specs,
        out_specs=o_spec,
        scratch_shapes=scratch,
        compiler_params=pltpu.CompilerParams(
            dimension_semantics=sem, vmem_limit_bytes=VMEM_LIMIT),
    )(*args)
    return out[:m] if mp != m else out


# ----------------------------------------------------------------------------
# Kernel 2: LayerNorm2d == GroupNorm(1, C), streaming two-phase.
#   grid = (sample, phase, HW chunk).  Phase 0: per-channel sum/sumsq partials via the MXU
#   (ones^T @ x keeps the pass HBM-bound on v7x).  Phase 1: x*scale + shift (hoisted).
#   NOTE: during phase 0 the output block is parked at (nn, 0, 0) and never written; Pallas only
#   flushes an output buffer when its block index changes, and phase-1 chunk 0 writes that same
#   block first, so nothing stale ever reaches HBM (relies on current revisit semantics).
# ----------------------------------------------------------------------------
def _groupnorm_kernel(x_ref, g_ref, b_ref, o_ref, sum_ref, sq_ref, *, inv_count, eps):
    p = pl.program_id(1)
    c = pl.program_id(2)

    @pl.when((p == 0) & (c == 0))
    def _():
        sum_ref[...] = jnp.zeros_like(sum_ref)
        sq_ref[...] = jnp.zeros_like(sq_ref)

    @pl.when(p == 0)
    def _():
        xf = x_ref[0].astype(jnp.float32)                      # (chunk, C)
        ones = jnp.ones((1, xf.shape[0]), jnp.float32)
        # Route the per-channel reductions through the (idle) MXU instead of VPU sublane sums.
        sum_ref[...] += jnp.dot(ones, xf, preferred_element_type=jnp.float32)
        sq_ref[...] += jnp.dot(ones, xf * xf, preferred_element_type=jnp.float32)

    @pl.when(p == 1)
    def _():
        mu = jnp.sum(sum_ref[...]) * inv_count
        var = jnp.sum(sq_ref[...]) * inv_count - mu * mu       # E[x^2]-E[x]^2; clamped below
        var = jnp.maximum(var, 0.0)
        inv = jax.lax.rsqrt(var + eps)
        scale = g_ref[...] * inv                                # (1,1,C), hoisted per chunk
        shift = b_ref[...] - mu * scale
        o_ref[...] = (x_ref[...].astype(jnp.float32) * scale + shift).astype(o_ref.dtype)


def pallas_groupnorm(x, gamma, beta, eps=EPS):
    """x: (N, HW, C) bf16;  gamma/beta: (1, 1, C) f32."""
    n, hw, c = x.shape
    chunk = _pick_hw_chunk(hw, c)
    nchunks = hw // chunk
    inv_count = 1.0 / float(hw * c)

    return pl.pallas_call(
        functools.partial(_groupnorm_kernel, inv_count=inv_count, eps=eps),
        out_shape=jax.ShapeDtypeStruct((n, hw, c), x.dtype),
        grid=(n, 2, nchunks),
        in_specs=[
            pl.BlockSpec((1, chunk, c), lambda nn, p, ci: (nn, ci, 0)),
            pl.BlockSpec((1, 1, c), lambda nn, p, ci: (0, 0, 0)),
            pl.BlockSpec((1, 1, c), lambda nn, p, ci: (0, 0, 0)),
        ],
        # phase 0 parks on block (nn, 0); phase 1 walks the real output blocks.
        out_specs=pl.BlockSpec((1, chunk, c), lambda nn, p, ci: (nn, ci * p, 0)),
        scratch_shapes=[pltpu.VMEM((1, c), jnp.float32),
                        pltpu.VMEM((1, c), jnp.float32)],
        compiler_params=pltpu.CompilerParams(
            dimension_semantics=("parallel", "arbitrary", "arbitrary"),
            vmem_limit_bytes=VMEM_LIMIT),
    )(x, gamma, beta)


# ----------------------------------------------------------------------------
# Kernel 3: fused embedder head: AdaptiveAvgPool2d(1) -> GroupNorm(1,C) -> Flatten -> Linear.
#   grid = (HW chunks,); (N, C) f32 pooling accumulator; finalize on the last chunk.
#   Chunk budget accounts for the full (N, chunk, C) block (v7x VMEM safety).
# ----------------------------------------------------------------------------
def _head_kernel(x_ref, g_ref, b_ref, w_ref, lb_ref, o_ref, acc_ref, *, inv_hw, inv_c, eps):
    ci = pl.program_id(0)

    @pl.when(ci == 0)
    def _():
        acc_ref[...] = jnp.zeros_like(acc_ref)

    acc_ref[...] += jnp.sum(x_ref[...].astype(jnp.float32), axis=1)        # (N, C)

    @pl.when(ci == pl.num_programs(0) - 1)
    def _():
        pooled = acc_ref[...] * inv_hw                                      # (N, C)
        mu = jnp.sum(pooled, axis=1, keepdims=True) * inv_c
        var = jnp.sum(pooled * pooled, axis=1, keepdims=True) * inv_c - mu * mu
        var = jnp.maximum(var, 0.0)
        scale = g_ref[...] * jax.lax.rsqrt(var + eps)
        h = pooled * scale + (b_ref[...] - mu * scale)
        y = jnp.dot(h.astype(jnp.bfloat16), w_ref[...],
                    preferred_element_type=jnp.float32)                     # bf16 MXU, f32 acc
        o_ref[...] = y + lb_ref[...]


def pallas_head(x, gamma, beta, w, b, eps=EPS):
    """x: (N, HW, C) bf16; gamma/beta: (1, C) f32; w: (C, O) bf16; b: (1, O) f32."""
    n, hw, c = x.shape
    o = w.shape[1]
    chunk = _pick_hw_chunk(hw, n * c)                 # budget includes the batch dim
    nchunks = hw // chunk

    return pl.pallas_call(
        functools.partial(_head_kernel, inv_hw=1.0 / float(hw), inv_c=1.0 / float(c), eps=eps),
        out_shape=jax.ShapeDtypeStruct((n, o), jnp.float32),
        grid=(nchunks,),
        in_specs=[
            pl.BlockSpec((n, chunk, c), lambda ci: (0, ci, 0)),
            pl.BlockSpec((1, c), lambda ci: (0, 0)),
            pl.BlockSpec((1, c), lambda ci: (0, 0)),
            pl.BlockSpec((c, o), lambda ci: (0, 0)),
            pl.BlockSpec((1, o), lambda ci: (0, 0)),
        ],
        out_specs=pl.BlockSpec((n, o), lambda ci: (0, 0)),
        scratch_shapes=[pltpu.VMEM((n, c), jnp.float32)],
        compiler_params=pltpu.CompilerParams(
            dimension_semantics=("arbitrary",), vmem_limit_bytes=VMEM_LIMIT),
    )(x, gamma, beta, w, b)


# ----------------------------------------------------------------------------
# Glue: im2col for the 3x3 / stride-2 / pad-1 conv, on TRUE channel width (no 128 padding).
# Column order is (ki, kj, cin), matching the weight layout in init_params.
# TODO(synk): replace with an in-kernel 9-tap accumulation (halo DMA) to drop the 2.25x blowup.
# ----------------------------------------------------------------------------
def im2col_s2(x):
    n, h, w, c = x.shape
    hout = (h + 2 - 3) // 2 + 1
    wout = (w + 2 - 3) // 2 + 1
    xp = jnp.pad(x, ((0, 0), (1, 1), (1, 1), (0, 0)))
    patches = [xp[:, ki:ki + 2 * hout:2, kj:kj + 2 * wout:2, :]
               for ki in range(3) for kj in range(3)]
    cols = jnp.concatenate(patches, axis=-1)                  # (N, Hout, Wout, 9*C)
    return cols.reshape(n * hout * wout, 9 * c), hout, wout


# ----------------------------------------------------------------------------
# Forward pass
# ----------------------------------------------------------------------------
def down_block(x, p):
    n, h, w, _ = x.shape
    cols, hout, wout = im2col_s2(x)
    # in_conv: Conv2d(c, 2c, 3, stride=2, pad=1, bias=False) + LayerNorm2d(2c)
    y = pallas_matmul(cols, p["conv_w"])                      # (M, 2c), no bias
    c2 = y.shape[1]
    y = pallas_groupnorm(y.reshape(n, hout * wout, c2), p["gn_g"], p["gn_b"])
    # block: Conv1x1(2c->4c) -> GELU -> Conv1x1(4c->2c); residual add fused into 2nd matmul
    yf = y.reshape(n * hout * wout, c2)
    h1 = pallas_matmul(yf, p["w1"], bias=p["b1"], apply_gelu=True)
    out = pallas_matmul(h1, p["w2"], bias=p["b2"], residual=yf)
    return out.reshape(n, hout, wout, c2)


def img_embedder_forward(x_nchw, params):
    # NCHW (PyTorch) -> NHWC + bf16 cast; no channel padding (true widths everywhere).
    x = jnp.transpose(x_nchw, (0, 2, 3, 1)).astype(jnp.bfloat16)
    n, h, w, cin = x.shape

    # in_conv: 1x1 conv with bias (K = true in_chans; block last dim == full dim is legal)
    y = pallas_matmul(x.reshape(n * h * w, cin),
                      params["in_conv"]["w"], bias=params["in_conv"]["b"])
    x = y.reshape(n, h, w, y.shape[1])

    for blk in params["blocks"]:
        x = down_block(x, blk)

    n, h, w, c = x.shape
    hd = params["head"]
    return pallas_head(x.reshape(n, h * w, c), hd["g"], hd["b"], hd["w"], hd["lb"])


# ----------------------------------------------------------------------------
# Deterministic parameter init (true-width shapes, bf16 matmul weights, f32 biases/affines).
# To import a real PyTorch checkpoint:
#   1x1 conv  weight (Cout,Cin,1,1)  -> weight[:, :, 0, 0].T                       -> (Cin, Cout)
#   3x3 conv  weight (Cout,Cin,3,3)  -> weight.permute(2,3,1,0).reshape(9*Cin,Cout)
#   Linear    weight (Out,In)        -> weight.T                                   -> (In, Out)
# ----------------------------------------------------------------------------
def init_params(key, in_chans, out_chans, first_chans, num_blocks):
    keys = iter(jax.random.split(key, 8 + 6 * num_blocks))

    def nrm(shape, scale=0.05):
        return scale * jax.random.normal(next(keys), shape, jnp.float32)

    params = {"in_conv": {
        "w": nrm((in_chans, first_chans)).astype(jnp.bfloat16),
        "b": nrm((1, first_chans)),                                        # f32
    }}

    blocks = []
    c = first_chans
    for _ in range(num_blocks):
        c2, c4 = 2 * c, 4 * c
        blocks.append({
            "conv_w": nrm((3, 3, c, c2)).reshape(9 * c, c2).astype(jnp.bfloat16),
            "gn_g": jnp.ones((1, 1, c2), jnp.float32),                     # PyTorch GN init
            "gn_b": jnp.zeros((1, 1, c2), jnp.float32),
            "w1": nrm((c2, c4)).astype(jnp.bfloat16),
            "b1": nrm((1, c4)),
            "w2": nrm((c4, c2)).astype(jnp.bfloat16),
            "b2": nrm((1, c2)),
        })
        c = c2
    params["blocks"] = blocks

    params["head"] = {
        "g": jnp.ones((1, c), jnp.float32),
        "b": jnp.zeros((1, c), jnp.float32),
        "w": nrm((c, out_chans)).astype(jnp.bfloat16),
        "lb": nrm((1, out_chans)),                                         # f32
    }
    return params


if __name__ == "__main__":
    key = jax.random.PRNGKey(0)
    k_x, k_p = jax.random.split(key)

    # Small config: in_chans=4, out_chans=32, first_chans=8, num_blocks=2
    in_chans, out_chans, first_chans, num_blocks = 4, 32, 8, 2
    x = jax.random.normal(k_x, (2, in_chans, 16, 16), jnp.float32)         # NCHW, like PyTorch

    params = init_params(k_p, in_chans, out_chans, first_chans, num_blocks)
    fwd = jax.jit(img_embedder_forward)
    out = jax.block_until_ready(fwd(x, params))
    assert out.shape == (2, out_chans), out.shape
    assert bool(jnp.all(jnp.isfinite(out)))
    print("KERNEL_OK")
</pallas_src>

<mosaic_0001>
module attributes {stable_mosaic.version = 11 : i64} {
  func.func @_matmul_kernel(%arg0: i32, %arg1: i32, %arg2: memref<512x4xbf16, #tpu.memory_space<vmem>>, %arg3: memref<4x8xbf16, #tpu.memory_space<vmem>>, %arg4: memref<1x8xf32, #tpu.memory_space<vmem>>, %arg5: memref<512x8xbf16, #tpu.memory_space<vmem>>) attributes {dimension_semantics = [#tpu.dimension_semantics<parallel>, #tpu.dimension_semantics<parallel>], iteration_bounds = array<i64: 1, 1>, scalar_prefetch = 0 : i64, scratch_operands = 0 : i64, tpu.core_type = #tpu.core_type<tc>, window_params = [{transform_indices = @transform_0, window_bounds = array<i64: 512, 4>}, {transform_indices = @transform_1, window_bounds = array<i64: 4, 8>}, {transform_indices = @transform_2, window_bounds = array<i64: 1, 8>}, {transform_indices = @transform_3, window_bounds = array<i64: 512, 8>}]} {
    %c0 = arith.constant 0 : index
    %c0_0 = arith.constant 0 : index
    %0 = vector.load %arg2[%c0, %c0_0] : memref<512x4xbf16, #tpu.memory_space<vmem>>, vector<512x4xbf16>
    %c0_1 = arith.constant 0 : index
    %c0_2 = arith.constant 0 : index
    %1 = vector.load %arg3[%c0_1, %c0_2] : memref<4x8xbf16, #tpu.memory_space<vmem>>, vector<4x8xbf16>
    %cst = arith.constant dense<0.000000e+00> : vector<512x8xf32>
    %2 = tpu.matmul %0, %1, %cst {dimension_numbers = #tpu.dot_dimension_numbers<[1], [0], [0], [1], [0, 0, 1, 1], [], []>} : vector<512x4xbf16>, vector<4x8xbf16>, vector<512x8xf32> -> vector<512x8xf32>
    %c0_3 = arith.constant 0 : index
    %c0_4 = arith.constant 0 : index
    %3 = vector.load %arg4[%c0_3, %c0_4] : memref<1x8xf32, #tpu.memory_space<vmem>>, vector<1x8xf32>
    %4 = vector.broadcast %3 : vector<1x8xf32> to vector<512x8xf32>
    %5 = arith.addf %2, %4 : vector<512x8xf32>
    %6 = arith.truncf %5 : vector<512x8xf32> to vector<512x8xbf16>
    %c0_5 = arith.constant 0 : index
    %c0_6 = arith.constant 0 : index
    %7 = vector.load %arg5[%c0_5, %c0_6] : memref<512x8xbf16, #tpu.memory_space<vmem>>, vector<512x8xbf16>
    tpu.vector_store %arg5[%c0_5, %c0_6], %6 {strides = array<i32>} : memref<512x8xbf16, #tpu.memory_space<vmem>>, vector<512x8xbf16>,
    return
  }
  func.func @transform_0(%arg0: i32, %arg1: i32) -> (i32, i32) {
    %c0_i32 = arith.constant 0 : i32
    %c0_i32_0 = arith.constant 0 : i32
    return %arg0, %c0_i32 : i32, i32
  }
  func.func @transform_1(%arg0: i32, %arg1: i32) -> (i32, i32) {
    %c0_i32 = arith.constant 0 : i32
    %c0_i32_0 = arith.constant 0 : i32
    return %c0_i32, %arg1 : i32, i32
  }
  func.func @transform_2(%arg0: i32, %arg1: i32) -> (i32, i32) {
    %c0_i32 = arith.constant 0 : i32
    %c0_i32_0 = arith.constant 0 : i32
    return %c0_i32, %arg1 : i32, i32
  }
  func.func @transform_3(%arg0: i32, %arg1: i32) -> (i32, i32) {
    %c0_i32 = arith.constant 0 : i32
    return %arg0, %arg1 : i32, i32
  }
}

module attributes {stable_mosaic.version = 11 : i64} {
  func.func @_matmul_kernel(%arg0: i32, %arg1: i32, %arg2: memref<128x72xbf16, #tpu.memory_space<vmem>>, %arg3: memref<72x16xbf16, #tpu.memory_space<vmem>>, %arg4: memref<128x16xbf16, #tpu.memory_space<vmem>>) attributes {dimension_semantics = [#tpu.dimension_semantics<parallel>, #tpu.dimension_semantics<parallel>], iteration_bounds = array<i64: 1, 1>, scalar_prefetch = 0 : i64, scratch_operands = 0 : i64, tpu.core_type = #tpu.core_type<tc>, window_params = [{transform_indices = @transform_0, window_bounds = array<i64: 128, 72>}, {transform_indices = @transform_1, window_bounds = array<i64: 72, 16>}, {transform_indices = @transform_2, window_bounds = array<i64: 128, 16>}]} {
    %c0 = arith.constant 0 : index
    %c0_0 = arith.constant 0 : index
    %0 = vector.load %arg2[%c0, %c0_0] : memref<128x72xbf16, #tpu.memory_space<vmem>>, vector<128x72xbf16>
    %c0_1 = arith.constant 0 : index
    %c0_2 = arith.constant 0 : index
    %1 = vector.load %arg3[%c0_1, %c0_2] : memref<72x16xbf16, #tpu.memory_space<vmem>>, vector<72x16xbf16>
    %cst = arith.constant dense<0.000000e+00> : vector<128x16xf32>
    %2 = tpu.matmul %0, %1, %cst {dimension_numbers = #tpu.dot_dimension_numbers<[1], [0], [0], [1], [0, 0, 1, 1], [], []>} : vector<128x72xbf16>, vector<72x16xbf16>, vector<128x16xf32> -> vector<128x16xf32>
    %3 = arith.truncf %2 : vector<128x16xf32> to vector<128x16xbf16>
    %c0_3 = arith.constant 0 : index
    %c0_4 = arith.constant 0 : index
    %4 = vector.load %arg4[%c0_3, %c0_4] : memref<128x16xbf16, #tpu.memory_space<vmem>>, vector<128x16xbf16>
    tpu.vector_store %arg4[%c0_3, %c0_4], %3 {strides = array<i32>} : memref<128x16xbf16, #tpu.memory_space<vmem>>, vector<128x16xbf16>,
    return
  }
  func.func @transform_0(%arg0: i32, %arg1: i32) -> (i32, i32) {
    %c0_i32 = arith.constant 0 : i32
    %c0_i32_0 = arith.constant 0 : i32
    return %arg0, %c0_i32 : i32, i32
  }
  func.func @transform_1(%arg0: i32, %arg1: i32) -> (i32, i32) {
    %c0_i32 = arith.constant 0 : i32
    %c0_i32_0 = arith.constant 0 : i32
    return %c0_i32, %arg1 : i32, i32
  }
  func.func @transform_2(%arg0: i32, %arg1: i32) -> (i32, i32) {
    %c0_i32 = arith.constant 0 : i32
    return %arg0, %arg1 : i32, i32
  }
}

module attributes {stable_mosaic.version = 11 : i64} {
  func.func @_groupnorm_kernel(%arg0: i32, %arg1: i32, %arg2: i32, %arg3: memref<1x64x16xbf16, #tpu.memory_space<vmem>>, %arg4: memref<1x1x16xf32, #tpu.memory_space<vmem>>, %arg5: memref<1x1x16xf32, #tpu.memory_space<vmem>>, %arg6: memref<1x64x16xbf16, #tpu.memory_space<vmem>>, %arg7: memref<1x16xf32, #tpu.memory_space<vmem>>, %arg8: memref<1x16xf32, #tpu.memory_space<vmem>>) attributes {dimension_semantics = [#tpu.dimension_semantics<parallel>, #tpu.dimension_semantics<arbitrary>, #tpu.dimension_semantics<arbitrary>], iteration_bounds = array<i64: 2, 2, 1>, scalar_prefetch = 0 : i64, scratch_operands = 2 : i64, tpu.core_type = #tpu.core_type<tc>, window_params = [{transform_indices = @transform_0, window_bounds = array<i64: 1, 64, 16>}, {pipeline_mode = #tpu.pipeline_mode<synchronous>, transform_indices = @transform_1, window_bounds = array<i64: 1, 1, 16>}, {pipeline_mode = #tpu.pipeline_mode<synchronous>, transform_indices = @transform_2, window_bounds = array<i64: 1, 1, 16>}, {transform_indices = @transform_3, window_bounds = array<i64: 1, 64, 16>}]} {
    %c0_i32 = arith.constant 0 : i32
    %0 = arith.cmpi eq, %arg1, %c0_i32 : i32
    %c0_i32_0 = arith.constant 0 : i32
    %1 = arith.cmpi eq, %arg2, %c0_i32_0 : i32
    %2 = arith.andi %0, %1 : i1
    %3 = arith.extui %2 : i1 to i32
    %c0_i32_1 = arith.constant 0 : i32
    %4 = arith.cmpi ne, %3, %c0_i32_1 : i32
    scf.if %4 {
      %cst = arith.constant 0.000000e+00 : f32
      %11 = vector.broadcast %cst : f32 to vector<1x16xf32>
      %c0 = arith.constant 0 : index
      %c0_5 = arith.constant 0 : index
      %12 = vector.load %arg7[%c0, %c0_5] : memref<1x16xf32, #tpu.memory_space<vmem>>, vector<1x16xf32>
      tpu.vector_store %arg7[%c0, %c0_5], %11 {strides = array<i32>} : memref<1x16xf32, #tpu.memory_space<vmem>>, vector<1x16xf32>,
      %cst_6 = arith.constant 0.000000e+00 : f32
      %13 = vector.broadcast %cst_6 : f32 to vector<1x16xf32>
      %c0_7 = arith.constant 0 : index
      %c0_8 = arith.constant 0 : index
      %14 = vector.load %arg8[%c0_7, %c0_8] : memref<1x16xf32, #tpu.memory_space<vmem>>, vector<1x16xf32>
      tpu.vector_store %arg8[%c0_7, %c0_8], %13 {strides = array<i32>} : memref<1x16xf32, #tpu.memory_space<vmem>>, vector<1x16xf32>,
    } else {
    }
    %c0_i32_2 = arith.constant 0 : i32
    %5 = arith.cmpi eq, %arg1, %c0_i32_2 : i32
    %6 = arith.extui %5 : i1 to i32
    %c0_i32_3 = arith.constant 0 : i32
    %7 = arith.cmpi ne, %6, %c0_i32_3 : i32
    scf.if %7 {
      %c0 = arith.constant 0 : index
      %c0_5 = arith.constant 0 : index
      %c0_6 = arith.constant 0 : index
      %11 = vector.load %arg3[%c0, %c0_5, %c0_6] : memref<1x64x16xbf16, #tpu.memory_space<vmem>>, vector<1x64x16xbf16>
      %12 = vector.shape_cast %11 : vector<1x64x16xbf16> to vector<64x16xbf16>
      %13 = arith.extf %12 : vector<64x16xbf16> to vector<64x16xf32>
      %cst = arith.constant 1.000000e+00 : f32
      %14 = vector.broadcast %cst : f32 to vector<1x64xf32>
      %c0_7 = arith.constant 0 : index
      %c0_8 = arith.constant 0 : index
      %15 = vector.load %arg7[%c0_7, %c0_8] : memref<1x16xf32, #tpu.memory_space<vmem>>, vector<1x16xf32>
      %cst_9 = arith.constant dense<0.000000e+00> : vector<1x16xf32>
      %16 = tpu.matmul %14, %13, %cst_9 {dimension_numbers = #tpu.dot_dimension_numbers<[1], [0], [0], [1], [0, 0, 1, 1], [], []>} : vector<1x64xf32>, vector<64x16xf32>, vector<1x16xf32> -> vector<1x16xf32>
      %17 = arith.addf %15, %16 : vector<1x16xf32>
      %c0_10 = arith.constant 0 : index
      %c0_11 = arith.constant 0 : index
      %18 = vector.load %arg7[%c0_10, %c0_11] : memref<1x16xf32, #tpu.memory_space<vmem>>, vector<1x16xf32>
      tpu.vector_store %arg7[%c0_10, %c0_11], %17 {strides = array<i32>} : memref<1x16xf32, #tpu.memory_space<vmem>>, vector<1x16xf32>,
      %c0_12 = arith.constant 0 : index
      %c0_13 = arith.constant 0 : index
      %19 = vector.load %arg8[%c0_12, %c0_13] : memref<1x16xf32, #tpu.memory_space<vmem>>, vector<1x16xf32>
      %20 = arith.mulf %13, %13 : vector<64x16xf32>
      %cst_14 = arith.constant dense<0.000000e+00> : vector<1x16xf32>
      %21 = tpu.matmul %14, %20, %cst_14 {dimension_numbers = #tpu.dot_dimension_numbers<[1], [0], [0], [1], [0, 0, 1, 1], [], []>} : vector<1x64xf32>, vector<64x16xf32>, vector<1x16xf32> -> vector<1x16xf32>
      %22 = arith.addf %19, %21 : vector<1x16xf32>
      %c0_15 = arith.constant 0 : index
      %c0_16 = arith.constant 0 : index
      %23 = vector.load %arg8[%c0_15, %c0_16] : memref<1x16xf32, #tpu.memory_space<vmem>>, vector<1x16xf32>
      tpu.vector_store %arg8[%c0_15, %c0_16], %22 {strides = array<i32>} : memref<1x16xf32, #tpu.memory_space<vmem>>, vector<1x16xf32>,
    } else {
    }
    %c1_i32 = arith.constant 1 : i32
    %8 = arith.cmpi eq, %arg1, %c1_i32 : i32
    %9 = arith.extui %8 : i1 to i32
    %c0_i32_4 = arith.constant 0 : i32
    %10 = arith.cmpi ne, %9, %c0_i32_4 : i32
    scf.if %10 {
      %c0 = arith.constant 0 : index
      %c0_5 = arith.constant 0 : index
      %11 = vector.load %arg7[%c0, %c0_5] : memref<1x16xf32, #tpu.memory_space<vmem>>, vector<1x16xf32>
      %12 = vector.shape_cast %11 : vector<1x16xf32> to vector<1x1x16xf32>
      %cst = arith.constant dense<0.000000e+00> : vector<1xf32>
      %13 = vector.multi_reduction <add>, %12, %cst [1, 2] : vector<1x1x16xf32> to vector<1xf32>
      %14 = vector.shape_cast %13 : vector<1xf32> to vector<1x1x1xf32>
      %15 = vector.extract %14[0, 0, 0] : f32 from vector<1x1x1xf32>
      %cst_6 = arith.constant 9.765625E-4 : f32
      %16 = arith.mulf %15, %cst_6 : f32
      %c0_7 = arith.constant 0 : index
      %c0_8 = arith.constant 0 : index
      %17 = vector.load %arg8[%c0_7, %c0_8] : memref<1x16xf32, #tpu.memory_space<vmem>>, vector<1x16xf32>
      %18 = vector.shape_cast %17 : vector<1x16xf32> to vector<1x1x16xf32>
      %cst_9 = arith.constant dense<0.000000e+00> : vector<1xf32>
      %19 = vector.multi_reduction <add>, %18, %cst_9 [1, 2] : vector<1x1x16xf32> to vector<1xf32>
      %20 = vector.shape_cast %19 : vector<1xf32> to vector<1x1x1xf32>
      %21 = vector.extract %20[0, 0, 0] : f32 from vector<1x1x1xf32>
      %cst_10 = arith.constant 9.765625E-4 : f32
      %22 = arith.mulf %21, %cst_10 : f32
      %23 = arith.mulf %16, %16 : f32
      %24 = arith.subf %22, %23 : f32
      %cst_11 = arith.constant 0.000000e+00 : f32
      %25 = arith.maximumf %24, %cst_11 : f32
      %cst_12 = arith.constant 9.99999974E-6 : f32
      %26 = arith.addf %25, %cst_12 : f32
      %27 = math.rsqrt %26 : f32
      %c0_13 = arith.constant 0 : index
      %c0_14 = arith.constant 0 : index
      %c0_15 = arith.constant 0 : index
      %28 = vector.load %arg4[%c0_13, %c0_14, %c0_15] : memref<1x1x16xf32, #tpu.memory_space<vmem>>, vector<1x1x16xf32>
      %29 = vector.broadcast %27 : f32 to vector<1x1x16xf32>
      %30 = arith.mulf %28, %29 : vector<1x1x16xf32>
      %c0_16 = arith.constant 0 : index
      %c0_17 = arith.constant 0 : index
      %c0_18 = arith.constant 0 : index
      %31 = vector.load %arg5[%c0_16, %c0_17, %c0_18] : memref<1x1x16xf32, #tpu.memory_space<vmem>>, vector<1x1x16xf32>
      %32 = vector.broadcast %16 : f32 to vector<1x1x16xf32>
      %33 = arith.mulf %32, %30 : vector<1x1x16xf32>
      %34 = arith.subf %31, %33 : vector<1x1x16xf32>
      %c0_19 = arith.constant 0 : index
      %c0_20 = arith.constant 0 : index
      %c0_21 = arith.constant 0 : index
      %35 = vector.load %arg3[%c0_19, %c0_20, %c0_21] : memref<1x64x16xbf16, #tpu.memory_space<vmem>>, vector<1x64x16xbf16>
      %36 = arith.extf %35 : vector<1x64x16xbf16> to vector<1x64x16xf32>
      %37 = vector.broadcast %30 : vector<1x1x16xf32> to vector<1x64x16xf32>
      %38 = arith.mulf %36, %37 : vector<1x64x16xf32>
      %39 = vector.broadcast %34 : vector<1x1x16xf32> to vector<1x64x16xf32>
      %40 = arith.addf %38, %39 : vector<1x64x16xf32>
      %41 = arith.truncf %40 : vector<1x64x16xf32> to vector<1x64x16xbf16>
      %c0_22 = arith.constant 0 : index
      %c0_23 = arith.constant 0 : index
      %c0_24 = arith.constant 0 : index
      %42 = vector.load %arg6[%c0_22, %c0_23, %c0_24] : memref<1x64x16xbf16, #tpu.memory_space<vmem>>, vector<1x64x16xbf16>
      tpu.vector_store %arg6[%c0_22, %c0_23, %c0_24], %41 {strides = array<i32>} : memref<1x64x16xbf16, #tpu.memory_space<vmem>>, vector<1x64x16xbf16>,
    } else {
    }
    return
  }
  func.func @transform_0(%arg0: i32, %arg1: i32, %arg2: i32) -> (i32, i32, i32) {
    %c0_i32 = arith.constant 0 : i32
    %c0_i32_0 = arith.constant 0 : i32
    return %arg0, %arg2, %c0_i32 : i32, i32, i32
  }
  func.func @transform_1(%arg0: i32, %arg1: i32, %arg2: i32) -> (i32, i32, i32) {
    %c0_i32 = arith.constant 0 : i32
    %c0_i32_0 = arith.constant 0 : i32
    %c0_i32_1 = arith.constant 0 : i32
    %c0_i32_2 = arith.constant 0 : i32
    return %c0_i32, %c0_i32_0, %c0_i32_1 : i32, i32, i32
  }
  func.func @transform_2(%arg0: i32, %arg1: i32, %arg2: i32) -> (i32, i32, i32) {
    %c0_i32 = arith.constant 0 : i32
    %c0_i32_0 = arith.constant 0 : i32
    %c0_i32_1 = arith.constant 0 : i32
    %c0_i32_2 = arith.constant 0 : i32
    return %c0_i32, %c0_i32_0, %c0_i32_1 : i32, i32, i32
  }
  func.func @transform_3(%arg0: i32, %arg1: i32, %arg2: i32) -> (i32, i32, i32) {
    %0 = arith.muli %arg2, %arg1 : i32
    %c0_i32 = arith.constant 0 : i32
    %c0_i32_0 = arith.constant 0 : i32
    return %arg0, %0, %c0_i32 : i32, i32, i32
  }
}

module attributes {stable_mosaic.version = 11 : i64} {
  func.func @_matmul_kernel(%arg0: i32, %arg1: i32, %arg2: memref<128x16xbf16, #tpu.memory_space<vmem>>, %arg3: memref<16x32xbf16, #tpu.memory_space<vmem>>, %arg4: memref<1x32xf32, #tpu.memory_space<vmem>>, %arg5: memref<128x32xbf16, #tpu.memory_space<vmem>>) attributes {dimension_semantics = [#tpu.dimension_semantics<parallel>, #tpu.dimension_semantics<parallel>], iteration_bounds = array<i64: 1, 1>, scalar_prefetch = 0 : i64, scratch_operands = 0 : i64, tpu.core_type = #tpu.core_type<tc>, window_params = [{transform_indices = @transform_0, window_bounds = array<i64: 128, 16>}, {transform_indices = @transform_1, window_bounds = array<i64: 16, 32>}, {transform_indices = @transform_2, window_bounds = array<i64: 1, 32>}, {transform_indices = @transform_3, window_bounds = array<i64: 128, 32>}]} {
    %c0 = arith.constant 0 : index
    %c0_0 = arith.constant 0 : index
    %0 = vector.load %arg2[%c0, %c0_0] : memref<128x16xbf16, #tpu.memory_space<vmem>>, vector<128x16xbf16>
    %c0_1 = arith.constant 0 : index
    %c0_2 = arith.constant 0 : index
    %1 = vector.load %arg3[%c0_1, %c0_2] : memref<16x32xbf16, #tpu.memory_space<vmem>>, vector<16x32xbf16>
    %cst = arith.constant dense<0.000000e+00> : vector<128x32xf32>
    %2 = tpu.matmul %0, %1, %cst {dimension_numbers = #tpu.dot_dimension_numbers<[1], [0], [0], [1], [0, 0, 1, 1], [], []>} : vector<128x16xbf16>, vector<16x32xbf16>, vector<128x32xf32> -> vector<128x32xf32>
    %c0_3 = arith.constant 0 : index
    %c0_4 = arith.constant 0 : index
    %3 = vector.load %arg4[%c0_3, %c0_4] : memref<1x32xf32, #tpu.memory_space<vmem>>, vector<1x32xf32>
    %4 = vector.broadcast %3 : vector<1x32xf32> to vector<128x32xf32>
    %5 = arith.addf %2, %4 : vector<128x32xf32>
    %cst_5 = arith.constant 5.000000e-01 : f32
    %6 = vector.broadcast %cst_5 : f32 to vector<128x32xf32>
    %7 = arith.mulf %6, %5 : vector<128x32xf32>
    %cst_6 = arith.constant 4.471500e-02 : f32
    %8 = vector.broadcast %cst_6 : f32 to vector<128x32xf32>
    %9 = arith.mulf %8, %5 : vector<128x32xf32>
    %10 = arith.mulf %9, %5 : vector<128x32xf32>
    %11 = arith.mulf %10, %5 : vector<128x32xf32>
    %12 = arith.addf %5, %11 : vector<128x32xf32>
    %cst_7 = arith.constant 0.797884583 : f32
    %13 = vector.broadcast %cst_7 : f32 to vector<128x32xf32>
    %14 = arith.mulf %13, %12 : vector<128x32xf32>
    %15 = math.tanh %14 : vector<128x32xf32>
    %cst_8 = arith.constant 1.000000e+00 : f32
    %16 = vector.broadcast %cst_8 : f32 to vector<128x32xf32>
    %17 = arith.addf %16, %15 : vector<128x32xf32>
    %18 = arith.mulf %7, %17 : vector<128x32xf32>
    %19 = arith.truncf %18 : vector<128x32xf32> to vector<128x32xbf16>
    %c0_9 = arith.constant 0 : index
    %c0_10 = arith.constant 0 : index
    %20 = vector.load %arg5[%c0_9, %c0_10] : memref<128x32xbf16, #tpu.memory_space<vmem>>, vector<128x32xbf16>
    tpu.vector_store %arg5[%c0_9, %c0_10], %19 {strides = array<i32>} : memref<128x32xbf16, #tpu.memory_space<vmem>>, vector<128x32xbf16>,
    return
  }
  func.func @transform_0(%arg0: i32, %arg1: i32) -> (i32, i32) {
    %c0_i32 = arith.constant 0 : i32
    %c0_i32_0 = arith.constant 0 : i32
    return %arg0, %c0_i32 : i32, i32
  }
  func.func @transform_1(%arg0: i32, %arg1: i32) -> (i32, i32) {
    %c0_i32 = arith.constant 0 : i32
    %c0_i32_0 = arith.constant 0 : i32
    return %c0_i32, %arg1 : i32, i32
  }
  func.func @transform_2(%arg0: i32, %arg1: i32) -> (i32, i32) {
    %c0_i32 = arith.constant 0 : i32
    %c0_i32_0 = arith.constant 0 : i32
    return %c0_i32, %arg1 : i32, i32
  }
  func.func @transform_3(%arg0: i32, %arg1: i32) -> (i32, i32) {
    %c0_i32 = arith.constant 0 : i32
    return %arg0, %arg1 : i32, i32
  }
}

module attributes {stable_mosaic.version = 11 : i64} {
  func.func @_matmul_kernel(%arg0: i32, %arg1: i32, %arg2: memref<128x32xbf16, #tpu.memory_space<vmem>>, %arg3: memref<32x16xbf16, #tpu.memory_space<vmem>>, %arg4: memref<1x16xf32, #tpu.memory_space<vmem>>, %arg5: memref<128x16xbf16, #tpu.memory_space<vmem>>, %arg6: memref<128x16xbf16, #tpu.memory_space<vmem>>) attributes {dimension_semantics = [#tpu.dimension_semantics<parallel>, #tpu.dimension_semantics<parallel>], iteration_bounds = array<i64: 1, 1>, scalar_prefetch = 0 : i64, scratch_operands = 0 : i64, tpu.core_type = #tpu.core_type<tc>, window_params = [{transform_indices = @transform_0, window_bounds = array<i64: 128, 32>}, {transform_indices = @transform_1, window_bounds = array<i64: 32, 16>}, {transform_indices = @transform_2, window_bounds = array<i64: 1, 16>}, {transform_indices = @transform_3, window_bounds = array<i64: 128, 16>}, {transform_indices = @transform_4, window_bounds = array<i64: 128, 16>}]} {
    %c0 = arith.constant 0 : index
    %c0_0 = arith.constant 0 : index
    %0 = vector.load %arg2[%c0, %c0_0] : memref<128x32xbf16, #tpu.memory_space<vmem>>, vector<128x32xbf16>
    %c0_1 = arith.constant 0 : index
    %c0_2 = arith.constant 0 : index
    %1 = vector.load %arg3[%c0_1, %c0_2] : memref<32x16xbf16, #tpu.memory_space<vmem>>, vector<32x16xbf16>
    %cst = arith.constant dense<0.000000e+00> : vector<128x16xf32>
    %2 = tpu.matmul %0, %1, %cst {dimension_numbers = #tpu.dot_dimension_numbers<[1], [0], [0], [1], [0, 0, 1, 1], [], []>} : vector<128x32xbf16>, vector<32x16xbf16>, vector<128x16xf32> -> vector<128x16xf32>
    %c0_3 = arith.constant 0 : index
    %c0_4 = arith.constant 0 : index
    %3 = vector.load %arg4[%c0_3, %c0_4] : memref<1x16xf32, #tpu.memory_space<vmem>>, vector<1x16xf32>
    %4 = vector.broadcast %3 : vector<1x16xf32> to vector<128x16xf32>
    %5 = arith.addf %2, %4 : vector<128x16xf32>
    %c0_5 = arith.constant 0 : index
    %c0_6 = arith.constant 0 : index
    %6 = vector.load %arg5[%c0_5, %c0_6] : memref<128x16xbf16, #tpu.memory_space<vmem>>, vector<128x16xbf16>
    %7 = arith.extf %6 : vector<128x16xbf16> to vector<128x16xf32>
    %8 = arith.addf %5, %7 : vector<128x16xf32>
    %9 = arith.truncf %8 : vector<128x16xf32> to vector<128x16xbf16>
    %c0_7 = arith.constant 0 : index
    %c0_8 = arith.constant 0 : index
    %10 = vector.load %arg6[%c0_7, %c0_8] : memref<128x16xbf16, #tpu.memory_space<vmem>>, vector<128x16xbf16>
    tpu.vector_store %arg6[%c0_7, %c0_8], %9 {strides = array<i32>} : memref<128x16xbf16, #tpu.memory_space<vmem>>, vector<128x16xbf16>,
    return
  }
  func.func @transform_0(%arg0: i32, %arg1: i32) -> (i32, i32) {
    %c0_i32 = arith.constant 0 : i32
    %c0_i32_0 = arith.constant 0 : i32
    return %arg0, %c0_i32 : i32, i32
  }
  func.func @transform_1(%arg0: i32, %arg1: i32) -> (i32, i32) {
    %c0_i32 = arith.constant 0 : i32
    %c0_i32_0 = arith.constant 0 : i32
    return %c0_i32, %arg1 : i32, i32
  }
  func.func @transform_2(%arg0: i32, %arg1: i32) -> (i32, i32) {
    %c0_i32 = arith.constant 0 : i32
    %c0_i32_0 = arith.constant 0 : i32
    return %c0_i32, %arg1 : i32, i32
  }
  func.func @transform_3(%arg0: i32, %arg1: i32) -> (i32, i32) {
    %c0_i32 = arith.constant 0 : i32
    return %arg0, %arg1 : i32, i32
  }
  func.func @transform_4(%arg0: i32, %arg1: i32) -> (i32, i32) {
    %c0_i32 = arith.constant 0 : i32
    return %arg0, %arg1 : i32, i32
  }
}

module attributes {stable_mosaic.version = 11 : i64} {
  func.func @_matmul_kernel(%arg0: i32, %arg1: i32, %arg2: memref<32x144xbf16, #tpu.memory_space<vmem>>, %arg3: memref<144x32xbf16, #tpu.memory_space<vmem>>, %arg4: memref<32x32xbf16, #tpu.memory_space<vmem>>) attributes {dimension_semantics = [#tpu.dimension_semantics<parallel>, #tpu.dimension_semantics<parallel>], iteration_bounds = array<i64: 1, 1>, scalar_prefetch = 0 : i64, scratch_operands = 0 : i64, tpu.core_type = #tpu.core_type<tc>, window_params = [{transform_indices = @transform_0, window_bounds = array<i64: 32, 144>}, {transform_indices = @transform_1, window_bounds = array<i64: 144, 32>}, {transform_indices = @transform_2, window_bounds = array<i64: 32, 32>}]} {
    %c0 = arith.constant 0 : index
    %c0_0 = arith.constant 0 : index
    %0 = vector.load %arg2[%c0, %c0_0] : memref<32x144xbf16, #tpu.memory_space<vmem>>, vector<32x144xbf16>
    %c0_1 = arith.constant 0 : index
    %c0_2 = arith.constant 0 : index
    %1 = vector.load %arg3[%c0_1, %c0_2] : memref<144x32xbf16, #tpu.memory_space<vmem>>, vector<144x32xbf16>
    %cst = arith.constant dense<0.000000e+00> : vector<32x32xf32>
    %2 = tpu.matmul %0, %1, %cst {dimension_numbers = #tpu.dot_dimension_numbers<[1], [0], [0], [1], [0, 0, 1, 1], [], []>} : vector<32x144xbf16>, vector<144x32xbf16>, vector<32x32xf32> -> vector<32x32xf32>
    %3 = arith.truncf %2 : vector<32x32xf32> to vector<32x32xbf16>
    %c0_3 = arith.constant 0 : index
    %c0_4 = arith.constant 0 : index
    %4 = vector.load %arg4[%c0_3, %c0_4] : memref<32x32xbf16, #tpu.memory_space<vmem>>, vector<32x32xbf16>
    tpu.vector_store %arg4[%c0_3, %c0_4], %3 {strides = array<i32>} : memref<32x32xbf16, #tpu.memory_space<vmem>>, vector<32x32xbf16>,
    return
  }
  func.func @transform_0(%arg0: i32, %arg1: i32) -> (i32, i32) {
    %c0_i32 = arith.constant 0 : i32
    %c0_i32_0 = arith.constant 0 : i32
    return %arg0, %c0_i32 : i32, i32
  }
  func.func @transform_1(%arg0: i32, %arg1: i32) -> (i32, i32) {
    %c0_i32 = arith.constant 0 : i32
    %c0_i32_0 = arith.constant 0 : i32
    return %c0_i32, %arg1 : i32, i32
  }
  func.func @transform_2(%arg0: i32, %arg1: i32) -> (i32, i32) {
    %c0_i32 = arith.constant 0 : i32
    return %arg0, %arg1 : i32, i32
  }
}

module attributes {stable_mosaic.version = 11 : i64} {
  func.func @_groupnorm_kernel(%arg0: i32, %arg1: i32, %arg2: i32, %arg3: memref<1x16x32xbf16, #tpu.memory_space<vmem>>, %arg4: memref<1x1x32xf32, #tpu.memory_space<vmem>>, %arg5: memref<1x1x32xf32, #tpu.memory_space<vmem>>, %arg6: memref<1x16x32xbf16, #tpu.memory_space<vmem>>, %arg7: memref<1x32xf32, #tpu.memory_space<vmem>>, %arg8: memref<1x32xf32, #tpu.memory_space<vmem>>) attributes {dimension_semantics = [#tpu.dimension_semantics<parallel>, #tpu.dimension_semantics<arbitrary>, #tpu.dimension_semantics<arbitrary>], iteration_bounds = array<i64: 2, 2, 1>, scalar_prefetch = 0 : i64, scratch_operands = 2 : i64, tpu.core_type = #tpu.core_type<tc>, window_params = [{transform_indices = @transform_0, window_bounds = array<i64: 1, 16, 32>}, {pipeline_mode = #tpu.pipeline_mode<synchronous>, transform_indices = @transform_1, window_bounds = array<i64: 1, 1, 32>}, {pipeline_mode = #tpu.pipeline_mode<synchronous>, transform_indices = @transform_2, window_bounds = array<i64: 1, 1, 32>}, {transform_indices = @transform_3, window_bounds = array<i64: 1, 16, 32>}]} {
    %c0_i32 = arith.constant 0 : i32
    %0 = arith.cmpi eq, %arg1, %c0_i32 : i32
    %c0_i32_0 = arith.constant 0 : i32
    %1 = arith.cmpi eq, %arg2, %c0_i32_0 : i32
    %2 = arith.andi %0, %1 : i1
    %3 = arith.extui %2 : i1 to i32
    %c0_i32_1 = arith.constant 0 : i32
    %4 = arith.cmpi ne, %3, %c0_i32_1 : i32
    scf.if %4 {
      %cst = arith.constant 0.000000e+00 : f32
      %11 = vector.broadcast %cst : f32 to vector<1x32xf32>
      %c0 = arith.constant 0 : index
      %c0_5 = arith.constant 0 : index
      %12 = vector.load %arg7[%c0, %c0_5] : memref<1x32xf32, #tpu.memory_space<vmem>>, vector<1x32xf32>
      tpu.vector_store %arg7[%c0, %c0_5], %11 {strides = array<i32>} : memref<1x32xf32, #tpu.memory_space<vmem>>, vector<1x32xf32>,
      %cst_6 = arith.constant 0.000000e+00 : f32
      %13 = vector.broadcast %cst_6 : f32 to vector<1x32xf32>
      %c0_7 = arith.constant 0 : index
      %c0_8 = arith.constant 0 : index
      %14 = vector.load %arg8[%c0_7, %c0_8] : memref<1x32xf32, #tpu.memory_space<vmem>>, vector<1x32xf32>
      tpu.vector_store %arg8[%c0_7, %c0_8], %13 {strides = array<i32>} : memref<1x32xf32, #tpu.memory_space<vmem>>, vector<1x32xf32>,
    } else {
    }
    %c0_i32_2 = arith.constant 0 : i32
    %5 = arith.cmpi eq, %arg1, %c0_i32_2 : i32
    %6 = arith.extui %5 : i1 to i32
    %c0_i32_3 = arith.constant 0 : i32
    %7 = arith.cmpi ne, %6, %c0_i32_3 : i32
    scf.if %7 {
      %c0 = arith.constant 0 : index
      %c0_5 = arith.constant 0 : index
      %c0_6 = arith.constant 0 : index
      %11 = vector.load %arg3[%c0, %c0_5, %c0_6] : memref<1x16x32xbf16, #tpu.memory_space<vmem>>, vector<1x16x32xbf16>
      %12 = vector.shape_cast %11 : vector<1x16x32xbf16> to vector<16x32xbf16>
      %13 = arith.extf %12 : vector<16x32xbf16> to vector<16x32xf32>
      %cst = arith.constant 1.000000e+00 : f32
      %14 = vector.broadcast %cst : f32 to vector<1x16xf32>
      %c0_7 = arith.constant 0 : index
      %c0_8 = arith.constant 0 : index
      %15 = vector.load %arg7[%c0_7, %c0_8] : memref<1x32xf32, #tpu.memory_space<vmem>>, vector<1x32xf32>
      %cst_9 = arith.constant dense<0.000000e+00> : vector<1x32xf32>
      %16 = tpu.matmul %14, %13, %cst_9 {dimension_numbers = #tpu.dot_dimension_numbers<[1], [0], [0], [1], [0, 0, 1, 1], [], []>} : vector<1x16xf32>, vector<16x32xf32>, vector<1x32xf32> -> vector<1x32xf32>
      %17 = arith.addf %15, %16 : vector<1x32xf32>
      %c0_10 = arith.constant 0 : index
      %c0_11 = arith.constant 0 : index
      %18 = vector.load %arg7[%c0_10, %c0_11] : memref<1x32xf32, #tpu.memory_space<vmem>>, vector<1x32xf32>
      tpu.vector_store %arg7[%c0_10, %c0_11], %17 {strides = array<i32>} : memref<1x32xf32, #tpu.memory_space<vmem>>, vector<1x32xf32>,
      %c0_12 = arith.constant 0 : index
      %c0_13 = arith.constant 0 : index
      %19 = vector.load %arg8[%c0_12, %c0_13] : memref<1x32xf32, #tpu.memory_space<vmem>>, vector<1x32xf32>
      %20 = arith.mulf %13, %13 : vector<16x32xf32>
      %cst_14 = arith.constant dense<0.000000e+00> : vector<1x32xf32>
      %21 = tpu.matmul %14, %20, %cst_14 {dimension_numbers = #tpu.dot_dimension_numbers<[1], [0], [0], [1], [0, 0, 1, 1], [], []>} : vector<1x16xf32>, vector<16x32xf32>, vector<1x32xf32> -> vector<1x32xf32>
      %22 = arith.addf %19, %21 : vector<1x32xf32>
      %c0_15 = arith.constant 0 : index
      %c0_16 = arith.constant 0 : index
      %23 = vector.load %arg8[%c0_15, %c0_16] : memref<1x32xf32, #tpu.memory_space<vmem>>, vector<1x32xf32>
      tpu.vector_store %arg8[%c0_15, %c0_16], %22 {strides = array<i32>} : memref<1x32xf32, #tpu.memory_space<vmem>>, vector<1x32xf32>,
    } else {
    }
    %c1_i32 = arith.constant 1 : i32
    %8 = arith.cmpi eq, %arg1, %c1_i32 : i32
    %9 = arith.extui %8 : i1 to i32
    %c0_i32_4 = arith.constant 0 : i32
    %10 = arith.cmpi ne, %9, %c0_i32_4 : i32
    scf.if %10 {
      %c0 = arith.constant 0 : index
      %c0_5 = arith.constant 0 : index
      %11 = vector.load %arg7[%c0, %c0_5] : memref<1x32xf32, #tpu.memory_space<vmem>>, vector<1x32xf32>
      %12 = vector.shape_cast %11 : vector<1x32xf32> to vector<1x1x32xf32>
      %cst = arith.constant dense<0.000000e+00> : vector<1xf32>
      %13 = vector.multi_reduction <add>, %12, %cst [1, 2] : vector<1x1x32xf32> to vector<1xf32>
      %14 = vector.shape_cast %13 : vector<1xf32> to vector<1x1x1xf32>
      %15 = vector.extract %14[0, 0, 0] : f32 from vector<1x1x1xf32>
      %cst_6 = arith.constant 0.001953125 : f32
      %16 = arith.mulf %15, %cst_6 : f32
      %c0_7 = arith.constant 0 : index
      %c0_8 = arith.constant 0 : index
      %17 = vector.load %arg8[%c0_7, %c0_8] : memref<1x32xf32, #tpu.memory_space<vmem>>, vector<1x32xf32>
      %18 = vector.shape_cast %17 : vector<1x32xf32> to vector<1x1x32xf32>
      %cst_9 = arith.constant dense<0.000000e+00> : vector<1xf32>
      %19 = vector.multi_reduction <add>, %18, %cst_9 [1, 2] : vector<1x1x32xf32> to vector<1xf32>
      %20 = vector.shape_cast %19 : vector<1xf32> to vector<1x1x1xf32>
      %21 = vector.extract %20[0, 0, 0] : f32 from vector<1x1x1xf32>
      %cst_10 = arith.constant 0.001953125 : f32
      %22 = arith.mulf %21, %cst_10 : f32
      %23 = arith.mulf %16, %16 : f32
      %24 = arith.subf %22, %23 : f32
      %cst_11 = arith.constant 0.000000e+00 : f32
      %25 = arith.maximumf %24, %cst_11 : f32
      %cst_12 = arith.constant 9.99999974E-6 : f32
      %26 = arith.addf %25, %cst_12 : f32
      %27 = math.rsqrt %26 : f32
      %c0_13 = arith.constant 0 : index
      %c0_14 = arith.constant 0 : index
      %c0_15 = arith.constant 0 : index
      %28 = vector.load %arg4[%c0_13, %c0_14, %c0_15] : memref<1x1x32xf32, #tpu.memory_space<vmem>>, vector<1x1x32xf32>
      %29 = vector.broadcast %27 : f32 to vector<1x1x32xf32>
      %30 = arith.mulf %28, %29 : vector<1x1x32xf32>
      %c0_16 = arith.constant 0 : index
      %c0_17 = arith.constant 0 : index
      %c0_18 = arith.constant 0 : index
      %31 = vector.load %arg5[%c0_16, %c0_17, %c0_18] : memref<1x1x32xf32, #tpu.memory_space<vmem>>, vector<1x1x32xf32>
      %32 = vector.broadcast %16 : f32 to vector<1x1x32xf32>
      %33 = arith.mulf %32, %30 : vector<1x1x32xf32>
      %34 = arith.subf %31, %33 : vector<1x1x32xf32>
      %c0_19 = arith.constant 0 : index
      %c0_20 = arith.constant 0 : index
      %c0_21 = arith.constant 0 : index
      %35 = vector.load %arg3[%c0_19, %c0_20, %c0_21] : memref<1x16x32xbf16, #tpu.memory_space<vmem>>, vector<1x16x32xbf16>
      %36 = arith.extf %35 : vector<1x16x32xbf16> to vector<1x16x32xf32>
      %37 = vector.broadcast %30 : vector<1x1x32xf32> to vector<1x16x32xf32>
      %38 = arith.mulf %36, %37 : vector<1x16x32xf32>
      %39 = vector.broadcast %34 : vector<1x1x32xf32> to vector<1x16x32xf32>
      %40 = arith.addf %38, %39 : vector<1x16x32xf32>
      %41 = arith.truncf %40 : vector<1x16x32xf32> to vector<1x16x32xbf16>
      %c0_22 = arith.constant 0 : index
      %c0_23 = arith.constant 0 : index
      %c0_24 = arith.constant 0 : index
      %42 = vector.load %arg6[%c0_22, %c0_23, %c0_24] : memref<1x16x32xbf16, #tpu.memory_space<vmem>>, vector<1x16x32xbf16>
      tpu.vector_store %arg6[%c0_22, %c0_23, %c0_24], %41 {strides = array<i32>} : memref<1x16x32xbf16, #tpu.memory_space<vmem>>, vector<1x16x32xbf16>,
    } else {
    }
    return
  }
  func.func @transform_0(%arg0: i32, %arg1: i32, %arg2: i32) -> (i32, i32, i32) {
    %c0_i32 = arith.constant 0 : i32
    %c0_i32_0 = arith.constant 0 : i32
    return %arg0, %arg2, %c0_i32 : i32, i32, i32
  }
  func.func @transform_1(%arg0: i32, %arg1: i32, %arg2: i32) -> (i32, i32, i32) {
    %c0_i32 = arith.constant 0 : i32
    %c0_i32_0 = arith.constant 0 : i32
    %c0_i32_1 = arith.constant 0 : i32
    %c0_i32_2 = arith.constant 0 : i32
    return %c0_i32, %c0_i32_0, %c0_i32_1 : i32, i32, i32
  }
  func.func @transform_2(%arg0: i32, %arg1: i32, %arg2: i32) -> (i32, i32, i32) {
    %c0_i32 = arith.constant 0 : i32
    %c0_i32_0 = arith.constant 0 : i32
    %c0_i32_1 = arith.constant 0 : i32
    %c0_i32_2 = arith.constant 0 : i32
    return %c0_i32, %c0_i32_0, %c0_i32_1 : i32, i32, i32
  }
  func.func @transform_3(%arg0: i32, %arg1: i32, %arg2: i32) -> (i32, i32, i32) {
    %0 = arith.muli %arg2, %arg1 : i32
    %c0_i32 = arith.constant 0 : i32
    %c0_i32_0 = arith.constant 0 : i32
    return %arg0, %0, %c0_i32 : i32, i32, i32
  }
}

module attributes {stable_mosaic.version = 11 : i64} {
  func.func @_matmul_kernel(%arg0: i32, %arg1: i32, %arg2: memref<32x32xbf16, #tpu.memory_space<vmem>>, %arg3: memref<32x64xbf16, #tpu.memory_space<vmem>>, %arg4: memref<1x64xf32, #tpu.memory_space<vmem>>, %arg5: memref<32x64xbf16, #tpu.memory_space<vmem>>) attributes {dimension_semantics = [#tpu.dimension_semantics<parallel>, #tpu.dimension_semantics<parallel>], iteration_bounds = array<i64: 1, 1>, scalar_prefetch = 0 : i64, scratch_operands = 0 : i64, tpu.core_type = #tpu.core_type<tc>, window_params = [{transform_indices = @transform_0, window_bounds = array<i64: 32, 32>}, {transform_indices = @transform_1, window_bounds = array<i64: 32, 64>}, {transform_indices = @transform_2, window_bounds = array<i64: 1, 64>}, {transform_indices = @transform_3, window_bounds = array<i64: 32, 64>}]} {
    %c0 = arith.constant 0 : index
    %c0_0 = arith.constant 0 : index
    %0 = vector.load %arg2[%c0, %c0_0] : memref<32x32xbf16, #tpu.memory_space<vmem>>, vector<32x32xbf16>
    %c0_1 = arith.constant 0 : index
    %c0_2 = arith.constant 0 : index
    %1 = vector.load %arg3[%c0_1, %c0_2] : memref<32x64xbf16, #tpu.memory_space<vmem>>, vector<32x64xbf16>
    %cst = arith.constant dense<0.000000e+00> : vector<32x64xf32>
    %2 = tpu.matmul %0, %1, %cst {dimension_numbers = #tpu.dot_dimension_numbers<[1], [0], [0], [1], [0, 0, 1, 1], [], []>} : vector<32x32xbf16>, vector<32x64xbf16>, vector<32x64xf32> -> vector<32x64xf32>
    %c0_3 = arith.constant 0 : index
    %c0_4 = arith.constant 0 : index
    %3 = vector.load %arg4[%c0_3, %c0_4] : memref<1x64xf32, #tpu.memory_space<vmem>>, vector<1x64xf32>
    %4 = vector.broadcast %3 : vector<1x64xf32> to vector<32x64xf32>
    %5 = arith.addf %2, %4 : vector<32x64xf32>
    %cst_5 = arith.constant 5.000000e-01 : f32
    %6 = vector.broadcast %cst_5 : f32 to vector<32x64xf32>
    %7 = arith.mulf %6, %5 : vector<32x64xf32>
    %cst_6 = arith.constant 4.471500e-02 : f32
    %8 = vector.broadcast %cst_6 : f32 to vector<32x64xf32>
    %9 = arith.mulf %8, %5 : vector<32x64xf32>
    %10 = arith.mulf %9, %5 : vector<32x64xf32>
    %11 = arith.mulf %10, %5 : vector<32x64xf32>
    %12 = arith.addf %5, %11 : vector<32x64xf32>
    %cst_7 = arith.constant 0.797884583 : f32
    %13 = vector.broadcast %cst_7 : f32 to vector<32x64xf32>
    %14 = arith.mulf %13, %12 : vector<32x64xf32>
    %15 = math.tanh %14 : vector<32x64xf32>
    %cst_8 = arith.constant 1.000000e+00 : f32
    %16 = vector.broadcast %cst_8 : f32 to vector<32x64xf32>
    %17 = arith.addf %16, %15 : vector<32x64xf32>
    %18 = arith.mulf %7, %17 : vector<32x64xf32>
    %19 = arith.truncf %18 : vector<32x64xf32> to vector<32x64xbf16>
    %c0_9 = arith.constant 0 : index
    %c0_10 = arith.constant 0 : index
    %20 = vector.load %arg5[%c0_9, %c0_10] : memref<32x64xbf16, #tpu.memory_space<vmem>>, vector<32x64xbf16>
    tpu.vector_store %arg5[%c0_9, %c0_10], %19 {strides = array<i32>} : memref<32x64xbf16, #tpu.memory_space<vmem>>, vector<32x64xbf16>,
    return
  }
  func.func @transform_0(%arg0: i32, %arg1: i32) -> (i32, i32) {
    %c0_i32 = arith.constant 0 : i32
    %c0_i32_0 = arith.constant 0 : i32
    return %arg0, %c0_i32 : i32, i32
  }
  func.func @transform_1(%arg0: i32, %arg1: i32) -> (i32, i32) {
    %c0_i32 = arith.constant 0 : i32
    %c0_i32_0 = arith.constant 0 : i32
    return %c0_i32, %arg1 : i32, i32
  }
  func.func @transform_2(%arg0: i32, %arg1: i32) -> (i32, i32) {
    %c0_i32 = arith.constant 0 : i32
    %c0_i32_0 = arith.constant 0 : i32
    return %c0_i32, %arg1 : i32, i32
  }
  func.func @transform_3(%arg0: i32, %arg1: i32) -> (i32, i32) {
    %c0_i32 = arith.constant 0 : i32
    return %arg0, %arg1 : i32, i32
  }
}

module attributes {stable_mosaic.version = 11 : i64} {
  func.func @_head_kernel(%arg0: i32, %arg1: memref<2x16x32xbf16, #tpu.memory_space<vmem>>, %arg2: memref<1x32xf32, #tpu.memory_space<vmem>>, %arg3: memref<1x32xf32, #tpu.memory_space<vmem>>, %arg4: memref<32x32xbf16, #tpu.memory_space<vmem>>, %arg5: memref<1x32xf32, #tpu.memory_space<vmem>>, %arg6: memref<2x32xf32, #tpu.memory_space<vmem>>, %arg7: memref<2x32xf32, #tpu.memory_space<vmem>>) attributes {dimension_semantics = [#tpu.dimension_semantics<arbitrary>], iteration_bounds = array<i64: 1>, scalar_prefetch = 0 : i64, scratch_operands = 1 : i64, tpu.core_type = #tpu.core_type<tc>, window_params = [{transform_indices = @transform_0, window_bounds = array<i64: 2, 16, 32>}, {pipeline_mode = #tpu.pipeline_mode<synchronous>, transform_indices = @transform_1, window_bounds = array<i64: 1, 32>}, {pipeline_mode = #tpu.pipeline_mode<synchronous>, transform_indices = @transform_2, window_bounds = array<i64: 1, 32>}, {pipeline_mode = #tpu.pipeline_mode<synchronous>, transform_indices = @transform_3, window_bounds = array<i64: 32, 32>}, {pipeline_mode = #tpu.pipeline_mode<synchronous>, transform_indices = @transform_4, window_bounds = array<i64: 1, 32>}, {pipeline_mode = #tpu.pipeline_mode<synchronous>, transform_indices = @transform_5, window_bounds = array<i64: 2, 32>}]} {
    %c0_i32 = arith.constant 0 : i32
    %0 = arith.cmpi eq, %arg0, %c0_i32 : i32
    %1 = arith.extui %0 : i1 to i32
    %c0_i32_0 = arith.constant 0 : i32
    %2 = arith.cmpi ne, %1, %c0_i32_0 : i32
    scf.if %2 {
      %cst_9 = arith.constant 0.000000e+00 : f32
      %12 = vector.broadcast %cst_9 : f32 to vector<2x32xf32>
      %c0_10 = arith.constant 0 : index
      %c0_11 = arith.constant 0 : index
      %13 = vector.load %arg7[%c0_10, %c0_11] : memref<2x32xf32, #tpu.memory_space<vmem>>, vector<2x32xf32>
      tpu.vector_store %arg7[%c0_10, %c0_11], %12 {strides = array<i32>} : memref<2x32xf32, #tpu.memory_space<vmem>>, vector<2x32xf32>,
    } else {
    }
    %c0 = arith.constant 0 : index
    %c0_1 = arith.constant 0 : index
    %3 = vector.load %arg7[%c0, %c0_1] : memref<2x32xf32, #tpu.memory_space<vmem>>, vector<2x32xf32>
    %c0_2 = arith.constant 0 : index
    %c0_3 = arith.constant 0 : index
    %c0_4 = arith.constant 0 : index
    %4 = vector.load %arg1[%c0_2, %c0_3, %c0_4] : memref<2x16x32xbf16, #tpu.memory_space<vmem>>, vector<2x16x32xbf16>
    %5 = arith.extf %4 : vector<2x16x32xbf16> to vector<2x16x32xf32>
    %cst = arith.constant dense<0.000000e+00> : vector<2x32xf32>
    %6 = vector.multi_reduction <add>, %5, %cst [1] : vector<2x16x32xf32> to vector<2x32xf32>
    %7 = arith.addf %3, %6 : vector<2x32xf32>
    %c0_5 = arith.constant 0 : index
    %c0_6 = arith.constant 0 : index
    %8 = vector.load %arg7[%c0_5, %c0_6] : memref<2x32xf32, #tpu.memory_space<vmem>>, vector<2x32xf32>
    tpu.vector_store %arg7[%c0_5, %c0_6], %7 {strides = array<i32>} : memref<2x32xf32, #tpu.memory_space<vmem>>, vector<2x32xf32>,
    %c0_i32_7 = arith.constant 0 : i32
    %9 = arith.cmpi eq, %arg0, %c0_i32_7 : i32
    %10 = arith.extui %9 : i1 to i32
    %c0_i32_8 = arith.constant 0 : i32
    %11 = arith.cmpi ne, %10, %c0_i32_8 : i32
    scf.if %11 {
      %c0_9 = arith.constant 0 : index
      %c0_10 = arith.constant 0 : index
      %12 = vector.load %arg7[%c0_9, %c0_10] : memref<2x32xf32, #tpu.memory_space<vmem>>, vector<2x32xf32>
      %cst_11 = arith.constant 6.250000e-02 : f32
      %13 = vector.broadcast %cst_11 : f32 to vector<2x32xf32>
      %14 = arith.mulf %12, %13 : vector<2x32xf32>
      %cst_12 = arith.constant dense<0.000000e+00> : vector<2xf32>
      %15 = vector.multi_reduction <add>, %14, %cst_12 [1] : vector<2x32xf32> to vector<2xf32>
      %16 = vector.shape_cast %15 : vector<2xf32> to vector<2x1xf32>
      %cst_13 = arith.constant 3.125000e-02 : f32
      %17 = vector.broadcast %cst_13 : f32 to vector<2x1xf32>
      %18 = arith.mulf %16, %17 : vector<2x1xf32>
      %19 = arith.mulf %14, %14 : vector<2x32xf32>
      %cst_14 = arith.constant dense<0.000000e+00> : vector<2xf32>
      %20 = vector.multi_reduction <add>, %19, %cst_14 [1] : vector<2x32xf32> to vector<2xf32>
      %21 = vector.shape_cast %20 : vector<2xf32> to vector<2x1xf32>
      %cst_15 = arith.constant 3.125000e-02 : f32
      %22 = vector.broadcast %cst_15 : f32 to vector<2x1xf32>
      %23 = arith.mulf %21, %22 : vector<2x1xf32>
      %24 = arith.mulf %18, %18 : vector<2x1xf32>
      %25 = arith.subf %23, %24 : vector<2x1xf32>
      %cst_16 = arith.constant 0.000000e+00 : f32
      %26 = vector.broadcast %cst_16 : f32 to vector<2x1xf32>
      %27 = arith.maximumf %25, %26 : vector<2x1xf32>
      %c0_17 = arith.constant 0 : index
      %c0_18 = arith.constant 0 : index
      %28 = vector.load %arg2[%c0_17, %c0_18] : memref<1x32xf32, #tpu.memory_space<vmem>>, vector<1x32xf32>
      %cst_19 = arith.constant 9.99999974E-6 : f32
      %29 = vector.broadcast %cst_19 : f32 to vector<2x1xf32>
      %30 = arith.addf %27, %29 : vector<2x1xf32>
      %31 = math.rsqrt %30 : vector<2x1xf32>
      %32 = vector.broadcast %28 : vector<1x32xf32> to vector<2x32xf32>
      %33 = vector.broadcast %31 : vector<2x1xf32> to vector<2x32xf32>
      %34 = arith.mulf %32, %33 : vector<2x32xf32>
      %35 = arith.mulf %14, %34 : vector<2x32xf32>
      %c0_20 = arith.constant 0 : index
      %c0_21 = arith.constant 0 : index
      %36 = vector.load %arg3[%c0_20, %c0_21] : memref<1x32xf32, #tpu.memory_space<vmem>>, vector<1x32xf32>
      %37 = vector.broadcast %18 : vector<2x1xf32> to vector<2x32xf32>
      %38 = arith.mulf %37, %34 : vector<2x32xf32>
      %39 = vector.broadcast %36 : vector<1x32xf32> to vector<2x32xf32>
      %40 = arith.subf %39, %38 : vector<2x32xf32>
      %41 = arith.addf %35, %40 : vector<2x32xf32>
      %42 = arith.truncf %41 : vector<2x32xf32> to vector<2x32xbf16>
      %c0_22 = arith.constant 0 : index
      %c0_23 = arith.constant 0 : index
      %43 = vector.load %arg4[%c0_22, %c0_23] : memref<32x32xbf16, #tpu.memory_space<vmem>>, vector<32x32xbf16>
      %cst_24 = arith.constant dense<0.000000e+00> : vector<2x32xf32>
      %44 = tpu.matmul %42, %43, %cst_24 {dimension_numbers = #tpu.dot_dimension_numbers<[1], [0], [0], [1], [0, 0, 1, 1], [], []>} : vector<2x32xbf16>, vector<32x32xbf16>, vector<2x32xf32> -> vector<2x32xf32>
      %c0_25 = arith.constant 0 : index
      %c0_26 = arith.constant 0 : index
      %45 = vector.load %arg5[%c0_25, %c0_26] : memref<1x32xf32, #tpu.memory_space<vmem>>, vector<1x32xf32>
      %46 = vector.broadcast %45 : vector<1x32xf32> to vector<2x32xf32>
      %47 = arith.addf %44, %46 : vector<2x32xf32>
      %c0_27 = arith.constant 0 : index
      %c0_28 = arith.constant 0 : index
      %48 = vector.load %arg6[%c0_27, %c0_28] : memref<2x32xf32, #tpu.memory_space<vmem>>, vector<2x32xf32>
      tpu.vector_store %arg6[%c0_27, %c0_28], %47 {strides = array<i32>} : memref<2x32xf32, #tpu.memory_space<vmem>>, vector<2x32xf32>,
    } else {
    }
    return
  }
  func.func @transform_0(%arg0: i32) -> (i32, i32, i32) {
    %c0_i32 = arith.constant 0 : i32
    %c0_i32_0 = arith.constant 0 : i32
    %c0_i32_1 = arith.constant 0 : i32
    return %c0_i32, %arg0, %c0_i32_0 : i32, i32, i32
  }
  func.func @transform_1(%arg0: i32) -> (i32, i32) {
    %c0_i32 = arith.constant 0 : i32
    %c0_i32_0 = arith.constant 0 : i32
    %c0_i32_1 = arith.constant 0 : i32
    return %c0_i32, %c0_i32_0 : i32, i32
  }
  func.func @transform_2(%arg0: i32) -> (i32, i32) {
    %c0_i32 = arith.constant 0 : i32
    %c0_i32_0 = arith.constant 0 : i32
    %c0_i32_1 = arith.constant 0 : i32
    return %c0_i32, %c0_i32_0 : i32, i32
  }
  func.func @transform_3(%arg0: i32) -> (i32, i32) {
    %c0_i32 = arith.constant 0 : i32
    %c0_i32_0 = arith.constant 0 : i32
    %c0_i32_1 = arith.constant 0 : i32
    return %c0_i32, %c0_i32_0 : i32, i32
  }
  func.func @transform_4(%arg0: i32) -> (i32, i32) {
    %c0_i32 = arith.constant 0 : i32
    %c0_i32_0 = arith.constant 0 : i32
    %c0_i32_1 = arith.constant 0 : i32
    return %c0_i32, %c0_i32_0 : i32, i32
  }
  func.func @transform_5(%arg0: i32) -> (i32, i32) {
    %c0_i32 = arith.constant 0 : i32
    %c0_i32_0 = arith.constant 0 : i32
    %c0_i32_1 = arith.constant 0 : i32
    return %c0_i32, %c0_i32_0 : i32, i32
  }
}

module attributes {stable_mosaic.version = 11 : i64} {
  func.func @_matmul_kernel(%arg0: i32, %arg1: i32, %arg2: memref<32x64xbf16, #tpu.memory_space<vmem>>, %arg3: memref<64x32xbf16, #tpu.memory_space<vmem>>, %arg4: memref<1x32xf32, #tpu.memory_space<vmem>>, %arg5: memref<32x32xbf16, #tpu.memory_space<vmem>>, %arg6: memref<32x32xbf16, #tpu.memory_space<vmem>>) attributes {dimension_semantics = [#tpu.dimension_semantics<parallel>, #tpu.dimension_semantics<parallel>], iteration_bounds = array<i64: 1, 1>, scalar_prefetch = 0 : i64, scratch_operands = 0 : i64, tpu.core_type = #tpu.core_type<tc>, window_params = [{transform_indices = @transform_0, window_bounds = array<i64: 32, 64>}, {transform_indices = @transform_1, window_bounds = array<i64: 64, 32>}, {transform_indices = @transform_2, window_bounds = array<i64: 1, 32>}, {transform_indices = @transform_3, window_bounds = array<i64: 32, 32>}, {transform_indices = @transform_4, window_bounds = array<i64: 32, 32>}]} {
    %c0 = arith.constant 0 : index
    %c0_0 = arith.constant 0 : index
    %0 = vector.load %arg2[%c0, %c0_0] : memref<32x64xbf16, #tpu.memory_space<vmem>>, vector<32x64xbf16>
    %c0_1 = arith.constant 0 : index
    %c0_2 = arith.constant 0 : index
    %1 = vector.load %arg3[%c0_1, %c0_2] : memref<64x32xbf16, #tpu.memory_space<vmem>>, vector<64x32xbf16>
    %cst = arith.constant dense<0.000000e+00> : vector<32x32xf32>
    %2 = tpu.matmul %0, %1, %cst {dimension_numbers = #tpu.dot_dimension_numbers<[1], [0], [0], [1], [0, 0, 1, 1], [], []>} : vector<32x64xbf16>, vector<64x32xbf16>, vector<32x32xf32> -> vector<32x32xf32>
    %c0_3 = arith.constant 0 : index
    %c0_4 = arith.constant 0 : index
    %3 = vector.load %arg4[%c0_3, %c0_4] : memref<1x32xf32, #tpu.memory_space<vmem>>, vector<1x32xf32>
    %4 = vector.broadcast %3 : vector<1x32xf32> to vector<32x32xf32>
    %5 = arith.addf %2, %4 : vector<32x32xf32>
    %c0_5 = arith.constant 0 : index
    %c0_6 = arith.constant 0 : index
    %6 = vector.load %arg5[%c0_5, %c0_6] : memref<32x32xbf16, #tpu.memory_space<vmem>>, vector<32x32xbf16>
    %7 = arith.extf %6 : vector<32x32xbf16> to vector<32x32xf32>
    %8 = arith.addf %5, %7 : vector<32x32xf32>
    %9 = arith.truncf %8 : vector<32x32xf32> to vector<32x32xbf16>
    %c0_7 = arith.constant 0 : index
    %c0_8 = arith.constant 0 : index
    %10 = vector.load %arg6[%c0_7, %c0_8] : memref<32x32xbf16, #tpu.memory_space<vmem>>, vector<32x32xbf16>
    tpu.vector_store %arg6[%c0_7, %c0_8], %9 {strides = array<i32>} : memref<32x32xbf16, #tpu.memory_space<vmem>>, vector<32x32xbf16>,
    return
  }
  func.func @transform_0(%arg0: i32, %arg1: i32) -> (i32, i32) {
    %c0_i32 = arith.constant 0 : i32
    %c0_i32_0 = arith.constant 0 : i32
    return %arg0, %c0_i32 : i32, i32
  }
  func.func @transform_1(%arg0: i32, %arg1: i32) -> (i32, i32) {
    %c0_i32 = arith.constant 0 : i32
    %c0_i32_0 = arith.constant 0 : i32
    return %c0_i32, %arg1 : i32, i32
  }
  func.func @transform_2(%arg0: i32, %arg1: i32) -> (i32, i32) {
    %c0_i32 = arith.constant 0 : i32
    %c0_i32_0 = arith.constant 0 : i32
    return %c0_i32, %arg1 : i32, i32
  }
  func.func @transform_3(%arg0: i32, %arg1: i32) -> (i32, i32) {
    %c0_i32 = arith.constant 0 : i32
    return %arg0, %arg1 : i32, i32
  }
  func.func @transform_4(%arg0: i32, %arg1: i32) -> (i32, i32) {
    %c0_i32 = arith.constant 0 : i32
    return %arg0, %arg1 : i32, i32
  }
}

</mosaic_0001>

<llo_original>
// kernel: img_embedder_forward.10
$region0: #{img_embedder_forward.10}
  #allocation0 [shape = 'u32[]', space=smem, size = 0x4, offset = 0x4, fixed_abs, tag = 'smem constant byte address 0x4 - core index']
  #allocation1 [shape = 'u32[144,128]{1,0:T(1,128)}', space=vmem, size = 0x12000, scoped, tag = 'internal scratch']
  %s0 = inlined_call_operand.vmem [shape: bf16[512,4], index: 0, kind: input, shape index: {}]
  %s1 = inlined_call_operand.vmem [shape: bf16[4,8], index: 1, kind: input, shape index: {}]
  %s2 = inlined_call_operand.vmem [shape: f32[1,8], index: 2, kind: input, shape index: {}]
  %s3 = inlined_call_operand.vmem [shape: bf16[512,8], index: 3, kind: output, shape index: {}]
  %s4 = sld [smem:[#allocation0]]
  $region22: #{img_embedder_forward.10} parent=0
    _
  %s6 = ssub.s32 1, %s4
  %s7 = scalar_select 0, %s6, %s4
  // Predicated region
  $region2: #{img_embedder_forward.10} parent=0 // pred_check
    _
  $region3: #{img_embedder_forward.10} parent=0 // pred_check_branch
    %9 = sbr.rel (0) target = $region5
  $region4: #{img_embedder_forward.10} parent=0 // pred_region
    _
  $region5: #{img_embedder_forward.10} parent=0 // pred_fallthru
    _
  // Predicated region
  $region6: #{img_embedder_forward.10} parent=0 // pred_check
    _
  $region7: #{img_embedder_forward.10} parent=0 // pred_check_branch
    %11 = sbr.rel (0) target = $region9
  $region8: #{img_embedder_forward.10} parent=0 // pred_region
    _
  $region9: #{img_embedder_forward.10} parent=0 // pred_fallthru
    _
  // Predicated region
  $region10: #{img_embedder_forward.10} parent=0 // pred_check
    _
  $region11: #{img_embedder_forward.10} parent=0 // pred_check_branch
    %13 = sbr.rel (0) target = $region13
  $region12: #{img_embedder_forward.10} parent=0 // pred_region
    _
  $region13: #{img_embedder_forward.10} parent=0 // pred_fallthru
    _
  %v15 = vld [vmem:[%s0] sm:$0xf]
  %v16 = vld [vmem:[%s0 + $0x4] sm:$0xf]
  %v17 = vld [vmem:[%s0 + $0x8] sm:$0xf]
  %v18 = vld [vmem:[%s0 + $0xc] sm:$0xf]
  %v19 = vld [vmem:[%s0 + $0x10] sm:$0xf]
  %v20 = vld [vmem:[%s0 + $0x14] sm:$0xf]
  %v21 = vld [vmem:[%s0 + $0x18] sm:$0xf]
  %v22 = vld [vmem:[%s0 + $0x1c] sm:$0xf]
  %v23 = vld [vmem:[%s0 + $0x20] sm:$0xf]
  %v24 = vld [vmem:[%s0 + $0x24] sm:$0xf]
  %v25 = vld [vmem:[%s0 + $0x28] sm:$0xf]
  %v26 = vld [vmem:[%s0 + $0x2c] sm:$0xf]
  %v27 = vld [vmem:[%s0 + $0x30] sm:$0xf]
  %v28 = vld [vmem:[%s0 + $0x34] sm:$0xf]
  %v29 = vld [vmem:[%s0 + $0x38] sm:$0xf]
  %v30 = vld [vmem:[%s0 + $0x3c] sm:$0xf]
  %v31 = vld [vmem:[%s0 + $0x40] sm:$0xf]
  %v32 = vld [vmem:[%s0 + $0x44] sm:$0xf]
  %v33 = vld [vmem:[%s0 + $0x48] sm:$0xf]
  %v34 = vld [vmem:[%s0 + $0x4c] sm:$0xf]
  %v35 = vld [vmem:[%s0 + $0x50] sm:$0xf]
  %v36 = vld [vmem:[%s0 + $0x54] sm:$0xf]
  %v37 = vld [vmem:[%s0 + $0x58] sm:$0xf]
  %v38 = vld [vmem:[%s0 + $0x5c] sm:$0xf]
  %v39 = vld [vmem:[%s0 + $0x60] sm:$0xf]
  %v40 = vld [vmem:[%s0 + $0x64] sm:$0xf]
  %v41 = vld [vmem:[%s0 + $0x68] sm:$0xf]
  %v42 = vld [vmem:[%s0 + $0x6c] sm:$0xf]
  %v43 = vld [vmem:[%s0 + $0x70] sm:$0xf]
  %v44 = vld [vmem:[%s0 + $0x74] sm:$0xf]
  %v45 = vld [vmem:[%s0 + $0x78] sm:$0xf]
  %v46 = vld [vmem:[%s0 + $0x7c] sm:$0xf]
  %v47 = vld [vmem:[%s0 + $0x80] sm:$0xf]
  %v48 = vld [vmem:[%s0 + $0x84] sm:$0xf]
  %v49 = vld [vmem:[%s0 + $0x88] sm:$0xf]
  %v50 = vld [vmem:[%s0 + $0x8c] sm:$0xf]
  %v51 = vld [vmem:[%s0 + $0x90] sm:$0xf]
  %v52 = vld [vmem:[%s0 + $0x94] sm:$0xf]
  %v53 = vld [vmem:[%s0 + $0x98] sm:$0xf]
  %v54 = vld [vmem:[%s0 + $0x9c] sm:$0xf]
  %v55 = vld [vmem:[%s0 + $0xa0] sm:$0xf]
  %v56 = vld [vmem:[%s0 + $0xa4] sm:$0xf]
  %v57 = vld [vmem:[%s0 + $0xa8] sm:$0xf]
  %v58 = vld [vmem:[%s0 + $0xac] sm:$0xf]
  %v59 = vld [vmem:[%s0 + $0xb0] sm:$0xf]
  %v60 = vld [vmem:[%s0 + $0xb4] sm:$0xf]
  %v61 = vld [vmem:[%s0 + $0xb8] sm:$0xf]
  %v62 = vld [vmem:[%s0 + $0xbc] sm:$0xf]
  %v63 = vld [vmem:[%s0 + $0xc0] sm:$0xf]
  %v64 = vld [vmem:[%s0 + $0xc4] sm:$0xf]
  %v65 = vld [vmem:[%s0 + $0xc8] sm:$0xf]
  %v66 = vld [vmem:[%s0 + $0xcc] sm:$0xf]
  %v67 = vld [vmem:[%s0 + $0xd0] sm:$0xf]
  %v68 = vld [vmem:[%s0 + $0xd4] sm:$0xf]
  %v69 = vld [vmem:[%s0 + $0xd8] sm:$0xf]
  %v70 = vld [vmem:[%s0 + $0xdc] sm:$0xf]
  %v71 = vld [vmem:[%s0 + $0xe0] sm:$0xf]
  %v72 = vld [vmem:[%s0 + $0xe4] sm:$0xf]
  %v73 = vld [vmem:[%s0 + $0xe8] sm:$0xf]
  %v74 = vld [vmem:[%s0 + $0xec] sm:$0xf]
  %v75 = vld [vmem:[%s0 + $0xf0] sm:$0xf]
  %v76 = vld [vmem:[%s0 + $0xf4] sm:$0xf]
  %v77 = vld [vmem:[%s0 + $0xf8] sm:$0xf]
  %v78 = vld [vmem:[%s0 + $0xfc] sm:$0xf]
  %v79 = vld [vmem:[%s1] sm:$0x3]
  %v80 = vld [vmem:[%s2] sm:$0x1]
  %v82 = vlaneseq
  %v83 = vshrl.u32 %v82, 7
  %v84 = vsub.s32 0, %v83
  %v85 = vrot.slane %v80, %v84
  %v151 = vunpack.c.l.b16 %v15
  %v152 = vunpack.c.l.b16 %v16
  %v153 = vunpack.c.l.b16 %v17
  %v154 = vunpack.c.l.b16 %v18
  %v155 = vunpack.c.l.b16 %v19
  %v156 = vunpack.c.l.b16 %v20
  %v157 = vunpack.c.l.b16 %v21
  %v158 = vunpack.c.l.b16 %v22
  %v159 = vunpack.c.l.b16 %v23
  %v160 = vunpack.c.l.b16 %v24
  %v161 = vunpack.c.l.b16 %v25
  %v162 = vunpack.c.l.b16 %v26
  %v163 = vunpack.c.l.b16 %v27
  %v164 = vunpack.c.l.b16 %v28
  %v165 = vunpack.c.l.b16 %v29
  %v166 = vunpack.c.l.b16 %v30
  %v167 = vunpack.c.l.b16 %v31
  %v168 = vunpack.c.l.b16 %v32
  %v169 = vunpack.c.l.b16 %v33
  %v170 = vunpack.c.l.b16 %v34
  %v171 = vunpack.c.l.b16 %v35
  %v172 = vunpack.c.l.b16 %v36
  %v173 = vunpack.c.l.b16 %v37
  %v174 = vunpack.c.l.b16 %v38
  %v175 = vunpack.c.l.b16 %v39
  %v176 = vunpack.c.l.b16 %v40
  %v177 = vunpack.c.l.b16 %v41
  %v178 = vunpack.c.l.b16 %v42
  %v179 = vunpack.c.l.b16 %v43
  %v180 = vunpack.c.l.b16 %v44
  %v181 = vunpack.c.l.b16 %v45
  %v182 = vunpack.c.l.b16 %v46
  %v183 = vunpack.c.l.b16 %v47
  %v184 = vunpack.c.l.b16 %v48
  %v185 = vunpack.c.l.b16 %v49
  %v186 = vunpack.c.l.b16 %v50
  %v187 = vunpack.c.l.b16 %v51
  %v188 = vunpack.c.l.b16 %v52
  %v189 = vunpack.c.l.b16 %v53
  %v190 = vunpack.c.l.b16 %v54
  %v191 = vunpack.c.l.b16 %v55
  %v192 = vunpack.c.l.b16 %v56
  %v193 = vunpack.c.l.b16 %v57
  %v194 = vunpack.c.l.b16 %v58
  %v195 = vunpack.c.l.b16 %v59
  %v196 = vunpack.c.l.b16 %v60
  %v197 = vunpack.c.l.b16 %v61
  %v198 = vunpack.c.l.b16 %v62
  %v199 = vunpack.c.l.b16 %v63
  %v200 = vunpack.c.l.b16 %v64
  %v201 = vunpack.c.l.b16 %v65
  %v202 = vunpack.c.l.b16 %v66
  %v203 = vunpack.c.l.b16 %v67
  %v204 = vunpack.c.l.b16 %v68
  %v205 = vunpack.c.l.b16 %v69
  %v206 = vunpack.c.l.b16 %v70
  %v207 = vunpack.c.l.b16 %v71
  %v208 = vunpack.c.l.b16 %v72
  %v209 = vunpack.c.l.b16 %v73
  %v210 = vunpack.c.l.b16 %v74
  %v211 = vunpack.c.l.b16 %v75
  %v212 = vunpack.c.l.b16 %v76
  %v213 = vunpack.c.l.b16 %v77
  %v214 = vunpack.c.l.b16 %v78
  %v215 = vpack.c.b16 %v152, %v151
  %v216 = vpack.c.b16 %v154, %v153
  %v217 = vpack.c.b16 %v156, %v155
  %v218 = vpack.c.b16 %v158, %v157
  %v219 = vpack.c.b16 %v160, %v159
  %v220 = vpack.c.b16 %v162, %v161
  %v221 = vpack.c.b16 %v164, %v163
  %v222 = vpack.c.b16 %v166, %v165
  %v223 = vpack.c.b16 %v168, %v167
  %v224 = vpack.c.b16 %v170, %v169
  %v225 = vpack.c.b16 %v172, %v171
  %v226 = vpack.c.b16 %v174, %v173
  %v227 = vpack.c.b16 %v176, %v175
  %v228 = vpack.c.b16 %v178, %v177
  %v229 = vpack.c.b16 %v180, %v179
  %v230 = vpack.c.b16 %v182, %v181
  %v231 = vpack.c.b16 %v184, %v183
  %v232 = vpack.c.b16 %v186, %v185
  %v233 = vpack.c.b16 %v188, %v187
  %v234 = vpack.c.b16 %v190, %v189
  %v235 = vpack.c.b16 %v192, %v191
  %v236 = vpack.c.b16 %v194, %v193
  %v237 = vpack.c.b16 %v196, %v195
  %v238 = vpack.c.b16 %v198, %v197
  %v239 = vpack.c.b16 %v200, %v199
  %v240 = vpack.c.b16 %v202, %v201
  %v241 = vpack.c.b16 %v204, %v203
  %v242 = vpack.c.b16 %v206, %v205
  %v243 = vpack.c.b16 %v208, %v207
  %v244 = vpack.c.b16 %v210, %v209
  %v245 = vpack.c.b16 %v212, %v211
  %v246 = vpack.c.b16 %v214, %v213
  %vm247 = vcmask 31744
  %v249 = vsel %vm247, %v215, 0
  %v252 = vsel %vm247, %v216, 0
  %v255 = vsel %vm247, %v217, 0
  %v258 = vsel %vm247, %v218, 0
  %v261 = vsel %vm247, %v219, 0
  %v264 = vsel %vm247, %v220, 0
  %v267 = vsel %vm247, %v221, 0
  %v270 = vsel %vm247, %v222, 0
  %v273 = vsel %vm247, %v223, 0
  %v276 = vsel %vm247, %v224, 0
  %v279 = vsel %vm247, %v225, 0
  %v282 = vsel %vm247, %v226, 0
  %v285 = vsel %vm247, %v227, 0
  %v288 = vsel %vm247, %v228, 0
  %v291 = vsel %vm247, %v229, 0
  %v294 = vsel %vm247, %v230, 0
  %v297 = vsel %vm247, %v231, 0
  %v300 = vsel %vm247, %v232, 0
  %v303 = vsel %vm247, %v233, 0
  %v306 = vsel %vm247, %v234, 0
  %v309 = vsel %vm247, %v235, 0
  %v312 = vsel %vm247, %v236, 0
  %v315 = vsel %vm247, %v237, 0
  %v318 = vsel %vm247, %v238, 0
  %v321 = vsel %vm247, %v239, 0
  %v324 = vsel %vm247, %v240, 0
  %v327 = vsel %vm247, %v241, 0
  %v330 = vsel %vm247, %v242, 0
  %v333 = vsel %vm247, %v243, 0
  %v336 = vsel %vm247, %v244, 0
  %v339 = vsel %vm247, %v245, 0
  %v342 = vsel %vm247, %v246, 0
  %vm344 = vcmask 1041408
  %v346 = vsel %vm344, %v79, 0
  %348 = vmatprep.subr.bf16.mxu0 0
  %349 = vmatpush1.bf16.msra.mxu0 0
  %350 = vmatprep.subr.bf16.mxu0 0
  %351 = vmatpush1.bf16.msra.mxu0 0
  %352 = vmatprep.subr.bf16.mxu0 0
  %353 = vmatpush1.bf16.msra.mxu0 0
  %354 = vmatprep.subr.bf16.mxu0 0
  %355 = vmatpush1.bf16.msra.mxu0 0
  %356 = vmatprep.subr.bf16.mxu0 0
  %357 = vmatpush1.bf16.msra.mxu0 0
  %358 = vmatprep.subr.bf16.mxu0 0
  %359 = vmatpush1.bf16.msra.mxu0 0
  %360 = vmatprep.subr.bf16.mxu0 0
  %361 = vmatpush1.bf16.msra.mxu0 0
  %362 = vmatprep.subr.bf16.mxu0 0
  %363 = vmatpush1.bf16.msra.mxu0 %v346
  %364 = vmatprep.subr.bf16.mxu0 0
  %365 = vmatpush2.bf16.msra.mxu0 0
  %366 = vmatprep.subr.bf16.mxu0 0
  %367 = vmatpush2.bf16.msra.mxu0 0
  %368 = vmatprep.subr.bf16.mxu0 0
  %369 = vmatpush2.bf16.msra.mxu0 0
  %370 = vmatprep.subr.bf16.mxu0 0
  %371 = vmatpush2.bf16.msra.mxu0 0
  %372 = vmatprep.subr.bf16.mxu0 0
  %373 = vmatpush2.bf16.msra.mxu0 0
  %374 = vmatprep.subr.bf16.mxu0 0
  %375 = vmatpush2.bf16.msra.mxu0 0
  %376 = vmatprep.subr.bf16.mxu0 0
  %377 = vmatpush2.bf16.msra.mxu0 0
  %378 = vmatprep.subr.bf16.mxu0 0
  %379 = vmatpush2.bf16.msra.mxu0 0
  %380 = vmatprep.mubr.bf16.mxu0 0
  %381 = vmatmul.mubr.bf16.gmra.mxu0 %v249
  %v382 = vpop.f32.mrf.mxu0
  %v383 = vadd.f32 %v85, %v382
  %v384 = vpop.f32.mrf.mxu0
  %v385 = vpop.f32.mrf.mxu0
  %v386 = vadd.f32 %v85, %v385
  %v387 = vpop.f32.mrf.mxu0
  %388 = vmatprep.mubr.bf16.mxu0 0
  %389 = vmatmul.mubr.bf16.gmra.mxu0 %v252
  %v390 = vpop.f32.mrf.mxu0
  %v391 = vadd.f32 %v85, %v390
  %v392 = vpop.f32.mrf.mxu0
  %v393 = vpop.f32.mrf.mxu0
  %v394 = vadd.f32 %v85, %v393
  %v395 = vpop.f32.mrf.mxu0
  %396 = vmatprep.mubr.bf16.mxu0 0
  %397 = vmatmul.mubr.bf16.gmra.mxu0 %v255
  %v398 = vpop.f32.mrf.mxu0
  %v399 = vadd.f32 %v85, %v398
  %v400 = vpop.f32.mrf.mxu0
  %v401 = vpop.f32.mrf.mxu0
  %v402 = vadd.f32 %v85, %v401
  %v403 = vpop.f32.mrf.mxu0
  %404 = vmatprep.mubr.bf16.mxu0 0
  %405 = vmatmul.mubr.bf16.gmra.mxu0 %v258
  %v406 = vpop.f32.mrf.mxu0
  %v407 = vadd.f32 %v85, %v406
  %v408 = vpop.f32.mrf.mxu0
  %v409 = vpop.f32.mrf.mxu0
  %v410 = vadd.f32 %v85, %v409
  %v411 = vpop.f32.mrf.mxu0
  %412 = vmatprep.mubr.bf16.mxu0 0
  %413 = vmatmul.mubr.bf16.gmra.mxu0 %v261
  %v414 = vpop.f32.mrf.mxu0
  %v415 = vadd.f32 %v85, %v414
  %v416 = vpop.f32.mrf.mxu0
  %v417 = vpop.f32.mrf.mxu0
  %v418 = vadd.f32 %v85, %v417
  %v419 = vpop.f32.mrf.mxu0
  %420 = vmatprep.mubr.bf16.mxu0 0
  %421 = vmatmul.mubr.bf16.gmra.mxu0 %v264
  %v422 = vpop.f32.mrf.mxu0
  %v423 = vadd.f32 %v85, %v422
  %v424 = vpop.f32.mrf.mxu0
  %v425 = vpop.f32.mrf.mxu0
  %v426 = vadd.f32 %v85, %v425
  %v427 = vpop.f32.mrf.mxu0
  %428 = vmatprep.mubr.bf16.mxu0 0
  %429 = vmatmul.mubr.bf16.gmra.mxu0 %v267
  %v430 = vpop.f32.mrf.mxu0
  %v431 = vadd.f32 %v85, %v430
  %v432 = vpop.f32.mrf.mxu0
  %v433 = vpop.f32.mrf.mxu0
  %v434 = vadd.f32 %v85, %v433
  %v435 = vpop.f32.mrf.mxu0
  %436 = vmatprep.mubr.bf16.mxu0 0
  %437 = vmatmul.mubr.bf16.gmra.mxu0 %v270
  %v438 = vpop.f32.mrf.mxu0
  %v439 = vadd.f32 %v85, %v438
  %v440 = vpop.f32.mrf.mxu0
  %v441 = vpop.f32.mrf.mxu0
  %v442 = vadd.f32 %v85, %v441
  %v443 = vpop.f32.mrf.mxu0
  %444 = vmatprep.mubr.bf16.mxu0 0
  %445 = vmatmul.mubr.bf16.gmra.mxu0 %v273
  %v446 = vpop.f32.mrf.mxu0
  %v447 = vadd.f32 %v85, %v446
  %v448 = vpop.f32.mrf.mxu0
  %v449 = vpop.f32.mrf.mxu0
  %v450 = vadd.f32 %v85, %v449
  %v451 = vpop.f32.mrf.mxu0
  %452 = vmatprep.mubr.bf16.mxu0 0
  %453 = vmatmul.mubr.bf16.gmra.mxu0 %v276
  %v454 = vpop.f32.mrf.mxu0
  %v455 = vadd.f32 %v85, %v454
  %v456 = vpop.f32.mrf.mxu0
  %v457 = vpop.f32.mrf.mxu0
  %v458 = vadd.f32 %v85, %v457
  %v459 = vpop.f32.mrf.mxu0
  %460 = vmatprep.mubr.bf16.mxu0 0
  %461 = vmatmul.mubr.bf16.gmra.mxu0 %v279
  %v462 = vpop.f32.mrf.mxu0
  %v463 = vadd.f32 %v85, %v462
  %v464 = vpop.f32.mrf.mxu0
  %v465 = vpop.f32.mrf.mxu0
  %v466 = vadd.f32 %v85, %v465
  %v467 = vpop.f32.mrf.mxu0
  %468 = vmatprep.mubr.bf16.mxu0 0
  %469 = vmatmul.mubr.bf16.gmra.mxu0 %v282
  %v470 = vpop.f32.mrf.mxu0
  %v471 = vadd.f32 %v85, %v470
  %v472 = vpop.f32.mrf.mxu0
  %v473 = vpop.f32.mrf.mxu0
  %v474 = vadd.f32 %v85, %v473
  %v475 = vpop.f32.mrf.mxu0
  %476 = vmatprep.mubr.bf16.mxu0 0
  %477 = vmatmul.mubr.bf16.gmra.mxu0 %v285
  %v478 = vpop.f32.mrf.mxu0
  %v479 = vadd.f32 %v85, %v478
  %v480 = vpop.f32.mrf.mxu0
  %v481 = vpop.f32.mrf.mxu0
  %v482 = vadd.f32 %v85, %v481
  %v483 = vpop.f32.mrf.mxu0
  %484 = vmatprep.mubr.bf16.mxu0 0
  %485 = vmatmul.mubr.bf16.gmra.mxu0 %v288
  %v486 = vpop.f32.mrf.mxu0
  %v487 = vadd.f32 %v85, %v486
  %v488 = vpop.f32.mrf.mxu0
  %v489 = vpop.f32.mrf.mxu0
  %v490 = vadd.f32 %v85, %v489
  %v491 = vpop.f32.mrf.mxu0
  %492 = vmatprep.mubr.bf16.mxu0 0
  %493 = vmatmul.mubr.bf16.gmra.mxu0 %v291
  %v494 = vpop.f32.mrf.mxu0
  %v495 = vadd.f32 %v85, %v494
  %v496 = vpop.f32.mrf.mxu0
  %v497 = vpop.f32.mrf.mxu0
  %v498 = vadd.f32 %v85, %v497
  %v499 = vpop.f32.mrf.mxu0
  %500 = vmatprep.mubr.bf16.mxu0 0
  %501 = vmatmul.mubr.bf16.gmra.mxu0 %v294
  %v502 = vpop.f32.mrf.mxu0
  %v503 = vadd.f32 %v85, %v502
  %v504 = vpop.f32.mrf.mxu0
  %v505 = vpop.f32.mrf.mxu0
  %v506 = vadd.f32 %v85, %v505
  %v507 = vpop.f32.mrf.mxu0
  %508 = vmatprep.mubr.bf16.mxu0 0
  %509 = vmatmul.mubr.bf16.gmra.mxu0 %v297
  %v510 = vpop.f32.mrf.mxu0
  %v511 = vadd.f32 %v85, %v510
  %v512 = vpop.f32.mrf.mxu0
  %v513 = vpop.f32.mrf.mxu0
  %v514 = vadd.f32 %v85, %v513
  %v515 = vpop.f32.mrf.mxu0
  %516 = vmatprep.mubr.bf16.mxu0 0
  %517 = vmatmul.mubr.bf16.gmra.mxu0 %v300
  %v518 = vpop.f32.mrf.mxu0
  %v519 = vadd.f32 %v85, %v518
  %v520 = vpop.f32.mrf.mxu0
  %v521 = vpop.f32.mrf.mxu0
  %v522 = vadd.f32 %v85, %v521
  %v523 = vpop.f32.mrf.mxu0
  %524 = vmatprep.mubr.bf16.mxu0 0
  %525 = vmatmul.mubr.bf16.gmra.mxu0 %v303
  %v526 = vpop.f32.mrf.mxu0
  %v527 = vadd.f32 %v85, %v526
  %v528 = vpop.f32.mrf.mxu0
  %v529 = vpop.f32.mrf.mxu0
  %v530 = vadd.f32 %v85, %v529
  %v531 = vpop.f32.mrf.mxu0
  %532 = vmatprep.mubr.bf16.mxu0 0
  %533 = vmatmul.mubr.bf16.gmra.mxu0 %v306
  %v534 = vpop.f32.mrf.mxu0
  %v535 = vadd.f32 %v85, %v534
  %v536 = vpop.f32.mrf.mxu0
  %v537 = vpop.f32.mrf.mxu0
  %v538 = vadd.f32 %v85, %v537
  %v539 = vpop.f32.mrf.mxu0
  %540 = vmatprep.mubr.bf16.mxu0 0
  %541 = vmatmul.mubr.bf16.gmra.mxu0 %v309
  %v542 = vpop.f32.mrf.mxu0
  %v543 = vadd.f32 %v85, %v542
  %v544 = vpop.f32.mrf.mxu0
  %v545 = vpop.f32.mrf.mxu0
  %v546 = vadd.f32 %v85, %v545
  %v547 = vpop.f32.mrf.mxu0
  %548 = vmatprep.mubr.bf16.mxu0 0
  %549 = vmatmul.mubr.bf16.gmra.mxu0 %v312
  %v550 = vpop.f32.mrf.mxu0
  %v551 = vadd.f32 %v85, %v550
  %v552 = vpop.f32.mrf.mxu0
  %v553 = vpop.f32.mrf.mxu0
  %v554 = vadd.f32 %v85, %v553
  %v555 = vpop.f32.mrf.mxu0
  %556 = vmatprep.mubr.bf16.mxu0 0
  %557 = vmatmul.mubr.bf16.gmra.mxu0 %v315
  %v558 = vpop.f32.mrf.mxu0
  %v559 = vadd.f32 %v85, %v558
  %v560 = vpop.f32.mrf.mxu0
  %v561 = vpop.f32.mrf.mxu0
  %v562 = vadd.f32 %v85, %v561
  %v563 = vpop.f32.mrf.mxu0
  %564 = vmatprep.mubr.bf16.mxu0 0
  %565 = vmatmul.mubr.bf16.gmra.mxu0 %v318
  %v566 = vpop.f32.mrf.mxu0
  %v567 = vadd.f32 %v85, %v566
  %v568 = vpop.f32.mrf.mxu0
  %v569 = vpop.f32.mrf.mxu0
  %v570 = vadd.f32 %v85, %v569
  %v571 = vpop.f32.mrf.mxu0
  %572 = vmatprep.mubr.bf16.mxu0 0
  %573 = vmatmul.mubr.bf16.gmra.mxu0 %v321
  %v574 = vpop.f32.mrf.mxu0
  %v575 = vadd.f32 %v85, %v574
  %v576 = vpop.f32.mrf.mxu0
  %v577 = vpop.f32.mrf.mxu0
  %v578 = vadd.f32 %v85, %v577
  %v579 = vpop.f32.mrf.mxu0
  %580 = vmatprep.mubr.bf16.mxu0 0
  %581 = vmatmul.mubr.bf16.gmra.mxu0 %v324
  %v582 = vpop.f32.mrf.mxu0
  %v583 = vadd.f32 %v85, %v582
  %v584 = vpop.f32.mrf.mxu0
  %v585 = vpop.f32.mrf.mxu0
  %v586 = vadd.f32 %v85, %v585
  %v587 = vpop.f32.mrf.mxu0
  %588 = vmatprep.mubr.bf16.mxu0 0
  %589 = vmatmul.mubr.bf16.gmra.mxu0 %v327
  %v590 = vpop.f32.mrf.mxu0
  %v591 = vadd.f32 %v85, %v590
  %v592 = vpop.f32.mrf.mxu0
  %v593 = vpop.f32.mrf.mxu0
  %v594 = vadd.f32 %v85, %v593
  %v595 = vpop.f32.mrf.mxu0
  %596 = vmatprep.mubr.bf16.mxu0 0
  %597 = vmatmul.mubr.bf16.gmra.mxu0 %v330
  %v598 = vpop.f32.mrf.mxu0
  %v599 = vadd.f32 %v85, %v598
  %v600 = vpop.f32.mrf.mxu0
  %v601 = vpop.f32.mrf.mxu0
  %v602 = vadd.f32 %v85, %v601
  %v603 = vpop.f32.mrf.mxu0
  %604 = vmatprep.mubr.bf16.mxu0 0
  %605 = vmatmul.mubr.bf16.gmra.mxu0 %v333
  %v606 = vpop.f32.mrf.mxu0
  %v607 = vadd.f32 %v85, %v606
  %v608 = vpop.f32.mrf.mxu0
  %v609 = vpop.f32.mrf.mxu0
  %v610 = vadd.f32 %v85, %v609
  %v611 = vpop.f32.mrf.mxu0
  %612 = vmatprep.mubr.bf16.mxu0 0
  %613 = vmatmul.mubr.bf16.gmra.mxu0 %v336
  %v614 = vpop.f32.mrf.mxu0
  %v615 = vadd.f32 %v85, %v614
  %v616 = vpop.f32.mrf.mxu0
  %v617 = vpop.f32.mrf.mxu0
  %v618 = vadd.f32 %v85, %v617
  %v619 = vpop.f32.mrf.mxu0
  %620 = vmatprep.mubr.bf16.mxu0 0
  %621 = vmatmul.mubr.bf16.gmra.mxu0 %v339
  %v622 = vpop.f32.mrf.mxu0
  %v623 = vadd.f32 %v85, %v622
  %v624 = vpop.f32.mrf.mxu0
  %v625 = vpop.f32.mrf.mxu0
  %v626 = vadd.f32 %v85, %v625
  %v627 = vpop.f32.mrf.mxu0
  %628 = vmatprep.mubr.bf16.mxu0 0
  %629 = vmatmul.mubr.bf16.gmra.mxu0 %v342
  %v630 = vpop.f32.mrf.mxu0
  %v631 = vadd.f32 %v85, %v630
  %v632 = vpop.f32.mrf.mxu0
  %v633 = vpop.f32.mrf.mxu0
  %v634 = vadd.f32 %v85, %v633
  %v635 = vpop.f32.mrf.mxu0
  %636 = vdwg.mxu0
  %v637 = vpack.c.bf16 %v386, %v383
  %v638 = vpack.c.bf16 %v394, %v391
  %v639 = vpack.c.bf16 %v402, %v399
  %v640 = vpack.c.bf16 %v410, %v407
  %v641 = vpack.c.bf16 %v418, %v415
  %v642 = vpack.c.bf16 %v426, %v423
  %v643 = vpack.c.bf16 %v434, %v431
  %v644 = vpack.c.bf16 %v442, %v439
  %v645 = vpack.c.bf16 %v450, %v447
  %v646 = vpack.c.bf16 %v458, %v455
  %v647 = vpack.c.bf16 %v466, %v463
  %v648 = vpack.c.bf16 %v474, %v471
  %v649 = vpack.c.bf16 %v482, %v479
  %v650 = vpack.c.bf16 %v490, %v487
  %v651 = vpack.c.bf16 %v498, %v495
  %v652 = vpack.c.bf16 %v506, %v503
  %v653 = vpack.c.bf16 %v514, %v511
  %v654 = vpack.c.bf16 %v522, %v519
  %v655 = vpack.c.bf16 %v530, %v527
  %v656 = vpack.c.bf16 %v538, %v535
  %v657 = vpack.c.bf16 %v546, %v543
  %v658 = vpack.c.bf16 %v554, %v551
  %v659 = vpack.c.bf16 %v562, %v559
  %v660 = vpack.c.bf16 %v570, %v567
  %v661 = vpack.c.bf16 %v578, %v575
  %v662 = vpack.c.bf16 %v586, %v583
  %v663 = vpack.c.bf16 %v594, %v591
  %v664 = vpack.c.bf16 %v602, %v599
  %v665 = vpack.c.bf16 %v610, %v607
  %v666 = vpack.c.bf16 %v618, %v615
  %v667 = vpack.c.bf16 %v626, %v623
  %v668 = vpack.c.bf16 %v634, %v631
  %v701 = vunpack.c.l.b16 %v637
  %v702 = vunpack.c.h.b16 %v637
  %v703 = vunpack.c.l.b16 %v638
  %v704 = vunpack.c.h.b16 %v638
  %v705 = vunpack.c.l.b16 %v639
  %v706 = vunpack.c.h.b16 %v639
  %v707 = vunpack.c.l.b16 %v640
  %v708 = vunpack.c.h.b16 %v640
  %v709 = vunpack.c.l.b16 %v641
  %v710 = vunpack.c.h.b16 %v641
  %v711 = vunpack.c.l.b16 %v642
  %v712 = vunpack.c.h.b16 %v642
  %v713 = vunpack.c.l.b16 %v643
  %v714 = vunpack.c.h.b16 %v643
  %v715 = vunpack.c.l.b16 %v644
  %v716 = vunpack.c.h.b16 %v644
  %v717 = vunpack.c.l.b16 %v645
  %v718 = vunpack.c.h.b16 %v645
  %v719 = vunpack.c.l.b16 %v646
  %v720 = vunpack.c.h.b16 %v646
  %v721 = vunpack.c.l.b16 %v647
  %v722 = vunpack.c.h.b16 %v647
  %v723 = vunpack.c.l.b16 %v648
  %v724 = vunpack.c.h.b16 %v648
  %v725 = vunpack.c.l.b16 %v649
  %v726 = vunpack.c.h.b16 %v649
  %v727 = vunpack.c.l.b16 %v650
  %v728 = vunpack.c.h.b16 %v650
  %v729 = vunpack.c.l.b16 %v651
  %v730 = vunpack.c.h.b16 %v651
  %v731 = vunpack.c.l.b16 %v652
  %v732 = vunpack.c.h.b16 %v652
  %v733 = vunpack.c.l.b16 %v653
  %v734 = vunpack.c.h.b16 %v653
  %v735 = vunpack.c.l.b16 %v654
  %v736 = vunpack.c.h.b16 %v654
  %v737 = vunpack.c.l.b16 %v655
  %v738 = vunpack.c.h.b16 %v655
  %v739 = vunpack.c.l.b16 %v656
  %v740 = vunpack.c.h.b16 %v656
  %v741 = vunpack.c.l.b16 %v657
  %v742 = vunpack.c.h.b16 %v657
  %v743 = vunpack.c.l.b16 %v658
  %v744 = vunpack.c.h.b16 %v658
  %v745 = vunpack.c.l.b16 %v659
  %v746 = vunpack.c.h.b16 %v659
  %v747 = vunpack.c.l.b16 %v660
  %v748 = vunpack.c.h.b16 %v660
  %v749 = vunpack.c.l.b16 %v661
  %v750 = vunpack.c.h.b16 %v661
  %v751 = vunpack.c.l.b16 %v662
  %v752 = vunpack.c.h.b16 %v662
  %v753 = vunpack.c.l.b16 %v663
  %v754 = vunpack.c.h.b16 %v663
  %v755 = vunpack.c.l.b16 %v664
  %v756 = vunpack.c.h.b16 %v664
  %v757 = vunpack.c.l.b16 %v665
  %v758 = vunpack.c.h.b16 %v665
  %v759 = vunpack.c.l.b16 %v666
  %v760 = vunpack.c.h.b16 %v666
  %v761 = vunpack.c.l.b16 %v667
  %v762 = vunpack.c.h.b16 %v667
  %v763 = vunpack.c.l.b16 %v668
  %v764 = vunpack.c.h.b16 %v668
  %v765 = vpack.c.b16 %v701, %v701
  %v766 = vpack.c.b16 %v702, %v702
  %v767 = vpack.c.b16 %v703, %v703
  %v768 = vpack.c.b16 %v704, %v704
  %v769 = vpack.c.b16 %v705, %v705
  %v770 = vpack.c.b16 %v706, %v706
  %v771 = vpack.c.b16 %v707, %v707
  %v772 = vpack.c.b16 %v708, %v708
  %v773 = vpack.c.b16 %v709, %v709
  %v774 = vpack.c.b16 %v710, %v710
  %v775 = vpack.c.b16 %v711, %v711
  %v776 = vpack.c.b16 %v712, %v712
  %v777 = vpack.c.b16 %v713, %v713
  %v778 = vpack.c.b16 %v714, %v714
  %v779 = vpack.c.b16 %v715, %v715
  %v780 = vpack.c.b16 %v716, %v716
  %v781 = vpack.c.b16 %v717, %v717
  %v782 = vpack.c.b16 %v718, %v718
  %v783 = vpack.c.b16 %v719, %v719
  %v784 = vpack.c.b16 %v720, %v720
  %v785 = vpack.c.b16 %v721, %v721
  %v786 = vpack.c.b16 %v722, %v722
  %v787 = vpack.c.b16 %v723, %v723
  %v788 = vpack.c.b16 %v724, %v724
  %v789 = vpack.c.b16 %v725, %v725
  %v790 = vpack.c.b16 %v726, %v726
  %v791 = vpack.c.b16 %v727, %v727
  %v792 = vpack.c.b16 %v728, %v728
  %v793 = vpack.c.b16 %v729, %v729
  %v794 = vpack.c.b16 %v730, %v730
  %v795 = vpack.c.b16 %v731, %v731
  %v796 = vpack.c.b16 %v732, %v732
  %v797 = vpack.c.b16 %v733, %v733
  %v798 = vpack.c.b16 %v734, %v734
  %v799 = vpack.c.b16 %v735, %v735
  %v800 = vpack.c.b16 %v736, %v736
  %v801 = vpack.c.b16 %v737, %v737
  %v802 = vpack.c.b16 %v738, %v738
  %v803 = vpack.c.b16 %v739, %v739
  %v804 = vpack.c.b16 %v740, %v740
  %v805 = vpack.c.b16 %v741, %v741
  %v806 = vpack.c.b16 %v742, %v742
  %v807 = vpack.c.b16 %v743, %v743
  %v808 = vpack.c.b16 %v744, %v744
  %v809 = vpack.c.b16 %v745, %v745
  %v810 = vpack.c.b16 %v746, %v746
  %v811 = vpack.c.b16 %v747, %v747
  %v812 = vpack.c.b16 %v748, %v748
  %v813 = vpack.c.b16 %v749, %v749
  %v814 = vpack.c.b16 %v750, %v750
  %v815 = vpack.c.b16 %v751, %v751
  %v816 = vpack.c.b16 %v752, %v752
  %v817 = vpack.c.b16 %v753, %v753
  %v818 = vpack.c.b16 %v754, %v754
  %v819 = vpack.c.b16 %v755, %v755
  %v820 = vpack.c.b16 %v756, %v756
  %v821 = vpack.c.b16 %v757, %v757
  %v822 = vpack.c.b16 %v758, %v758
  %v823 = vpack.c.b16 %v759, %v759
  %v824 = vpack.c.b16 %v760, %v760
  %v825 = vpack.c.b16 %v761, %v761
  %v826 = vpack.c.b16 %v762, %v762
  %v827 = vpack.c.b16 %v763, %v763
  %v828 = vpack.c.b16 %v764, %v764
  %vm893 = vcmask 60416
  %894 = vst.msk [vmem:[%s3] sm:$0xf] %vm893, %v765
  %895 = vst.msk [vmem:[%s3 + $0x4] sm:$0xf] %vm893, %v766
  %896 = vst.msk [vmem:[%s3 + $0x8] sm:$0xf] %vm893, %v767
  %897 = vst.msk [vmem:[%s3 + $0xc] sm:$0xf] %vm893, %v768
  %898 = vst.msk [vmem:[%s3 + $0x10] sm:$0xf] %vm893, %v769
  %899 = vst.msk [vmem:[%s3 + $0x14] sm:$0xf] %vm893, %v770
  %900 = vst.msk [vmem:[%s3 + $0x18] sm:$0xf] %vm893, %v771
  %901 = vst.msk [vmem:[%s3 + $0x1c] sm:$0xf] %vm893, %v772
  %902 = vst.msk [vmem:[%s3 + $0x20] sm:$0xf] %vm893, %v773
  %903 = vst.msk [vmem:[%s3 + $0x24] sm:$0xf] %vm893, %v774
  %904 = vst.msk [vmem:[%s3 + $0x28] sm:$0xf] %vm893, %v775
  %905 = vst.msk [vmem:[%s3 + $0x2c] sm:$0xf] %vm893, %v776
  %906 = vst.msk [vmem:[%s3 + $0x30] sm:$0xf] %vm893, %v777
  %907 = vst.msk [vmem:[%s3 + $0x34] sm:$0xf] %vm893, %v778
  %908 = vst.msk [vmem:[%s3 + $0x38] sm:$0xf] %vm893, %v779
  %909 = vst.msk [vmem:[%s3 + $0x3c] sm:$0xf] %vm893, %v780
  %910 = vst.msk [vmem:[%s3 + $0x40] sm:$0xf] %vm893, %v781
  %911 = vst.msk [vmem:[%s3 + $0x44] sm:$0xf] %vm893, %v782
  %912 = vst.msk [vmem:[%s3 + $0x48] sm:$0xf] %vm893, %v783
  %913 = vst.msk [vmem:[%s3 + $0x4c] sm:$0xf] %vm893, %v784
  %914 = vst.msk [vmem:[%s3 + $0x50] sm:$0xf] %vm893, %v785
  %915 = vst.msk [vmem:[%s3 + $0x54] sm:$0xf] %vm893, %v786
  %916 = vst.msk [vmem:[%s3 + $0x58] sm:$0xf] %vm893, %v787
  %917 = vst.msk [vmem:[%s3 + $0x5c] sm:$0xf] %vm893, %v788
  %918 = vst.msk [vmem:[%s3 + $0x60] sm:$0xf] %vm893, %v789
  %919 = vst.msk [vmem:[%s3 + $0x64] sm:$0xf] %vm893, %v790
  %920 = vst.msk [vmem:[%s3 + $0x68] sm:$0xf] %vm893, %v791
  %921 = vst.msk [vmem:[%s3 + $0x6c] sm:$0xf] %vm893, %v792
  %922 = vst.msk [vmem:[%s3 + $0x70] sm:$0xf] %vm893, %v793
  %923 = vst.msk [vmem:[%s3 + $0x74] sm:$0xf] %vm893, %v794
  %924 = vst.msk [vmem:[%s3 + $0x78] sm:$0xf] %vm893, %v795
  %925 = vst.msk [vmem:[%s3 + $0x7c] sm:$0xf] %vm893, %v796
  %926 = vst.msk [vmem:[%s3 + $0x80] sm:$0xf] %vm893, %v797
  %927 = vst.msk [vmem:[%s3 + $0x84] sm:$0xf] %vm893, %v798
  %928 = vst.msk [vmem:[%s3 + $0x88] sm:$0xf] %vm893, %v799
  %929 = vst.msk [vmem:[%s3 + $0x8c] sm:$0xf] %vm893, %v800
  %930 = vst.msk [vmem:[%s3 + $0x90] sm:$0xf] %vm893, %v801
  %931 = vst.msk [vmem:[%s3 + $0x94] sm:$0xf] %vm893, %v802
  %932 = vst.msk [vmem:[%s3 + $0x98] sm:$0xf] %vm893, %v803
  %933 = vst.msk [vmem:[%s3 + $0x9c] sm:$0xf] %vm893, %v804
  %934 = vst.msk [vmem:[%s3 + $0xa0] sm:$0xf] %vm893, %v805
  %935 = vst.msk [vmem:[%s3 + $0xa4] sm:$0xf] %vm893, %v806
  %936 = vst.msk [vmem:[%s3 + $0xa8] sm:$0xf] %vm893, %v807
  %937 = vst.msk [vmem:[%s3 + $0xac] sm:$0xf] %vm893, %v808
  %938 = vst.msk [vmem:[%s3 + $0xb0] sm:$0xf] %vm893, %v809
  %939 = vst.msk [vmem:[%s3 + $0xb4] sm:$0xf] %vm893, %v810
  %940 = vst.msk [vmem:[%s3 + $0xb8] sm:$0xf] %vm893, %v811
  %941 = vst.msk [vmem:[%s3 + $0xbc] sm:$0xf] %vm893, %v812
  %942 = vst.msk [vmem:[%s3 + $0xc0] sm:$0xf] %vm893, %v813
  %943 = vst.msk [vmem:[%s3 + $0xc4] sm:$0xf] %vm893, %v814
  %944 = vst.msk [vmem:[%s3 + $0xc8] sm:$0xf] %vm893, %v815
  %945 = vst.msk [vmem:[%s3 + $0xcc] sm:$0xf] %vm893, %v816
  %946 = vst.msk [vmem:[%s3 + $0xd0] sm:$0xf] %vm893, %v817
  %947 = vst.msk [vmem:[%s3 + $0xd4] sm:$0xf] %vm893, %v818
  %948 = vst.msk [vmem:[%s3 + $0xd8] sm:$0xf] %vm893, %v819
  %949 = vst.msk [vmem:[%s3 + $0xdc] sm:$0xf] %vm893, %v820
  %950 = vst.msk [vmem:[%s3 + $0xe0] sm:$0xf] %vm893, %v821
  %951 = vst.msk [vmem:[%s3 + $0xe4] sm:$0xf] %vm893, %v822
  %952 = vst.msk [vmem:[%s3 + $0xe8] sm:$0xf] %vm893, %v823
  %953 = vst.msk [vmem:[%s3 + $0xec] sm:$0xf] %vm893, %v824
  %954 = vst.msk [vmem:[%s3 + $0xf0] sm:$0xf] %vm893, %v825
  %955 = vst.msk [vmem:[%s3 + $0xf4] sm:$0xf] %vm893, %v826
  %956 = vst.msk [vmem:[%s3 + $0xf8] sm:$0xf] %vm893, %v827
  %957 = vst.msk [vmem:[%s3 + $0xfc] sm:$0xf] %vm893, %v828
  // Predicated region
  $region14: #{img_embedder_forward.10} parent=0 // pred_check
    _
  $region15: #{img_embedder_forward.10} parent=0 // pred_check_branch
    %959 = sbr.rel (0) target = $region17
  $region16: #{img_embedder_forward.10} parent=0 // pred_region
    _
  $region17: #{img_embedder_forward.10} parent=0 // pred_fallthru
    _
  // Predicated region
  $region18: #{img_embedder_forward.10} parent=0 // pred_check
    _
  $region19: #{img_embedder_forward.10} parent=0 // pred_check_branch
    %961 = sbr.rel (0) target = $region21
  $region20: #{img_embedder_forward.10} parent=0 // pred_region
    _
  $region21: #{img_embedder_forward.10} parent=0 // pred_fallthru
    _

// kernel: img_embedder_forward.11
$region0: #{img_embedder_forward.11}
  #allocation0 [shape = 'u32[]', space=smem, size = 0x4, offset = 0x4, fixed_abs, tag = 'smem constant byte address 0x4 - core index']
  #allocation1 [shape = 'u32[144,128]{1,0:T(1,128)}', space=vmem, size = 0x12000, scoped, tag = 'internal scratch']
  %s0 = inlined_call_operand.vmem [shape: bf16[128,72], index: 0, kind: input, shape index: {}]
  %s1 = inlined_call_operand.vmem [shape: bf16[72,16], index: 1, kind: input, shape index: {}]
  %s2 = inlined_call_operand.vmem [shape: bf16[128,16], index: 2, kind: output, shape index: {}]
  %s3 = sld [smem:[#allocation0]]
  $region18: #{img_embedder_forward.11} parent=0
    _
  %s5 = ssub.s32 1, %s3
  %s6 = scalar_select 0, %s5, %s3
  // Predicated region
  $region2: #{img_embedder_forward.11} parent=0 // pred_check
    _
  $region3: #{img_embedder_forward.11} parent=0 // pred_check_branch
    %8 = sbr.rel (0) target = $region5
  $region4: #{img_embedder_forward.11} parent=0 // pred_region
    _
  $region5: #{img_embedder_forward.11} parent=0 // pred_fallthru
    _
  // Predicated region
  $region6: #{img_embedder_forward.11} parent=0 // pred_check
    _
  $region7: #{img_embedder_forward.11} parent=0 // pred_check_branch
    %10 = sbr.rel (0) target = $region9
  $region8: #{img_embedder_forward.11} parent=0 // pred_region
    _
  $region9: #{img_embedder_forward.11} parent=0 // pred_fallthru
    _
  %v12 = vld [vmem:[%s0] sm:$0xf]
  %v13 = vld [vmem:[%s0 + $0x4] sm:$0xf]
  %v14 = vld [vmem:[%s0 + $0x8] sm:$0xf]
  %v15 = vld [vmem:[%s0 + $0xc] sm:$0xf]
  %v16 = vld [vmem:[%s0 + $0x10] sm:$0xf]
  %v17 = vld [vmem:[%s0 + $0x14] sm:$0xf]
  %v18 = vld [vmem:[%s0 + $0x18] sm:$0xf]
  %v19 = vld [vmem:[%s0 + $0x1c] sm:$0xf]
  %v20 = vld [vmem:[%s0 + $0x20] sm:$0xf]
  %v21 = vld [vmem:[%s0 + $0x24] sm:$0xf]
  %v22 = vld [vmem:[%s0 + $0x28] sm:$0xf]
  %v23 = vld [vmem:[%s0 + $0x2c] sm:$0xf]
  %v24 = vld [vmem:[%s0 + $0x30] sm:$0xf]
  %v25 = vld [vmem:[%s0 + $0x34] sm:$0xf]
  %v26 = vld [vmem:[%s0 + $0x38] sm:$0xf]
  %v27 = vld [vmem:[%s0 + $0x3c] sm:$0xf]
  %v28 = vld [vmem:[%s1] sm:$0xf]
  %v29 = vld [vmem:[%s1 + $0x4] sm:$0xf]
  %v30 = vld [vmem:[%s1 + $0x8] sm:$0xf]
  %v31 = vld [vmem:[%s1 + $0xc] sm:$0xf]
  %v32 = vld [vmem:[%s1 + $0x10] sm:$0xf]
  %v33 = vld [vmem:[%s1 + $0x14] sm:$0xf]
  %v34 = vld [vmem:[%s1 + $0x18] sm:$0xf]
  %v35 = vld [vmem:[%s1 + $0x1c] sm:$0xf]
  %v36 = vld [vmem:[%s1 + $0x20] sm:$0xf]
  %v53 = vunpack.c.l.b16 %v12
  %v54 = vunpack.c.l.b16 %v13
  %v55 = vunpack.c.l.b16 %v14
  %v56 = vunpack.c.l.b16 %v15
  %v57 = vunpack.c.l.b16 %v16
  %v58 = vunpack.c.l.b16 %v17
  %v59 = vunpack.c.l.b16 %v18
  %v60 = vunpack.c.l.b16 %v19
  %v61 = vunpack.c.l.b16 %v20
  %v62 = vunpack.c.l.b16 %v21
  %v63 = vunpack.c.l.b16 %v22
  %v64 = vunpack.c.l.b16 %v23
  %v65 = vunpack.c.l.b16 %v24
  %v66 = vunpack.c.l.b16 %v25
  %v67 = vunpack.c.l.b16 %v26
  %v68 = vunpack.c.l.b16 %v27
  %v69 = vpack.c.b16 %v54, %v53
  %v70 = vpack.c.b16 %v56, %v55
  %v71 = vpack.c.b16 %v58, %v57
  %v72 = vpack.c.b16 %v60, %v59
  %v73 = vpack.c.b16 %v62, %v61
  %v74 = vpack.c.b16 %v64, %v63
  %v75 = vpack.c.b16 %v66, %v65
  %v76 = vpack.c.b16 %v68, %v67
  %v86 = vunpack.c.l.b16 %v28
  %v87 = vunpack.c.l.b16 %v29
  %v88 = vunpack.c.l.b16 %v30
  %v89 = vunpack.c.l.b16 %v31
  %v90 = vunpack.c.l.b16 %v32
  %v91 = vunpack.c.l.b16 %v33
  %v92 = vunpack.c.l.b16 %v34
  %v93 = vunpack.c.l.b16 %v35
  %v94 = vunpack.c.l.b16 %v36
  %v95 = vpack.c.b16 %v87, %v86
  %v96 = vpack.c.b16 %v89, %v88
  %v97 = vpack.c.b16 %v91, %v90
  %v98 = vpack.c.b16 %v93, %v92
  %v99 = vpack.c.b16 %v94, %v94
  %vm104 = vcmask 588800
  %v106 = vsel %vm104, %v69, 0
  %v109 = vsel %vm104, %v70, 0
  %v112 = vsel %vm104, %v71, 0
  %v115 = vsel %vm104, %v72, 0
  %v118 = vsel %vm104, %v73, 0
  %v121 = vsel %vm104, %v74, 0
  %v124 = vsel %vm104, %v75, 0
  %v127 = vsel %vm104, %v76, 0
  %vm129 = vcmask 1043456
  %v131 = vsel %vm129, %v99, 0
  %133 = vmatprep.subr.bf16.mxu0 0
  %134 = vmatpush1.bf16.msra.mxu0 0
  %135 = vmatprep.subr.bf16.mxu0 0
  %136 = vmatpush1.bf16.msra.mxu0 0
  %137 = vmatprep.subr.bf16.mxu0 0
  %138 = vmatpush1.bf16.msra.mxu0 0
  %139 = vmatprep.subr.bf16.mxu0 0
  %140 = vmatpush1.bf16.msra.mxu0 %v131
  %141 = vmatprep.subr.bf16.mxu0 0
  %142 = vmatpush1.bf16.msra.mxu0 %v98
  %143 = vmatprep.subr.bf16.mxu0 0
  %144 = vmatpush1.bf16.msra.mxu0 %v97
  %145 = vmatprep.subr.bf16.mxu0 0
  %146 = vmatpush1.bf16.msra.mxu0 %v96
  %147 = vmatprep.subr.bf16.mxu0 0
  %148 = vmatpush1.bf16.msra.mxu0 %v95
  %149 = vmatprep.subr.bf16.mxu0 0
  %150 = vmatpush2.bf16.msra.mxu0 0
  %151 = vmatprep.subr.bf16.mxu0 0
  %152 = vmatpush2.bf16.msra.mxu0 0
  %153 = vmatprep.subr.bf16.mxu0 0
  %154 = vmatpush2.bf16.msra.mxu0 0
  %155 = vmatprep.subr.bf16.mxu0 0
  %156 = vmatpush2.bf16.msra.mxu0 0
  %157 = vmatprep.subr.bf16.mxu0 0
  %158 = vmatpush2.bf16.msra.mxu0 0
  %159 = vmatprep.subr.bf16.mxu0 0
  %160 = vmatpush2.bf16.msra.mxu0 0
  %161 = vmatprep.subr.bf16.mxu0 0
  %162 = vmatpush2.bf16.msra.mxu0 0
  %163 = vmatprep.subr.bf16.mxu0 0
  %164 = vmatpush2.bf16.msra.mxu0 0
  %165 = vmatprep.mubr.bf16.mxu0 0
  %166 = vmatmul.mubr.bf16.gmra.mxu0 %v106
  %v167 = vpop.f32.mrf.mxu0
  %v168 = vadd.f32 0.0, %v167
  %v169 = vpop.f32.mrf.mxu0
  %v170 = vpop.f32.mrf.mxu0
  %v171 = vadd.f32 0.0, %v170
  %v172 = vpop.f32.mrf.mxu0
  %173 = vmatprep.mubr.bf16.mxu0 0
  %174 = vmatmul.mubr.bf16.gmra.mxu0 %v109
  %v175 = vpop.f32.mrf.mxu0
  %v176 = vadd.f32 0.0, %v175
  %v177 = vpop.f32.mrf.mxu0
  %v178 = vpop.f32.mrf.mxu0
  %v179 = vadd.f32 0.0, %v178
  %v180 = vpop.f32.mrf.mxu0
  %181 = vmatprep.mubr.bf16.mxu0 0
  %182 = vmatmul.mubr.bf16.gmra.mxu0 %v112
  %v183 = vpop.f32.mrf.mxu0
  %v184 = vadd.f32 0.0, %v183
  %v185 = vpop.f32.mrf.mxu0
  %v186 = vpop.f32.mrf.mxu0
  %v187 = vadd.f32 0.0, %v186
  %v188 = vpop.f32.mrf.mxu0
  %189 = vmatprep.mubr.bf16.mxu0 0
  %190 = vmatmul.mubr.bf16.gmra.mxu0 %v115
  %v191 = vpop.f32.mrf.mxu0
  %v192 = vadd.f32 0.0, %v191
  %v193 = vpop.f32.mrf.mxu0
  %v194 = vpop.f32.mrf.mxu0
  %v195 = vadd.f32 0.0, %v194
  %v196 = vpop.f32.mrf.mxu0
  %197 = vmatprep.mubr.bf16.mxu0 0
  %198 = vmatmul.mubr.bf16.gmra.mxu0 %v118
  %v199 = vpop.f32.mrf.mxu0
  %v200 = vadd.f32 0.0, %v199
  %v201 = vpop.f32.mrf.mxu0
  %v202 = vpop.f32.mrf.mxu0
  %v203 = vadd.f32 0.0, %v202
  %v204 = vpop.f32.mrf.mxu0
  %205 = vmatprep.mubr.bf16.mxu0 0
  %206 = vmatmul.mubr.bf16.gmra.mxu0 %v121
  %v207 = vpop.f32.mrf.mxu0
  %v208 = vadd.f32 0.0, %v207
  %v209 = vpop.f32.mrf.mxu0
  %v210 = vpop.f32.mrf.mxu0
  %v211 = vadd.f32 0.0, %v210
  %v212 = vpop.f32.mrf.mxu0
  %213 = vmatprep.mubr.bf16.mxu0 0
  %214 = vmatmul.mubr.bf16.gmra.mxu0 %v124
  %v215 = vpop.f32.mrf.mxu0
  %v216 = vadd.f32 0.0, %v215
  %v217 = vpop.f32.mrf.mxu0
  %v218 = vpop.f32.mrf.mxu0
  %v219 = vadd.f32 0.0, %v218
  %v220 = vpop.f32.mrf.mxu0
  %221 = vmatprep.mubr.bf16.mxu0 0
  %222 = vmatmul.mubr.bf16.gmra.mxu0 %v127
  %v223 = vpop.f32.mrf.mxu0
  %v224 = vadd.f32 0.0, %v223
  %v225 = vpop.f32.mrf.mxu0
  %v226 = vpop.f32.mrf.mxu0
  %v227 = vadd.f32 0.0, %v226
  %v228 = vpop.f32.mrf.mxu0
  %229 = vdwg.mxu0
  %v230 = vpack.c.bf16 %v171, %v168
  %v231 = vpack.c.bf16 %v179, %v176
  %v232 = vpack.c.bf16 %v187, %v184
  %v233 = vpack.c.bf16 %v195, %v192
  %v234 = vpack.c.bf16 %v203, %v200
  %v235 = vpack.c.bf16 %v211, %v208
  %v236 = vpack.c.bf16 %v219, %v216
  %v237 = vpack.c.bf16 %v227, %v224
  %v246 = vunpack.c.l.b16 %v230
  %v247 = vunpack.c.h.b16 %v230
  %v248 = vunpack.c.l.b16 %v231
  %v249 = vunpack.c.h.b16 %v231
  %v250 = vunpack.c.l.b16 %v232
  %v251 = vunpack.c.h.b16 %v232
  %v252 = vunpack.c.l.b16 %v233
  %v253 = vunpack.c.h.b16 %v233
  %v254 = vunpack.c.l.b16 %v234
  %v255 = vunpack.c.h.b16 %v234
  %v256 = vunpack.c.l.b16 %v235
  %v257 = vunpack.c.h.b16 %v235
  %v258 = vunpack.c.l.b16 %v236
  %v259 = vunpack.c.h.b16 %v236
  %v260 = vunpack.c.l.b16 %v237
  %v261 = vunpack.c.h.b16 %v237
  %v262 = vpack.c.b16 %v246, %v246
  %v263 = vpack.c.b16 %v247, %v247
  %v264 = vpack.c.b16 %v248, %v248
  %v265 = vpack.c.b16 %v249, %v249
  %v266 = vpack.c.b16 %v250, %v250
  %v267 = vpack.c.b16 %v251, %v251
  %v268 = vpack.c.b16 %v252, %v252
  %v269 = vpack.c.b16 %v253, %v253
  %v270 = vpack.c.b16 %v254, %v254
  %v271 = vpack.c.b16 %v255, %v255
  %v272 = vpack.c.b16 %v256, %v256
  %v273 = vpack.c.b16 %v257, %v257
  %v274 = vpack.c.b16 %v258, %v258
  %v275 = vpack.c.b16 %v259, %v259
  %v276 = vpack.c.b16 %v260, %v260
  %v277 = vpack.c.b16 %v261, %v261
  %vm294 = vcmask 125952
  %295 = vst.msk [vmem:[%s2] sm:$0xf] %vm294, %v262
  %296 = vst.msk [vmem:[%s2 + $0x4] sm:$0xf] %vm294, %v263
  %297 = vst.msk [vmem:[%s2 + $0x8] sm:$0xf] %vm294, %v264
  %298 = vst.msk [vmem:[%s2 + $0xc] sm:$0xf] %vm294, %v265
  %299 = vst.msk [vmem:[%s2 + $0x10] sm:$0xf] %vm294, %v266
  %300 = vst.msk [vmem:[%s2 + $0x14] sm:$0xf] %vm294, %v267
  %301 = vst.msk [vmem:[%s2 + $0x18] sm:$0xf] %vm294, %v268
  %302 = vst.msk [vmem:[%s2 + $0x1c] sm:$0xf] %vm294, %v269
  %303 = vst.msk [vmem:[%s2 + $0x20] sm:$0xf] %vm294, %v270
  %304 = vst.msk [vmem:[%s2 + $0x24] sm:$0xf] %vm294, %v271
  %305 = vst.msk [vmem:[%s2 + $0x28] sm:$0xf] %vm294, %v272
  %306 = vst.msk [vmem:[%s2 + $0x2c] sm:$0xf] %vm294, %v273
  %307 = vst.msk [vmem:[%s2 + $0x30] sm:$0xf] %vm294, %v274
  %308 = vst.msk [vmem:[%s2 + $0x34] sm:$0xf] %vm294, %v275
  %309 = vst.msk [vmem:[%s2 + $0x38] sm:$0xf] %vm294, %v276
  %310 = vst.msk [vmem:[%s2 + $0x3c] sm:$0xf] %vm294, %v277
  // Predicated region
  $region10: #{img_embedder_forward.11} parent=0 // pred_check
    _
  $region11: #{img_embedder_forward.11} parent=0 // pred_check_branch
    %312 = sbr.rel (0) target = $region13
  $region12: #{img_embedder_forward.11} parent=0 // pred_region
    _
  $region13: #{img_embedder_forward.11} parent=0 // pred_fallthru
    _
  // Predicated region
  $region14: #{img_embedder_forward.11} parent=0 // pred_check
    _
  $region15: #{img_embedder_forward.11} parent=0 // pred_check_branch
    %314 = sbr.rel (0) target = $region17
  $region16: #{img_embedder_forward.11} parent=0 // pred_region
    _
  $region17: #{img_embedder_forward.11} parent=0 // pred_fallthru
    _

// kernel: img_embedder_forward.12
$region0: #{img_embedder_forward.12}
  #allocation0 [shape = 'u32[]', space=smem, size = 0x4, offset = 0x4, fixed_abs, tag = 'smem constant byte address 0x4 - core index']
  #allocation1 [shape = 'u32[144,128]{1,0:T(1,128)}', space=vmem, size = 0x12000, scoped, tag = 'internal scratch']
  #allocation2 [shape = 'f32[1,16]{1,0:T(1,128)}', space=vmem, size = 0x200, scoped, tag = 'scratch operand']
  #allocation3 [shape = 'f32[1,16]{1,0:T(1,128)}', space=vmem, size = 0x200, scoped, tag = 'scratch operand']
  %s0 = inlined_call_operand.vmem [shape: bf16[2,64,16], index: 0, kind: input, shape index: {}]
  %s1 = inlined_call_operand.vmem [shape: f32[1,1,16], index: 1, kind: input, shape index: {}]
  %s2 = inlined_call_operand.vmem [shape: f32[1,1,16], index: 2, kind: input, shape index: {}]
  %s3 = inlined_call_operand.vmem [shape: bf16[2,64,16], index: 3, kind: output, shape index: {}]
  %s4 = sld [smem:[#allocation0]]
  $region57: #{img_embedder_forward.12} parent=0
    _
  %s6 = ssub.s32 1, %s4
  %s7 = scalar_select 0, %s6, %s4
  loop: start=0, step=1, limit=6
  $region2: #{img_embedder_forward.12} parent=0 // loop_pre_header
    _
  $region3: #{img_embedder_forward.12} parent=0 // loop_header
    %s9 = sphi 0, %s13
    %p10 = scmp.ge.s32.totalorder %s9, 6
    %s16 = sphi 0, %s35
    %s17 = sphi 0, %s31
    %s18 = sphi 0, %s27
    %s19 = sphi 0, %s16
    %s20 = sphi 0, %s17
    %s21 = sphi 0, %s18
    %s22 = sphi 0, %s19
    %s23 = sphi 0, %s20
    %s24 = sphi 0, %s21
    %s40 = sphi 0, %s42
    %s43 = sphi 0, %s40
    %s44 = sphi 0, %s43
    %s60 = sphi 0, %s44
    %s64 = sphi 0, %s64
    %s66 = sphi 0, %s64
    %s67 = sphi 0, %s66
    %s81 = sphi 0, %s67
    %s85 = sphi 0, %s85
    %s87 = sphi 0, %s85
    %s88 = sphi 0, %s87
    %s102 = sphi 0, %s88
    %s112 = sphi 0, %s114
    %s115 = sphi 0, %s112
    %s116 = sphi 0, %s115
    %s132 = sphi 0, %s116
  $region4: #{img_embedder_forward.12} parent=0 // loop_header_branch
    %12 = sbr.rel (%p10) target = $region8
  $region5: #{img_embedder_forward.12} parent=0 // loop_body
    %s14 = ssub.s32 %s9, 1
    %s15 = ssub.s32 %s9, 2
    %s25 = sadd.s32 1, %s18
    %p26 = scmp.ge.s32.totalorder %s25, 1
    %s27 = scalar_select %p26, 0, %s25
    %s28 = sadd.s32 1, %s17
    %s29 = scalar_select %p26, %s28, %s17
    %p30 = scmp.ge.s32.totalorder %s29, 2
    %s31 = scalar_select %p30, 0, %s29
    %s32 = sadd.s32 1, %s16
    %s33 = scalar_select %p30, %s32, %s16
    %p34 = scmp.ge.s32.totalorder %s33, 2
    %s35 = scalar_select %p34, 0, %s33
    %s36 = ssub.s32 %s16, %s35
    %s37 = ssub.s32 %s18, %s27
    %s38 = sor.u32 %s36, %s37
    %p39 = scmp.eq.s32.totalorder %s38, 0
    %s41 = sadd.s32 %s40, 1
    %s42 = scalar_select %p39, %s40, %s41
    %p45 = pneg %p39
    %p46 = scmp.eq.s32.totalorder %s9, 3
    %p47 = por %p45, %p46
    %p48 = scmp.ne.s32.totalorder %s40, %s43
    %p49 = scmp.eq.s32.totalorder %s9, 0
    %p50 = por %p48, %p49
    %p51 = scmp.ne.s32.totalorder %s40, %s43
    %p52 = scmp.eq.s32.totalorder %s14, 3
    %p53 = por %p51, %p52
    %p54 = scmp.ne.s32.totalorder %s43, %s44
    %p55 = scmp.eq.s32.totalorder %s14, 0
    %p56 = por %p54, %p55
    %p57 = scmp.ne.s32.totalorder %s43, %s44
    %p58 = scmp.eq.s32.totalorder %s15, 3
    %p59 = por %p57, %p58
    %p61 = scmp.ne.s32.totalorder %s44, %s60
    %p62 = scmp.eq.s32.totalorder %s15, 0
    %p63 = por %p61, %p62
    %s65 = sadd.s32 %s64, 1
    %p68 = scmp.eq.s32.totalorder %s9, 3
    %p69 = scmp.ne.s32.totalorder %s64, %s66
    %p70 = scmp.eq.s32.totalorder %s9, 0
    %p71 = por %p69, %p70
    %p72 = scmp.ne.s32.totalorder %s64, %s66
    %p73 = scmp.eq.s32.totalorder %s14, 3
    %p74 = por %p72, %p73
    %p75 = scmp.ne.s32.totalorder %s66, %s67
    %p76 = scmp.eq.s32.totalorder %s14, 0
    %p77 = por %p75, %p76
    %p78 = scmp.ne.s32.totalorder %s66, %s67
    %p79 = scmp.eq.s32.totalorder %s15, 3
    %p80 = por %p78, %p79
    %p82 = scmp.ne.s32.totalorder %s67, %s81
    %p83 = scmp.eq.s32.totalorder %s15, 0
    %p84 = por %p82, %p83
    %s86 = sadd.s32 %s85, 1
    %p89 = scmp.eq.s32.totalorder %s9, 3
    %p90 = scmp.ne.s32.totalorder %s85, %s87
    %p91 = scmp.eq.s32.totalorder %s9, 0
    %p92 = por %p90, %p91
    %p93 = scmp.ne.s32.totalorder %s85, %s87
    %p94 = scmp.eq.s32.totalorder %s14, 3
    %p95 = por %p93, %p94
    %p96 = scmp.ne.s32.totalorder %s87, %s88
    %p97 = scmp.eq.s32.totalorder %s14, 0
    %p98 = por %p96, %p97
    %p99 = scmp.ne.s32.totalorder %s87, %s88
    %p100 = scmp.eq.s32.totalorder %s15, 3
    %p101 = por %p99, %p100
    %p103 = scmp.ne.s32.totalorder %s88, %s102
    %p104 = scmp.eq.s32.totalorder %s15, 0
    %p105 = por %p103, %p104
    %s106 = smul.u32 %s18, %s17
    %s107 = smul.u32 %s27, %s31
    %s108 = ssub.s32 %s16, %s35
    %s109 = ssub.s32 %s106, %s107
    %s110 = sor.u32 %s108, %s109
    %p111 = scmp.eq.s32.totalorder %s110, 0
    %s113 = sadd.s32 %s112, 1
    %s114 = scalar_select %p111, %s112, %s113
    %p117 = pneg %p111
    %p118 = scmp.eq.s32.totalorder %s9, 3
    %p119 = por %p117, %p118
    %p120 = scmp.ne.s32.totalorder %s112, %s115
    %p121 = scmp.eq.s32.totalorder %s9, 0
    %p122 = por %p120, %p121
    %p123 = scmp.ne.s32.totalorder %s112, %s115
    %p124 = scmp.eq.s32.totalorder %s14, 3
    %p125 = por %p123, %p124
    %p126 = scmp.ne.s32.totalorder %s115, %s116
    %p127 = scmp.eq.s32.totalorder %s14, 0
    %p128 = por %p126, %p127
    %p129 = scmp.ne.s32.totalorder %s115, %s116
    %p130 = scmp.eq.s32.totalorder %s15, 3
    %p131 = por %p129, %p130
    %p133 = scmp.ne.s32.totalorder %s116, %s132
    %p134 = scmp.eq.s32.totalorder %s15, 0
    %p135 = por %p133, %p134
    %p136 = scmp.le.s32.totalorder 1, %s9
    %p137 = scmp.lt.s32.totalorder %s9, 5
    %p138 = pnand %p136, %p137
    %p139 = pneg %p138
    // Predicated region
    $region9: #{img_embedder_forward.12} parent=5 // pred_check
      _
    $region10: #{img_embedder_forward.12} parent=5 // pred_check_branch
      %141 = sbr.rel (%p138) target = $region12
    $region11: #{img_embedder_forward.12} parent=5 // pred_region
      %s142 = ssub.s32 %s9, 1
      // Predicated region
      $region13: #{img_embedder_forward.12} parent=11 // pred_check
        %p143 = pneg %p77
      $region14: #{img_embedder_forward.12} parent=11 // pred_check_branch
        %145 = sbr.rel (%p143) target = $region16
      $region15: #{img_embedder_forward.12} parent=11 // pred_region
        _
      $region16: #{img_embedder_forward.12} parent=11 // pred_fallthru
        _
      // Predicated region
      $region17: #{img_embedder_forward.12} parent=11 // pred_check
        %p146 = pneg %p98
      $region18: #{img_embedder_forward.12} parent=11 // pred_check_branch
        %148 = sbr.rel (%p146) target = $region20
      $region19: #{img_embedder_forward.12} parent=11 // pred_region
        _
      $region20: #{img_embedder_forward.12} parent=11 // pred_fallthru
        _
    $region12: #{img_embedder_forward.12} parent=5 // pred_fallthru
      _
    %p149 = scmp.lt.s32.totalorder %s9, 4
    // Predicated region
    $region21: #{img_embedder_forward.12} parent=5 // pred_check
      %p150 = pneg %p149
    $region22: #{img_embedder_forward.12} parent=5 // pred_check_branch
      %152 = sbr.rel (%p150) target = $region24
    $region23: #{img_embedder_forward.12} parent=5 // pred_region
      // Predicated region
      $region25: #{img_embedder_forward.12} parent=23 // pred_check
        %p153 = pneg %p50
      $region26: #{img_embedder_forward.12} parent=23 // pred_check_branch
        %155 = sbr.rel (%p153) target = $region28
      $region27: #{img_embedder_forward.12} parent=23 // pred_region
        %s156 = smul.u32 8, %s18
        %p157 = scmp.lt.s32.totalorder %s16, 1
        %s158 = scalar_select %p157, %s16, 1
        %p159 = scmp.lt.s32.totalorder %s156, 7
        %s160 = scalar_select %p159, %s156, 7
        %s161 = smul.addr %s158, 8
        %s162 = sadd.s32 %s160, %s161
        %s163 = smul.addr %s162, 4
        %s164 = scalar_lea.vmem %s0, %s163
        %s165 = smul.u32 8, %s18
      $region28: #{img_embedder_forward.12} parent=23 // pred_fallthru
        _
    $region24: #{img_embedder_forward.12} parent=5 // pred_fallthru
      _
    %p166 = scmp.le.s32.totalorder 1, %s9
    %p167 = scmp.lt.s32.totalorder %s9, 5
    %p168 = pnand %p166, %p167
    %p169 = pneg %p168
    // Predicated region
    $region29: #{img_embedder_forward.12} parent=5 // pred_check
      _
    $region30: #{img_embedder_forward.12} parent=5 // pred_check_branch
      %171 = sbr.rel (%p168) target = $region32
    $region31: #{img_embedder_forward.12} parent=5 // pred_region
      %s172 = ssub.s32 %s9, 1
      %s173 = smul.u32 8, %s21
      %p174 = scmp.lt.s32.totalorder %s19, 1
      %s175 = scalar_select %p174, %s19, 1
      %p176 = scmp.lt.s32.totalorder %s173, 7
      %s177 = scalar_select %p176, %s173, 7
      %s178 = smul.addr %s175, 8
      %s179 = sadd.s32 %s177, %s178
      %s180 = smul.addr %s179, 4
      %s181 = scalar_lea.vmem %s0, %s180
      %p182 = pneg %p56
      %p183 = pneg %p53
      %p184 = pneg %p77
      %p185 = pneg %p74
      %p186 = pneg %p98
      %p187 = pneg %p95
      %p188 = pneg %p128
      %p189 = pneg %p125
      %s190 = smul.u32 %s21, %s20
      %s191 = smul.u32 8, %s190
      %p192 = scmp.lt.s32.totalorder %s19, 1
      %s193 = scalar_select %p192, %s19, 1
      %p194 = scmp.lt.s32.totalorder %s191, 7
      %s195 = scalar_select %p194, %s191, 7
      %s196 = smul.addr %s193, 8
      %s197 = sadd.s32 %s195, %s196
      %s198 = smul.addr %s197, 4
      %s199 = scalar_lea.vmem %s3, %s198
      %s200 = smul.u32 8, %s21
      %p201 = scmp.lt.s32.totalorder %s19, 1
      %s202 = scalar_select %p201, %s19, 1
      %p203 = scmp.lt.s32.totalorder %s200, 7
      %s204 = scalar_select %p203, %s200, 7
      %s205 = smul.addr %s202, 8
      %s206 = sadd.s32 %s204, %s205
      %s207 = smul.addr %s206, 4
      %s208 = scalar_lea.vmem %s0, %s207
      %s209 = smul.u32 8, %s21
      %s210 = smul.u32 %s21, %s20
      %s211 = smul.u32 8, %s210
      %p212 = scmp.lt.s32.totalorder %s19, 1
      %s213 = scalar_select %p212, %s19, 1
      %p214 = scmp.lt.s32.totalorder %s211, 7
      %s215 = scalar_select %p214, %s211, 7
      %s216 = smul.addr %s213, 8
      %s217 = sadd.s32 %s215, %s216
      %s218 = smul.addr %s217, 4
      %s219 = scalar_lea.vmem %s3, %s218
      %s220 = smul.u32 %s21, %s20
      %s221 = smul.u32 8, %s220
      %p222 = scmp.eq.s32.totalorder %s20, 0
      %p223 = scmp.eq.s32.totalorder %s21, 0
      %p224 = pnand %p222, %p223
      %p225 = pneg %p224
      // Predicated region
      $region33: #{img_embedder_forward.12} parent=31 // pred_check
        _
      $region34: #{img_embedder_forward.12} parent=31 // pred_check_branch
        %227 = sbr.rel (%p224) target = $region36
      $region35: #{img_embedder_forward.12} parent=31 // pred_region
        %vm228 = vcmask 122880
        %229 = vst.msk [vmem:[#allocation2] sm:$0x1] %vm228, 0.0
        %230 = vst.msk [vmem:[#allocation3] sm:$0x1] %vm228, 0.0
      $region36: #{img_embedder_forward.12} parent=31 // pred_fallthru
        _
      // Predicated region
      $region37: #{img_embedder_forward.12} parent=31 // pred_check
        %p231 = pneg %p222
      $region38: #{img_embedder_forward.12} parent=31 // pred_check_branch
        %233 = sbr.rel (%p231) target = $region40
      $region39: #{img_embedder_forward.12} parent=31 // pred_region
        %v234 = vld [vmem:[%s208] sm:$0xf]
        %v235 = vld [vmem:[%s208 + $0x4] sm:$0xf]
        %v236 = vld [vmem:[%s208 + $0x8] sm:$0xf]
        %v237 = vld [vmem:[%s208 + $0xc] sm:$0xf]
        %v238 = vld [vmem:[%s208 + $0x10] sm:$0xf]
        %v239 = vld [vmem:[%s208 + $0x14] sm:$0xf]
        %v240 = vld [vmem:[%s208 + $0x18] sm:$0xf]
        %v241 = vld [vmem:[%s208 + $0x1c] sm:$0xf]
        %v242 = vunpack.c.l.bf16 %v234
        %v243 = vunpack.c.l.bf16 %v235
        %v244 = vunpack.c.l.bf16 %v236
        %v245 = vunpack.c.l.bf16 %v237
        %v246 = vunpack.c.l.bf16 %v238
        %v247 = vunpack.c.l.bf16 %v239
        %v248 = vunpack.c.l.bf16 %v240
        %v249 = vunpack.c.l.bf16 %v241
        %v250 = vld [vmem:[#allocation2] sm:$0x1]
        %vm251 = vcmask 523264
        %v253 = vsel %vm251, 1.0, 0
        %255 = vmatprep.subr.mxu0 0.0
        %256 = vmatpush1.msra.mxu0 0.0
        %257 = vmatprep.subr.mxu0 0.0
        %258 = vmatpush1.msra.mxu0 0.0
        %259 = vmatprep.subr.mxu0 0.0
        %260 = vmatpush1.msra.mxu0 0.0
        %261 = vmatprep.subr.mxu0 0.0
        %262 = vmatpush1.msra.mxu0 0.0
        %263 = vmatprep.subr.mxu0 0.0
        %264 = vmatpush1.msra.mxu0 0.0
        %265 = vmatprep.subr.mxu0 0.0
        %266 = vmatpush1.msra.mxu0 0.0
        %267 = vmatprep.subr.mxu0 0.0
        %268 = vmatpush1.msra.mxu0 0.0
        %269 = vmatprep.subr.mxu0 0.0
        %270 = vmatpush1.msra.mxu0 0.0
        %271 = vmatprep.subr.mxu0 0.0
        %272 = vmatpush1.msra.mxu0 %v249
        %273 = vmatprep.subr.mxu0 0.0
        %274 = vmatpush1.msra.mxu0 %v248
        %275 = vmatprep.subr.mxu0 0.0
        %276 = vmatpush1.msra.mxu0 %v247
        %277 = vmatprep.subr.mxu0 0.0
        %278 = vmatpush1.msra.mxu0 %v246
        %279 = vmatprep.subr.mxu0 0.0
        %280 = vmatpush1.msra.mxu0 %v245
        %281 = vmatprep.subr.mxu0 0.0
        %282 = vmatpush1.msra.mxu0 %v244
        %283 = vmatprep.subr.mxu0 0.0
        %284 = vmatpush1.msra.mxu0 %v243
        %285 = vmatprep.subr.mxu0 0.0
        %286 = vmatpush1.msra.mxu0 %v242
        %287 = vmatprep.subr.mxu0 0.0
        %288 = vmatpush2.msra.mxu0 0.0
        %289 = vmatprep.subr.mxu0 0.0
        %290 = vmatpush2.msra.mxu0 0.0
        %291 = vmatprep.subr.mxu0 0.0
        %292 = vmatpush2.msra.mxu0 0.0
        %293 = vmatprep.subr.mxu0 0.0
        %294 = vmatpush2.msra.mxu0 0.0
        %295 = vmatprep.subr.mxu0 0.0
        %296 = vmatpush2.msra.mxu0 0.0
        %297 = vmatprep.subr.mxu0 0.0
        %298 = vmatpush2.msra.mxu0 0.0
        %299 = vmatprep.subr.mxu0 0.0
        %300 = vmatpush2.msra.mxu0 0.0
        %301 = vmatprep.subr.mxu0 0.0
        %302 = vmatpush2.msra.mxu0 0.0
        %303 = vmatprep.subr.mxu0 0.0
        %304 = vmatpush2.msra.mxu0 0.0
        %305 = vmatprep.subr.mxu0 0.0
        %306 = vmatpush2.msra.mxu0 0.0
        %307 = vmatprep.subr.mxu0 0.0
        %308 = vmatpush2.msra.mxu0 0.0
        %309 = vmatprep.subr.mxu0 0.0
        %310 = vmatpush2.msra.mxu0 0.0
        %311 = vmatprep.subr.mxu0 0.0
        %312 = vmatpush2.msra.mxu0 0.0
        %313 = vmatprep.subr.mxu0 0.0
        %314 = vmatpush2.msra.mxu0 0.0
        %315 = vmatprep.subr.mxu0 0.0
        %316 = vmatpush2.msra.mxu0 0.0
        %317 = vmatprep.subr.mxu0 0.0
        %318 = vmatpush2.msra.mxu0 0.0
        %319 = vmatprep.mubr.f32.mxu0 0.0
        %320 = vmatmul.mubr.f32.gmra.mxu0 %v253
        %v321 = vpop.f32.mrf.mxu0
        %v322 = vadd.f32 0.0, %v321
        %v323 = vpop.f32.mrf.mxu0
        %324 = vdwg.mxu0
        %v325 = vadd.f32 %v250, %v322
        %vm326 = vcmask 122880
        %327 = vst.msk [vmem:[#allocation2] sm:$0x1] %vm326, %v325
        %v328 = vld [vmem:[#allocation3] sm:$0x1]
        %v329 = vmul.f32 %v242, %v242
        %v330 = vmul.f32 %v243, %v243
        %v331 = vmul.f32 %v244, %v244
        %v332 = vmul.f32 %v245, %v245
        %v333 = vmul.f32 %v246, %v246
        %v334 = vmul.f32 %v247, %v247
        %v335 = vmul.f32 %v248, %v248
        %v336 = vmul.f32 %v249, %v249
        %337 = vmatprep.subr.mxu0 0.0
        %338 = vmatpush1.msra.mxu0 0.0
        %339 = vmatprep.subr.mxu0 0.0
        %340 = vmatpush1.msra.mxu0 0.0
        %341 = vmatprep.subr.mxu0 0.0
        %342 = vmatpush1.msra.mxu0 0.0
        %343 = vmatprep.subr.mxu0 0.0
        %344 = vmatpush1.msra.mxu0 0.0
        %345 = vmatprep.subr.mxu0 0.0
        %346 = vmatpush1.msra.mxu0 0.0
        %347 = vmatprep.subr.mxu0 0.0
        %348 = vmatpush1.msra.mxu0 0.0
        %349 = vmatprep.subr.mxu0 0.0
        %350 = vmatpush1.msra.mxu0 0.0
        %351 = vmatprep.subr.mxu0 0.0
        %352 = vmatpush1.msra.mxu0 0.0
        %353 = vmatprep.subr.mxu0 0.0
        %354 = vmatpush1.msra.mxu0 %v336
        %355 = vmatprep.subr.mxu0 0.0
        %356 = vmatpush1.msra.mxu0 %v335
        %357 = vmatprep.subr.mxu0 0.0
        %358 = vmatpush1.msra.mxu0 %v334
        %359 = vmatprep.subr.mxu0 0.0
        %360 = vmatpush1.msra.mxu0 %v333
        %361 = vmatprep.subr.mxu0 0.0
        %362 = vmatpush1.msra.mxu0 %v332
        %363 = vmatprep.subr.mxu0 0.0
        %364 = vmatpush1.msra.mxu0 %v331
        %365 = vmatprep.subr.mxu0 0.0
        %366 = vmatpush1.msra.mxu0 %v330
        %367 = vmatprep.subr.mxu0 0.0
        %368 = vmatpush1.msra.mxu0 %v329
        %369 = vmatprep.subr.mxu0 0.0
        %370 = vmatpush2.msra.mxu0 0.0
        %371 = vmatprep.subr.mxu0 0.0
        %372 = vmatpush2.msra.mxu0 0.0
        %373 = vmatprep.subr.mxu0 0.0
        %374 = vmatpush2.msra.mxu0 0.0
        %375 = vmatprep.subr.mxu0 0.0
        %376 = vmatpush2.msra.mxu0 0.0
        %377 = vmatprep.subr.mxu0 0.0
        %378 = vmatpush2.msra.mxu0 0.0
        %379 = vmatprep.subr.mxu0 0.0
        %380 = vmatpush2.msra.mxu0 0.0
        %381 = vmatprep.subr.mxu0 0.0
        %382 = vmatpush2.msra.mxu0 0.0
        %383 = vmatprep.subr.mxu0 0.0
        %384 = vmatpush2.msra.mxu0 0.0
        %385 = vmatprep.subr.mxu0 0.0
        %386 = vmatpush2.msra.mxu0 0.0
        %387 = vmatprep.subr.mxu0 0.0
        %388 = vmatpush2.msra.mxu0 0.0
        %389 = vmatprep.subr.mxu0 0.0
        %390 = vmatpush2.msra.mxu0 0.0
        %391 = vmatprep.subr.mxu0 0.0
        %392 = vmatpush2.msra.mxu0 0.0
        %393 = vmatprep.subr.mxu0 0.0
        %394 = vmatpush2.msra.mxu0 0.0
        %395 = vmatprep.subr.mxu0 0.0
        %396 = vmatpush2.msra.mxu0 0.0
        %397 = vmatprep.subr.mxu0 0.0
        %398 = vmatpush2.msra.mxu0 0.0
        %399 = vmatprep.subr.mxu0 0.0
        %400 = vmatpush2.msra.mxu0 0.0
        %401 = vmatprep.mubr.f32.mxu0 0.0
        %402 = vmatmul.mubr.f32.gmra.mxu0 %v253
        %v403 = vpop.f32.mrf.mxu0
        %v404 = vadd.f32 0.0, %v403
        %v405 = vpop.f32.mrf.mxu0
        %406 = vdwg.mxu0
        %v407 = vadd.f32 %v328, %v404
        %408 = vst.msk [vmem:[#allocation3] sm:$0x1] %vm326, %v407
      $region40: #{img_embedder_forward.12} parent=31 // pred_fallthru
        _
      %p409 = scmp.eq.s32.totalorder %s20, 1
      // Predicated region
      $region41: #{img_embedder_forward.12} parent=31 // pred_check
        %p410 = pneg %p409
      $region42: #{img_embedder_forward.12} parent=31 // pred_check_branch
        %412 = sbr.rel (%p410) target = $region44
      $region43: #{img_embedder_forward.12} parent=31 // pred_region
        %v413 = vld [vmem:[#allocation2] sm:$0x1]
        %vm414 = vcmask 122880
        %v415 = vsel %vm414, %v413, 0.0
        %416 = vadd.xlane.f32.xlu0 %v415
        %v417 = vpop.xlane.xlu0 %416
        %v418 = vrot.slane %v417, 4
        %v419 = vadd.f32 %v417, %v418
        %v420 = vrot.slane %v419, 2
        %v421 = vadd.f32 %v419, %v420
        %v422 = vrot.slane %v421, 1
        %v423 = vadd.f32 %v421, %v422
        %s424 = vtos %v423
        %s425 = smul.f32 %s424, 0.0009765625
        %v426 = vld [vmem:[#allocation3] sm:$0x1]
        %v427 = vsel %vm414, %v426, 0.0
        %428 = vadd.xlane.f32.xlu0 %v427
        %v429 = vpop.xlane.xlu0 %428
        %v430 = vrot.slane %v429, 4
        %v431 = vadd.f32 %v429, %v430
        %v432 = vrot.slane %v431, 2
        %v433 = vadd.f32 %v431, %v432
        %v434 = vrot.slane %v433, 1
        %v435 = vadd.f32 %v433, %v434
        %s436 = vtos %v435
        %s437 = smul.f32 %s436, 0.0009765625
        %s438 = smul.f32 %s425, %s425
        %s439 = ssub.f32 %s437, %s438
        %s440 = smax.f32 %s439, 0.0
        %s441 = sadd.f32 %s440, 1e-05
        %v442 = vstv %s441
        %v443 = vrsqrt.pop %v442
        %s444 = vtos %v443
        %v445 = vld [vmem:[%s1] sm:$0x1]
        %v446 = vstv %s444
        %v447 = vmul.f32 %v445, %v446
        %v448 = vld [vmem:[%s2] sm:$0x1]
        %v449 = vstv %s425
        %v450 = vmul.f32 %v449, %v447
        %v451 = vsub.f32 %v448, %v450
        %v452 = vld [vmem:[%s208] sm:$0xf]
        %v453 = vld [vmem:[%s208 + $0x4] sm:$0xf]
        %v454 = vld [vmem:[%s208 + $0x8] sm:$0xf]
        %v455 = vld [vmem:[%s208 + $0xc] sm:$0xf]
        %v456 = vld [vmem:[%s208 + $0x10] sm:$0xf]
        %v457 = vld [vmem:[%s208 + $0x14] sm:$0xf]
        %v458 = vld [vmem:[%s208 + $0x18] sm:$0xf]
        %v459 = vld [vmem:[%s208 + $0x1c] sm:$0xf]
        %v460 = vunpack.c.l.bf16 %v452
        %v461 = vunpack.c.l.bf16 %v453
        %v462 = vunpack.c.l.bf16 %v454
        %v463 = vunpack.c.l.bf16 %v455
        %v464 = vunpack.c.l.bf16 %v456
        %v465 = vunpack.c.l.bf16 %v457
        %v466 = vunpack.c.l.bf16 %v458
        %v467 = vunpack.c.l.bf16 %v459
        %v469 = vlaneseq
        %v470 = vshrl.u32 %v469, 7
        %v471 = vsub.s32 0, %v470
        %v472 = vrot.slane %v447, %v471
        %v474 = vmul.f32 %v460, %v472
        %v475 = vmul.f32 %v461, %v472
        %v476 = vmul.f32 %v462, %v472
        %v477 = vmul.f32 %v463, %v472
        %v478 = vmul.f32 %v464, %v472
        %v479 = vmul.f32 %v465, %v472
        %v480 = vmul.f32 %v466, %v472
        %v481 = vmul.f32 %v467, %v472
        %v483 = vlaneseq
        %v484 = vshrl.u32 %v483, 7
        %v485 = vsub.s32 0, %v484
        %v486 = vrot.slane %v451, %v485
        %v488 = vadd.f32 %v474, %v486
        %v489 = vadd.f32 %v475, %v486
        %v490 = vadd.f32 %v476, %v486
        %v491 = vadd.f32 %v477, %v486
        %v492 = vadd.f32 %v478, %v486
        %v493 = vadd.f32 %v479, %v486
        %v494 = vadd.f32 %v480, %v486
        %v495 = vadd.f32 %v481, %v486
        %v496 = vpack.c.bf16 %v489, %v488
        %v497 = vpack.c.bf16 %v491, %v490
        %v498 = vpack.c.bf16 %v493, %v492
        %v499 = vpack.c.bf16 %v495, %v494
        %v504 = vunpack.c.l.b16 %v496
        %v505 = vunpack.c.h.b16 %v496
        %v506 = vunpack.c.l.b16 %v497
        %v507 = vunpack.c.h.b16 %v497
        %v508 = vunpack.c.l.b16 %v498
        %v509 = vunpack.c.h.b16 %v498
        %v510 = vunpack.c.l.b16 %v499
        %v511 = vunpack.c.h.b16 %v499
        %v512 = vpack.c.b16 %v504, %v504
        %v513 = vpack.c.b16 %v505, %v505
        %v514 = vpack.c.b16 %v506, %v506
        %v515 = vpack.c.b16 %v507, %v507
        %v516 = vpack.c.b16 %v508, %v508
        %v517 = vpack.c.b16 %v509, %v509
        %v518 = vpack.c.b16 %v510, %v510
        %v519 = vpack.c.b16 %v511, %v511
        %vm528 = vcmask 125952
        %529 = vst.msk [vmem:[%s219] sm:$0xf] %vm528, %v512
        %530 = vst.msk [vmem:[%s219 + $0x4] sm:$0xf] %vm528, %v513
        %531 = vst.msk [vmem:[%s219 + $0x8] sm:$0xf] %vm528, %v514
        %532 = vst.msk [vmem:[%s219 + $0xc] sm:$0xf] %vm528, %v515
        %533 = vst.msk [vmem:[%s219 + $0x10] sm:$0xf] %vm528, %v516
        %534 = vst.msk [vmem:[%s219 + $0x14] sm:$0xf] %vm528, %v517
        %535 = vst.msk [vmem:[%s219 + $0x18] sm:$0xf] %vm528, %v518
        %536 = vst.msk [vmem:[%s219 + $0x1c] sm:$0xf] %vm528, %v519
      $region44: #{img_embedder_forward.12} parent=31 // pred_fallthru
        _
      %s537 = smul.u32 %s21, %s20
      %s538 = smul.u32 8, %s537
      %p539 = scmp.lt.s32.totalorder %s19, 1
      %s540 = scalar_select %p539, %s19, 1
      %p541 = scmp.lt.s32.totalorder %s538, 7
      %s542 = scalar_select %p541, %s538, 7
      %s543 = smul.addr %s540, 8
      %s544 = sadd.s32 %s542, %s543
      %s545 = smul.addr %s544, 4
      %s546 = scalar_lea.vmem %s3, %s545
      // Predicated region
      $region45: #{img_embedder_forward.12} parent=31 // pred_check
        %p547 = pneg %p125
      $region46: #{img_embedder_forward.12} parent=31 // pred_check_branch
        %549 = sbr.rel (%p547) target = $region48
      $region47: #{img_embedder_forward.12} parent=31 // pred_region
        %s550 = smul.u32 %s21, %s20
        %s551 = smul.u32 8, %s550
      $region48: #{img_embedder_forward.12} parent=31 // pred_fallthru
        _
    $region32: #{img_embedder_forward.12} parent=5 // pred_fallthru
      _
    %p552 = scmp.le.s32.totalorder 2, %s9
    // Predicated region
    $region49: #{img_embedder_forward.12} parent=5 // pred_check
      %p553 = pneg %p552
    $region50: #{img_embedder_forward.12} parent=5 // pred_check_branch
      %555 = sbr.rel (%p553) target = $region52
    $region51: #{img_embedder_forward.12} parent=5 // pred_region
      %s556 = ssub.s32 %s9, 2
      // Predicated region
      $region53: #{img_embedder_forward.12} parent=51 // pred_check
        %p557 = pneg %p131
      $region54: #{img_embedder_forward.12} parent=51 // pred_check_branch
        %559 = sbr.rel (%p557) target = $region56
      $region55: #{img_embedder_forward.12} parent=51 // pred_region
        %s560 = smul.u32 %s24, %s23
        %s561 = smul.u32 8, %s560
        %p562 = scmp.lt.s32.totalorder %s22, 1
        %s563 = scalar_select %p562, %s22, 1
        %p564 = scmp.lt.s32.totalorder %s561, 7
        %s565 = scalar_select %p564, %s561, 7
        %s566 = smul.addr %s563, 8
        %s567 = sadd.s32 %s565, %s566
        %s568 = smul.addr %s567, 4
        %s569 = scalar_lea.vmem %s3, %s568
      $region56: #{img_embedder_forward.12} parent=51 // pred_fallthru
        _
    $region52: #{img_embedder_forward.12} parent=5 // pred_fallthru
      _
  $region6: #{img_embedder_forward.12} parent=0 // loop_footer
    %s13 = sadd.s32 1, %s9
  $region7: #{img_embedder_forward.12} parent=0 // loop_footer_branch
    %8 = sbr.rel target = $region3
  $region8: #{img_embedder_forward.12} parent=0 // loop_exit
    _

// kernel: img_embedder_forward.13
$region0: #{img_embedder_forward.13}
  #allocation0 [shape = 'u32[]', space=smem, size = 0x4, offset = 0x4, fixed_abs, tag = 'smem constant byte address 0x4 - core index']
  #allocation1 [shape = 'u32[144,128]{1,0:T(1,128)}', space=vmem, size = 0x12000, scoped, tag = 'internal scratch']
  %s0 = inlined_call_operand.vmem [shape: bf16[128,16], index: 0, kind: input, shape index: {}]
  %s1 = inlined_call_operand.vmem [shape: bf16[16,32], index: 1, kind: input, shape index: {}]
  %s2 = inlined_call_operand.vmem [shape: f32[1,32], index: 2, kind: input, shape index: {}]
  %s3 = inlined_call_operand.vmem [shape: bf16[128,32], index: 3, kind: output, shape index: {}]
  %s4 = sld [smem:[#allocation0]]
  $region22: #{img_embedder_forward.13} parent=0
    _
  %s6 = ssub.s32 1, %s4
  %s7 = scalar_select 0, %s6, %s4
  // Predicated region
  $region2: #{img_embedder_forward.13} parent=0 // pred_check
    _
  $region3: #{img_embedder_forward.13} parent=0 // pred_check_branch
    %9 = sbr.rel (0) target = $region5
  $region4: #{img_embedder_forward.13} parent=0 // pred_region
    _
  $region5: #{img_embedder_forward.13} parent=0 // pred_fallthru
    _
  // Predicated region
  $region6: #{img_embedder_forward.13} parent=0 // pred_check
    _
  $region7: #{img_embedder_forward.13} parent=0 // pred_check_branch
    %11 = sbr.rel (0) target = $region9
  $region8: #{img_embedder_forward.13} parent=0 // pred_region
    _
  $region9: #{img_embedder_forward.13} parent=0 // pred_fallthru
    _
  // Predicated region
  $region10: #{img_embedder_forward.13} parent=0 // pred_check
    _
  $region11: #{img_embedder_forward.13} parent=0 // pred_check_branch
    %13 = sbr.rel (0) target = $region13
  $region12: #{img_embedder_forward.13} parent=0 // pred_region
    _
  $region13: #{img_embedder_forward.13} parent=0 // pred_fallthru
    _
  %v15 = vld [vmem:[%s0] sm:$0xf]
  %v16 = vld [vmem:[%s0 + $0x4] sm:$0xf]
  %v17 = vld [vmem:[%s0 + $0x8] sm:$0xf]
  %v18 = vld [vmem:[%s0 + $0xc] sm:$0xf]
  %v19 = vld [vmem:[%s0 + $0x10] sm:$0xf]
  %v20 = vld [vmem:[%s0 + $0x14] sm:$0xf]
  %v21 = vld [vmem:[%s0 + $0x18] sm:$0xf]
  %v22 = vld [vmem:[%s0 + $0x1c] sm:$0xf]
  %v23 = vld [vmem:[%s0 + $0x20] sm:$0xf]
  %v24 = vld [vmem:[%s0 + $0x24] sm:$0xf]
  %v25 = vld [vmem:[%s0 + $0x28] sm:$0xf]
  %v26 = vld [vmem:[%s0 + $0x2c] sm:$0xf]
  %v27 = vld [vmem:[%s0 + $0x30] sm:$0xf]
  %v28 = vld [vmem:[%s0 + $0x34] sm:$0xf]
  %v29 = vld [vmem:[%s0 + $0x38] sm:$0xf]
  %v30 = vld [vmem:[%s0 + $0x3c] sm:$0xf]
  %v31 = vld [vmem:[%s1] sm:$0xf]
  %v32 = vld [vmem:[%s1 + $0x4] sm:$0xf]
  %v33 = vld [vmem:[%s2] sm:$0x1]
  %v35 = vlaneseq
  %v36 = vshrl.u32 %v35, 7
  %v37 = vsub.s32 0, %v36
  %v38 = vrot.slane %v33, %v37
  %v56 = vunpack.c.l.b16 %v15
  %v57 = vunpack.c.l.b16 %v16
  %v58 = vunpack.c.l.b16 %v17
  %v59 = vunpack.c.l.b16 %v18
  %v60 = vunpack.c.l.b16 %v19
  %v61 = vunpack.c.l.b16 %v20
  %v62 = vunpack.c.l.b16 %v21
  %v63 = vunpack.c.l.b16 %v22
  %v64 = vunpack.c.l.b16 %v23
  %v65 = vunpack.c.l.b16 %v24
  %v66 = vunpack.c.l.b16 %v25
  %v67 = vunpack.c.l.b16 %v26
  %v68 = vunpack.c.l.b16 %v27
  %v69 = vunpack.c.l.b16 %v28
  %v70 = vunpack.c.l.b16 %v29
  %v71 = vunpack.c.l.b16 %v30
  %v72 = vpack.c.b16 %v57, %v56
  %v73 = vpack.c.b16 %v59, %v58
  %v74 = vpack.c.b16 %v61, %v60
  %v75 = vpack.c.b16 %v63, %v62
  %v76 = vpack.c.b16 %v65, %v64
  %v77 = vpack.c.b16 %v67, %v66
  %v78 = vpack.c.b16 %v69, %v68
  %v79 = vpack.c.b16 %v71, %v70
  %v82 = vunpack.c.l.b16 %v31
  %v83 = vunpack.c.l.b16 %v32
  %v84 = vpack.c.b16 %v83, %v82
  %vm86 = vcmask 130048
  %v88 = vsel %vm86, %v72, 0
  %v91 = vsel %vm86, %v73, 0
  %v94 = vsel %vm86, %v74, 0
  %v97 = vsel %vm86, %v75, 0
  %v100 = vsel %vm86, %v76, 0
  %v103 = vsel %vm86, %v77, 0
  %v106 = vsel %vm86, %v78, 0
  %v109 = vsel %vm86, %v79, 0
  %111 = vmatprep.subr.bf16.mxu0 0
  %112 = vmatpush1.bf16.msra.mxu0 0
  %113 = vmatprep.subr.bf16.mxu0 0
  %114 = vmatpush1.bf16.msra.mxu0 0
  %115 = vmatprep.subr.bf16.mxu0 0
  %116 = vmatpush1.bf16.msra.mxu0 0
  %117 = vmatprep.subr.bf16.mxu0 0
  %118 = vmatpush1.bf16.msra.mxu0 0
  %119 = vmatprep.subr.bf16.mxu0 0
  %120 = vmatpush1.bf16.msra.mxu0 0
  %121 = vmatprep.subr.bf16.mxu0 0
  %122 = vmatpush1.bf16.msra.mxu0 0
  %123 = vmatprep.subr.bf16.mxu0 0
  %124 = vmatpush1.bf16.msra.mxu0 0
  %125 = vmatprep.subr.bf16.mxu0 0
  %126 = vmatpush1.bf16.msra.mxu0 %v84
  %127 = vmatprep.subr.bf16.mxu0 0
  %128 = vmatpush2.bf16.msra.mxu0 0
  %129 = vmatprep.subr.bf16.mxu0 0
  %130 = vmatpush2.bf16.msra.mxu0 0
  %131 = vmatprep.subr.bf16.mxu0 0
  %132 = vmatpush2.bf16.msra.mxu0 0
  %133 = vmatprep.subr.bf16.mxu0 0
  %134 = vmatpush2.bf16.msra.mxu0 0
  %135 = vmatprep.subr.bf16.mxu0 0
  %136 = vmatpush2.bf16.msra.mxu0 0
  %137 = vmatprep.subr.bf16.mxu0 0
  %138 = vmatpush2.bf16.msra.mxu0 0
  %139 = vmatprep.subr.bf16.mxu0 0
  %140 = vmatpush2.bf16.msra.mxu0 0
  %141 = vmatprep.subr.bf16.mxu0 0
  %142 = vmatpush2.bf16.msra.mxu0 0
  %143 = vmatprep.mubr.bf16.mxu0 0
  %144 = vmatmul.mubr.bf16.gmra.mxu0 %v88
  %v145 = vpop.f32.mrf.mxu0
  %v146 = vadd.f32 %v38, %v145
  %v147 = vpop.f32.mrf.mxu0
  %v148 = vpop.f32.mrf.mxu0
  %v149 = vadd.f32 %v38, %v148
  %v150 = vpop.f32.mrf.mxu0
  %151 = vmatprep.mubr.bf16.mxu0 0
  %152 = vmatmul.mubr.bf16.gmra.mxu0 %v91
  %v153 = vpop.f32.mrf.mxu0
  %v154 = vadd.f32 %v38, %v153
  %v155 = vpop.f32.mrf.mxu0
  %v156 = vpop.f32.mrf.mxu0
  %v157 = vadd.f32 %v38, %v156
  %v158 = vpop.f32.mrf.mxu0
  %159 = vmatprep.mubr.bf16.mxu0 0
  %160 = vmatmul.mubr.bf16.gmra.mxu0 %v94
  %v161 = vpop.f32.mrf.mxu0
  %v162 = vadd.f32 %v38, %v161
  %v163 = vpop.f32.mrf.mxu0
  %v164 = vpop.f32.mrf.mxu0
  %v165 = vadd.f32 %v38, %v164
  %v166 = vpop.f32.mrf.mxu0
  %167 = vmatprep.mubr.bf16.mxu0 0
  %168 = vmatmul.mubr.bf16.gmra.mxu0 %v97
  %v169 = vpop.f32.mrf.mxu0
  %v170 = vadd.f32 %v38, %v169
  %v171 = vpop.f32.mrf.mxu0
  %v172 = vpop.f32.mrf.mxu0
  %v173 = vadd.f32 %v38, %v172
  %v174 = vpop.f32.mrf.mxu0
  %175 = vmatprep.mubr.bf16.mxu0 0
  %176 = vmatmul.mubr.bf16.gmra.mxu0 %v100
  %v177 = vpop.f32.mrf.mxu0
  %v178 = vadd.f32 %v38, %v177
  %v179 = vpop.f32.mrf.mxu0
  %v180 = vpop.f32.mrf.mxu0
  %v181 = vadd.f32 %v38, %v180
  %v182 = vpop.f32.mrf.mxu0
  %183 = vmatprep.mubr.bf16.mxu0 0
  %184 = vmatmul.mubr.bf16.gmra.mxu0 %v103
  %v185 = vpop.f32.mrf.mxu0
  %v186 = vadd.f32 %v38, %v185
  %v187 = vpop.f32.mrf.mxu0
  %v188 = vpop.f32.mrf.mxu0
  %v189 = vadd.f32 %v38, %v188
  %v190 = vpop.f32.mrf.mxu0
  %191 = vmatprep.mubr.bf16.mxu0 0
  %192 = vmatmul.mubr.bf16.gmra.mxu0 %v106
  %v193 = vpop.f32.mrf.mxu0
  %v194 = vadd.f32 %v38, %v193
  %v195 = vpop.f32.mrf.mxu0
  %v196 = vpop.f32.mrf.mxu0
  %v197 = vadd.f32 %v38, %v196
  %v198 = vpop.f32.mrf.mxu0
  %199 = vmatprep.mubr.bf16.mxu0 0
  %200 = vmatmul.mubr.bf16.gmra.mxu0 %v109
  %v201 = vpop.f32.mrf.mxu0
  %v202 = vadd.f32 %v38, %v201
  %v203 = vpop.f32.mrf.mxu0
  %v204 = vpop.f32.mrf.mxu0
  %v205 = vadd.f32 %v38, %v204
  %v206 = vpop.f32.mrf.mxu0
  %207 = vdwg.mxu0
  %v208 = vmul.f32 %v146, 0.5
  %v209 = vmul.f32 %v149, 0.5
  %v210 = vmul.f32 %v154, 0.5
  %v211 = vmul.f32 %v157, 0.5
  %v212 = vmul.f32 %v162, 0.5
  %v213 = vmul.f32 %v165, 0.5
  %v214 = vmul.f32 %v170, 0.5
  %v215 = vmul.f32 %v173, 0.5
  %v216 = vmul.f32 %v178, 0.5
  %v217 = vmul.f32 %v181, 0.5
  %v218 = vmul.f32 %v186, 0.5
  %v219 = vmul.f32 %v189, 0.5
  %v220 = vmul.f32 %v194, 0.5
  %v221 = vmul.f32 %v197, 0.5
  %v222 = vmul.f32 %v202, 0.5
  %v223 = vmul.f32 %v205, 0.5
  %v224 = vmul.f32 %v146, 0.044715
  %v225 = vmul.f32 %v149, 0.044715
  %v226 = vmul.f32 %v154, 0.044715
  %v227 = vmul.f32 %v157, 0.044715
  %v228 = vmul.f32 %v162, 0.044715
  %v229 = vmul.f32 %v165, 0.044715
  %v230 = vmul.f32 %v170, 0.044715
  %v231 = vmul.f32 %v173, 0.044715
  %v232 = vmul.f32 %v178, 0.044715
  %v233 = vmul.f32 %v181, 0.044715
  %v234 = vmul.f32 %v186, 0.044715
  %v235 = vmul.f32 %v189, 0.044715
  %v236 = vmul.f32 %v194, 0.044715
  %v237 = vmul.f32 %v197, 0.044715
  %v238 = vmul.f32 %v202, 0.044715
  %v239 = vmul.f32 %v205, 0.044715
  %v240 = vmul.f32 %v224, %v146
  %v241 = vmul.f32 %v225, %v149
  %v242 = vmul.f32 %v226, %v154
  %v243 = vmul.f32 %v227, %v157
  %v244 = vmul.f32 %v228, %v162
  %v245 = vmul.f32 %v229, %v165
  %v246 = vmul.f32 %v230, %v170
  %v247 = vmul.f32 %v231, %v173
  %v248 = vmul.f32 %v232, %v178
  %v249 = vmul.f32 %v233, %v181
  %v250 = vmul.f32 %v234, %v186
  %v251 = vmul.f32 %v235, %v189
  %v252 = vmul.f32 %v236, %v194
  %v253 = vmul.f32 %v237, %v197
  %v254 = vmul.f32 %v238, %v202
  %v255 = vmul.f32 %v239, %v205
  %v256 = vmul.f32 %v240, %v146
  %v257 = vmul.f32 %v241, %v149
  %v258 = vmul.f32 %v242, %v154
  %v259 = vmul.f32 %v243, %v157
  %v260 = vmul.f32 %v244, %v162
  %v261 = vmul.f32 %v245, %v165
  %v262 = vmul.f32 %v246, %v170
  %v263 = vmul.f32 %v247, %v173
  %v264 = vmul.f32 %v248, %v178
  %v265 = vmul.f32 %v249, %v181
  %v266 = vmul.f32 %v250, %v186
  %v267 = vmul.f32 %v251, %v189
  %v268 = vmul.f32 %v252, %v194
  %v269 = vmul.f32 %v253, %v197
  %v270 = vmul.f32 %v254, %v202
  %v271 = vmul.f32 %v255, %v205
  %v272 = vadd.f32 %v146, %v256
  %v273 = vadd.f32 %v149, %v257
  %v274 = vadd.f32 %v154, %v258
  %v275 = vadd.f32 %v157, %v259
  %v276 = vadd.f32 %v162, %v260
  %v277 = vadd.f32 %v165, %v261
  %v278 = vadd.f32 %v170, %v262
  %v279 = vadd.f32 %v173, %v263
  %v280 = vadd.f32 %v178, %v264
  %v281 = vadd.f32 %v181, %v265
  %v282 = vadd.f32 %v186, %v266
  %v283 = vadd.f32 %v189, %v267
  %v284 = vadd.f32 %v194, %v268
  %v285 = vadd.f32 %v197, %v269
  %v286 = vadd.f32 %v202, %v270
  %v287 = vadd.f32 %v205, %v271
  %v288 = vmul.f32 %v272, 0.7978846
  %v289 = vmul.f32 %v273, 0.7978846
  %v290 = vmul.f32 %v274, 0.7978846
  %v291 = vmul.f32 %v275, 0.7978846
  %v292 = vmul.f32 %v276, 0.7978846
  %v293 = vmul.f32 %v277, 0.7978846
  %v294 = vmul.f32 %v278, 0.7978846
  %v295 = vmul.f32 %v279, 0.7978846
  %v296 = vmul.f32 %v280, 0.7978846
  %v297 = vmul.f32 %v281, 0.7978846
  %v298 = vmul.f32 %v282, 0.7978846
  %v299 = vmul.f32 %v283, 0.7978846
  %v300 = vmul.f32 %v284, 0.7978846
  %v301 = vmul.f32 %v285, 0.7978846
  %v302 = vmul.f32 %v286, 0.7978846
  %v303 = vmul.f32 %v287, 0.7978846
  %v304 = vtanh.pop %v288
  %v305 = vtanh.pop %v289
  %v306 = vtanh.pop %v290
  %v307 = vtanh.pop %v291
  %v308 = vtanh.pop %v292
  %v309 = vtanh.pop %v293
  %v310 = vtanh.pop %v294
  %v311 = vtanh.pop %v295
  %v312 = vtanh.pop %v296
  %v313 = vtanh.pop %v297
  %v314 = vtanh.pop %v298
  %v315 = vtanh.pop %v299
  %v316 = vtanh.pop %v300
  %v317 = vtanh.pop %v301
  %v318 = vtanh.pop %v302
  %v319 = vtanh.pop %v303
  %v320 = vadd.f32 %v304, 1.0
  %v321 = vadd.f32 %v305, 1.0
  %v322 = vadd.f32 %v306, 1.0
  %v323 = vadd.f32 %v307, 1.0
  %v324 = vadd.f32 %v308, 1.0
  %v325 = vadd.f32 %v309, 1.0
  %v326 = vadd.f32 %v310, 1.0
  %v327 = vadd.f32 %v311, 1.0
  %v328 = vadd.f32 %v312, 1.0
  %v329 = vadd.f32 %v313, 1.0
  %v330 = vadd.f32 %v314, 1.0
  %v331 = vadd.f32 %v315, 1.0
  %v332 = vadd.f32 %v316, 1.0
  %v333 = vadd.f32 %v317, 1.0
  %v334 = vadd.f32 %v318, 1.0
  %v335 = vadd.f32 %v319, 1.0
  %v336 = vmul.f32 %v208, %v320
  %v337 = vmul.f32 %v209, %v321
  %v338 = vmul.f32 %v210, %v322
  %v339 = vmul.f32 %v211, %v323
  %v340 = vmul.f32 %v212, %v324
  %v341 = vmul.f32 %v213, %v325
  %v342 = vmul.f32 %v214, %v326
  %v343 = vmul.f32 %v215, %v327
  %v344 = vmul.f32 %v216, %v328
  %v345 = vmul.f32 %v217, %v329
  %v346 = vmul.f32 %v218, %v330
  %v347 = vmul.f32 %v219, %v331
  %v348 = vmul.f32 %v220, %v332
  %v349 = vmul.f32 %v221, %v333
  %v350 = vmul.f32 %v222, %v334
  %v351 = vmul.f32 %v223, %v335
  %v352 = vpack.c.bf16 %v337, %v336
  %v353 = vpack.c.bf16 %v339, %v338
  %v354 = vpack.c.bf16 %v341, %v340
  %v355 = vpack.c.bf16 %v343, %v342
  %v356 = vpack.c.bf16 %v345, %v344
  %v357 = vpack.c.bf16 %v347, %v346
  %v358 = vpack.c.bf16 %v349, %v348
  %v359 = vpack.c.bf16 %v351, %v350
  %v368 = vunpack.c.l.b16 %v352
  %v369 = vunpack.c.h.b16 %v352
  %v370 = vunpack.c.l.b16 %v353
  %v371 = vunpack.c.h.b16 %v353
  %v372 = vunpack.c.l.b16 %v354
  %v373 = vunpack.c.h.b16 %v354
  %v374 = vunpack.c.l.b16 %v355
  %v375 = vunpack.c.h.b16 %v355
  %v376 = vunpack.c.l.b16 %v356
  %v377 = vunpack.c.h.b16 %v356
  %v378 = vunpack.c.l.b16 %v357
  %v379 = vunpack.c.h.b16 %v357
  %v380 = vunpack.c.l.b16 %v358
  %v381 = vunpack.c.h.b16 %v358
  %v382 = vunpack.c.l.b16 %v359
  %v383 = vunpack.c.h.b16 %v359
  %v384 = vpack.c.b16 %v368, %v368
  %v385 = vpack.c.b16 %v369, %v369
  %v386 = vpack.c.b16 %v370, %v370
  %v387 = vpack.c.b16 %v371, %v371
  %v388 = vpack.c.b16 %v372, %v372
  %v389 = vpack.c.b16 %v373, %v373
  %v390 = vpack.c.b16 %v374, %v374
  %v391 = vpack.c.b16 %v375, %v375
  %v392 = vpack.c.b16 %v376, %v376
  %v393 = vpack.c.b16 %v377, %v377
  %v394 = vpack.c.b16 %v378, %v378
  %v395 = vpack.c.b16 %v379, %v379
  %v396 = vpack.c.b16 %v380, %v380
  %v397 = vpack.c.b16 %v381, %v381
  %v398 = vpack.c.b16 %v382, %v382
  %v399 = vpack.c.b16 %v383, %v383
  %vm416 = vcmask 257024
  %417 = vst.msk [vmem:[%s3] sm:$0xf] %vm416, %v384
  %418 = vst.msk [vmem:[%s3 + $0x4] sm:$0xf] %vm416, %v385
  %419 = vst.msk [vmem:[%s3 + $0x8] sm:$0xf] %vm416, %v386
  %420 = vst.msk [vmem:[%s3 + $0xc] sm:$0xf] %vm416, %v387
  %421 = vst.msk [vmem:[%s3 + $0x10] sm:$0xf] %vm416, %v388
  %422 = vst.msk [vmem:[%s3 + $0x14] sm:$0xf] %vm416, %v389
  %423 = vst.msk [vmem:[%s3 + $0x18] sm:$0xf] %vm416, %v390
  %424 = vst.msk [vmem:[%s3 + $0x1c] sm:$0xf] %vm416, %v391
  %425 = vst.msk [vmem:[%s3 + $0x20] sm:$0xf] %vm416, %v392
  %426 = vst.msk [vmem:[%s3 + $0x24] sm:$0xf] %vm416, %v393
  %427 = vst.msk [vmem:[%s3 + $0x28] sm:$0xf] %vm416, %v394
  %428 = vst.msk [vmem:[%s3 + $0x2c] sm:$0xf] %vm416, %v395
  %429 = vst.msk [vmem:[%s3 + $0x30] sm:$0xf] %vm416, %v396
  %430 = vst.msk [vmem:[%s3 + $0x34] sm:$0xf] %vm416, %v397
  %431 = vst.msk [vmem:[%s3 + $0x38] sm:$0xf] %vm416, %v398
  %432 = vst.msk [vmem:[%s3 + $0x3c] sm:$0xf] %vm416, %v399
  // Predicated region
  $region14: #{img_embedder_forward.13} parent=0 // pred_check
    _
  $region15: #{img_embedder_forward.13} parent=0 // pred_check_branch
    %434 = sbr.rel (0) target = $region17
  $region16: #{img_embedder_forward.13} parent=0 // pred_region
    _
  $region17: #{img_embedder_forward.13} parent=0 // pred_fallthru
    _
  // Predicated region
  $region18: #{img_embedder_forward.13} parent=0 // pred_check
    _
  $region19: #{img_embedder_forward.13} parent=0 // pred_check_branch
    %436 = sbr.rel (0) target = $region21
  $region20: #{img_embedder_forward.13} parent=0 // pred_region
    _
  $region21: #{img_embedder_forward.13} parent=0 // pred_fallthru
    _

// kernel: img_embedder_forward.14
$region0: #{img_embedder_forward.14}
  #allocation0 [shape = 'u32[]', space=smem, size = 0x4, offset = 0x4, fixed_abs, tag = 'smem constant byte address 0x4 - core index']
  #allocation1 [shape = 'u32[144,128]{1,0:T(1,128)}', space=vmem, size = 0x12000, scoped, tag = 'internal scratch']
  %s0 = inlined_call_operand.vmem [shape: bf16[128,32], index: 0, kind: input, shape index: {}]
  %s1 = inlined_call_operand.vmem [shape: bf16[32,16], index: 1, kind: input, shape index: {}]
  %s2 = inlined_call_operand.vmem [shape: f32[1,16], index: 2, kind: input, shape index: {}]
  %s3 = inlined_call_operand.vmem [shape: bf16[128,16], index: 3, kind: input, shape index: {}]
  %s4 = inlined_call_operand.vmem [shape: bf16[128,16], index: 4, kind: output, shape index: {}]
  %s5 = sld [smem:[#allocation0]]
  $region26: #{img_embedder_forward.14} parent=0
    _
  %s7 = ssub.s32 1, %s5
  %s8 = scalar_select 0, %s7, %s5
  // Predicated region
  $region2: #{img_embedder_forward.14} parent=0 // pred_check
    _
  $region3: #{img_embedder_forward.14} parent=0 // pred_check_branch
    %10 = sbr.rel (0) target = $region5
  $region4: #{img_embedder_forward.14} parent=0 // pred_region
    _
  $region5: #{img_embedder_forward.14} parent=0 // pred_fallthru
    _
  // Predicated region
  $region6: #{img_embedder_forward.14} parent=0 // pred_check
    _
  $region7: #{img_embedder_forward.14} parent=0 // pred_check_branch
    %12 = sbr.rel (0) target = $region9
  $region8: #{img_embedder_forward.14} parent=0 // pred_region
    _
  $region9: #{img_embedder_forward.14} parent=0 // pred_fallthru
    _
  // Predicated region
  $region10: #{img_embedder_forward.14} parent=0 // pred_check
    _
  $region11: #{img_embedder_forward.14} parent=0 // pred_check_branch
    %14 = sbr.rel (0) target = $region13
  $region12: #{img_embedder_forward.14} parent=0 // pred_region
    _
  $region13: #{img_embedder_forward.14} parent=0 // pred_fallthru
    _
  // Predicated region
  $region14: #{img_embedder_forward.14} parent=0 // pred_check
    _
  $region15: #{img_embedder_forward.14} parent=0 // pred_check_branch
    %16 = sbr.rel (0) target = $region17
  $region16: #{img_embedder_forward.14} parent=0 // pred_region
    _
  $region17: #{img_embedder_forward.14} parent=0 // pred_fallthru
    _
  %v18 = vld [vmem:[%s0] sm:$0xf]
  %v19 = vld [vmem:[%s0 + $0x4] sm:$0xf]
  %v20 = vld [vmem:[%s0 + $0x8] sm:$0xf]
  %v21 = vld [vmem:[%s0 + $0xc] sm:$0xf]
  %v22 = vld [vmem:[%s0 + $0x10] sm:$0xf]
  %v23 = vld [vmem:[%s0 + $0x14] sm:$0xf]
  %v24 = vld [vmem:[%s0 + $0x18] sm:$0xf]
  %v25 = vld [vmem:[%s0 + $0x1c] sm:$0xf]
  %v26 = vld [vmem:[%s0 + $0x20] sm:$0xf]
  %v27 = vld [vmem:[%s0 + $0x24] sm:$0xf]
  %v28 = vld [vmem:[%s0 + $0x28] sm:$0xf]
  %v29 = vld [vmem:[%s0 + $0x2c] sm:$0xf]
  %v30 = vld [vmem:[%s0 + $0x30] sm:$0xf]
  %v31 = vld [vmem:[%s0 + $0x34] sm:$0xf]
  %v32 = vld [vmem:[%s0 + $0x38] sm:$0xf]
  %v33 = vld [vmem:[%s0 + $0x3c] sm:$0xf]
  %v34 = vld [vmem:[%s1] sm:$0xf]
  %v35 = vld [vmem:[%s1 + $0x4] sm:$0xf]
  %v36 = vld [vmem:[%s1 + $0x8] sm:$0xf]
  %v37 = vld [vmem:[%s1 + $0xc] sm:$0xf]
  %v38 = vld [vmem:[%s2] sm:$0x1]
  %v40 = vlaneseq
  %v41 = vshrl.u32 %v40, 7
  %v42 = vsub.s32 0, %v41
  %v43 = vrot.slane %v38, %v42
  %v61 = vunpack.c.l.b16 %v18
  %v62 = vunpack.c.l.b16 %v19
  %v63 = vunpack.c.l.b16 %v20
  %v64 = vunpack.c.l.b16 %v21
  %v65 = vunpack.c.l.b16 %v22
  %v66 = vunpack.c.l.b16 %v23
  %v67 = vunpack.c.l.b16 %v24
  %v68 = vunpack.c.l.b16 %v25
  %v69 = vunpack.c.l.b16 %v26
  %v70 = vunpack.c.l.b16 %v27
  %v71 = vunpack.c.l.b16 %v28
  %v72 = vunpack.c.l.b16 %v29
  %v73 = vunpack.c.l.b16 %v30
  %v74 = vunpack.c.l.b16 %v31
  %v75 = vunpack.c.l.b16 %v32
  %v76 = vunpack.c.l.b16 %v33
  %v77 = vpack.c.b16 %v62, %v61
  %v78 = vpack.c.b16 %v64, %v63
  %v79 = vpack.c.b16 %v66, %v65
  %v80 = vpack.c.b16 %v68, %v67
  %v81 = vpack.c.b16 %v70, %v69
  %v82 = vpack.c.b16 %v72, %v71
  %v83 = vpack.c.b16 %v74, %v73
  %v84 = vpack.c.b16 %v76, %v75
  %v89 = vunpack.c.l.b16 %v34
  %v90 = vunpack.c.l.b16 %v35
  %v91 = vunpack.c.l.b16 %v36
  %v92 = vunpack.c.l.b16 %v37
  %v93 = vpack.c.b16 %v90, %v89
  %v94 = vpack.c.b16 %v92, %v91
  %vm97 = vcmask 261120
  %v99 = vsel %vm97, %v77, 0
  %v102 = vsel %vm97, %v78, 0
  %v105 = vsel %vm97, %v79, 0
  %v108 = vsel %vm97, %v80, 0
  %v111 = vsel %vm97, %v81, 0
  %v114 = vsel %vm97, %v82, 0
  %v117 = vsel %vm97, %v83, 0
  %v120 = vsel %vm97, %v84, 0
  %122 = vmatprep.subr.bf16.mxu0 0
  %123 = vmatpush1.bf16.msra.mxu0 0
  %124 = vmatprep.subr.bf16.mxu0 0
  %125 = vmatpush1.bf16.msra.mxu0 0
  %126 = vmatprep.subr.bf16.mxu0 0
  %127 = vmatpush1.bf16.msra.mxu0 0
  %128 = vmatprep.subr.bf16.mxu0 0
  %129 = vmatpush1.bf16.msra.mxu0 0
  %130 = vmatprep.subr.bf16.mxu0 0
  %131 = vmatpush1.bf16.msra.mxu0 0
  %132 = vmatprep.subr.bf16.mxu0 0
  %133 = vmatpush1.bf16.msra.mxu0 0
  %134 = vmatprep.subr.bf16.mxu0 0
  %135 = vmatpush1.bf16.msra.mxu0 %v94
  %136 = vmatprep.subr.bf16.mxu0 0
  %137 = vmatpush1.bf16.msra.mxu0 %v93
  %138 = vmatprep.subr.bf16.mxu0 0
  %139 = vmatpush2.bf16.msra.mxu0 0
  %140 = vmatprep.subr.bf16.mxu0 0
  %141 = vmatpush2.bf16.msra.mxu0 0
  %142 = vmatprep.subr.bf16.mxu0 0
  %143 = vmatpush2.bf16.msra.mxu0 0
  %144 = vmatprep.subr.bf16.mxu0 0
  %145 = vmatpush2.bf16.msra.mxu0 0
  %146 = vmatprep.subr.bf16.mxu0 0
  %147 = vmatpush2.bf16.msra.mxu0 0
  %148 = vmatprep.subr.bf16.mxu0 0
  %149 = vmatpush2.bf16.msra.mxu0 0
  %150 = vmatprep.subr.bf16.mxu0 0
  %151 = vmatpush2.bf16.msra.mxu0 0
  %152 = vmatprep.subr.bf16.mxu0 0
  %153 = vmatpush2.bf16.msra.mxu0 0
  %154 = vmatprep.mubr.bf16.mxu0 0
  %155 = vmatmul.mubr.bf16.gmra.mxu0 %v99
  %v156 = vpop.f32.mrf.mxu0
  %v157 = vadd.f32 %v43, %v156
  %v158 = vpop.f32.mrf.mxu0
  %v159 = vpop.f32.mrf.mxu0
  %v160 = vadd.f32 %v43, %v159
  %v161 = vpop.f32.mrf.mxu0
  %162 = vmatprep.mubr.bf16.mxu0 0
  %163 = vmatmul.mubr.bf16.gmra.mxu0 %v102
  %v164 = vpop.f32.mrf.mxu0
  %v165 = vadd.f32 %v43, %v164
  %v166 = vpop.f32.mrf.mxu0
  %v167 = vpop.f32.mrf.mxu0
  %v168 = vadd.f32 %v43, %v167
  %v169 = vpop.f32.mrf.mxu0
  %170 = vmatprep.mubr.bf16.mxu0 0
  %171 = vmatmul.mubr.bf16.gmra.mxu0 %v105
  %v172 = vpop.f32.mrf.mxu0
  %v173 = vadd.f32 %v43, %v172
  %v174 = vpop.f32.mrf.mxu0
  %v175 = vpop.f32.mrf.mxu0
  %v176 = vadd.f32 %v43, %v175
  %v177 = vpop.f32.mrf.mxu0
  %178 = vmatprep.mubr.bf16.mxu0 0
  %179 = vmatmul.mubr.bf16.gmra.mxu0 %v108
  %v180 = vpop.f32.mrf.mxu0
  %v181 = vadd.f32 %v43, %v180
  %v182 = vpop.f32.mrf.mxu0
  %v183 = vpop.f32.mrf.mxu0
  %v184 = vadd.f32 %v43, %v183
  %v185 = vpop.f32.mrf.mxu0
  %186 = vmatprep.mubr.bf16.mxu0 0
  %187 = vmatmul.mubr.bf16.gmra.mxu0 %v111
  %v188 = vpop.f32.mrf.mxu0
  %v189 = vadd.f32 %v43, %v188
  %v190 = vpop.f32.mrf.mxu0
  %v191 = vpop.f32.mrf.mxu0
  %v192 = vadd.f32 %v43, %v191
  %v193 = vpop.f32.mrf.mxu0
  %194 = vmatprep.mubr.bf16.mxu0 0
  %195 = vmatmul.mubr.bf16.gmra.mxu0 %v114
  %v196 = vpop.f32.mrf.mxu0
  %v197 = vadd.f32 %v43, %v196
  %v198 = vpop.f32.mrf.mxu0
  %v199 = vpop.f32.mrf.mxu0
  %v200 = vadd.f32 %v43, %v199
  %v201 = vpop.f32.mrf.mxu0
  %202 = vmatprep.mubr.bf16.mxu0 0
  %203 = vmatmul.mubr.bf16.gmra.mxu0 %v117
  %v204 = vpop.f32.mrf.mxu0
  %v205 = vadd.f32 %v43, %v204
  %v206 = vpop.f32.mrf.mxu0
  %v207 = vpop.f32.mrf.mxu0
  %v208 = vadd.f32 %v43, %v207
  %v209 = vpop.f32.mrf.mxu0
  %210 = vmatprep.mubr.bf16.mxu0 0
  %211 = vmatmul.mubr.bf16.gmra.mxu0 %v120
  %v212 = vpop.f32.mrf.mxu0
  %v213 = vadd.f32 %v43, %v212
  %v214 = vpop.f32.mrf.mxu0
  %v215 = vpop.f32.mrf.mxu0
  %v216 = vadd.f32 %v43, %v215
  %v217 = vpop.f32.mrf.mxu0
  %218 = vdwg.mxu0
  %v219 = vld [vmem:[%s3] sm:$0xf]
  %v220 = vld [vmem:[%s3 + $0x4] sm:$0xf]
  %v221 = vld [vmem:[%s3 + $0x8] sm:$0xf]
  %v222 = vld [vmem:[%s3 + $0xc] sm:$0xf]
  %v223 = vld [vmem:[%s3 + $0x10] sm:$0xf]
  %v224 = vld [vmem:[%s3 + $0x14] sm:$0xf]
  %v225 = vld [vmem:[%s3 + $0x18] sm:$0xf]
  %v226 = vld [vmem:[%s3 + $0x1c] sm:$0xf]
  %v227 = vld [vmem:[%s3 + $0x20] sm:$0xf]
  %v228 = vld [vmem:[%s3 + $0x24] sm:$0xf]
  %v229 = vld [vmem:[%s3 + $0x28] sm:$0xf]
  %v230 = vld [vmem:[%s3 + $0x2c] sm:$0xf]
  %v231 = vld [vmem:[%s3 + $0x30] sm:$0xf]
  %v232 = vld [vmem:[%s3 + $0x34] sm:$0xf]
  %v233 = vld [vmem:[%s3 + $0x38] sm:$0xf]
  %v234 = vld [vmem:[%s3 + $0x3c] sm:$0xf]
  %v235 = vunpack.c.l.bf16 %v219
  %v236 = vunpack.c.l.bf16 %v220
  %v237 = vunpack.c.l.bf16 %v221
  %v238 = vunpack.c.l.bf16 %v222
  %v239 = vunpack.c.l.bf16 %v223
  %v240 = vunpack.c.l.bf16 %v224
  %v241 = vunpack.c.l.bf16 %v225
  %v242 = vunpack.c.l.bf16 %v226
  %v243 = vunpack.c.l.bf16 %v227
  %v244 = vunpack.c.l.bf16 %v228
  %v245 = vunpack.c.l.bf16 %v229
  %v246 = vunpack.c.l.bf16 %v230
  %v247 = vunpack.c.l.bf16 %v231
  %v248 = vunpack.c.l.bf16 %v232
  %v249 = vunpack.c.l.bf16 %v233
  %v250 = vunpack.c.l.bf16 %v234
  %v251 = vadd.f32 %v157, %v235
  %v252 = vadd.f32 %v160, %v236
  %v253 = vadd.f32 %v165, %v237
  %v254 = vadd.f32 %v168, %v238
  %v255 = vadd.f32 %v173, %v239
  %v256 = vadd.f32 %v176, %v240
  %v257 = vadd.f32 %v181, %v241
  %v258 = vadd.f32 %v184, %v242
  %v259 = vadd.f32 %v189, %v243
  %v260 = vadd.f32 %v192, %v244
  %v261 = vadd.f32 %v197, %v245
  %v262 = vadd.f32 %v200, %v246
  %v263 = vadd.f32 %v205, %v247
  %v264 = vadd.f32 %v208, %v248
  %v265 = vadd.f32 %v213, %v249
  %v266 = vadd.f32 %v216, %v250
  %v267 = vpack.c.bf16 %v252, %v251
  %v268 = vpack.c.bf16 %v254, %v253
  %v269 = vpack.c.bf16 %v256, %v255
  %v270 = vpack.c.bf16 %v258, %v257
  %v271 = vpack.c.bf16 %v260, %v259
  %v272 = vpack.c.bf16 %v262, %v261
  %v273 = vpack.c.bf16 %v264, %v263
  %v274 = vpack.c.bf16 %v266, %v265
  %v283 = vunpack.c.l.b16 %v267
  %v284 = vunpack.c.h.b16 %v267
  %v285 = vunpack.c.l.b16 %v268
  %v286 = vunpack.c.h.b16 %v268
  %v287 = vunpack.c.l.b16 %v269
  %v288 = vunpack.c.h.b16 %v269
  %v289 = vunpack.c.l.b16 %v270
  %v290 = vunpack.c.h.b16 %v270
  %v291 = vunpack.c.l.b16 %v271
  %v292 = vunpack.c.h.b16 %v271
  %v293 = vunpack.c.l.b16 %v272
  %v294 = vunpack.c.h.b16 %v272
  %v295 = vunpack.c.l.b16 %v273
  %v296 = vunpack.c.h.b16 %v273
  %v297 = vunpack.c.l.b16 %v274
  %v298 = vunpack.c.h.b16 %v274
  %v299 = vpack.c.b16 %v283, %v283
  %v300 = vpack.c.b16 %v284, %v284
  %v301 = vpack.c.b16 %v285, %v285
  %v302 = vpack.c.b16 %v286, %v286
  %v303 = vpack.c.b16 %v287, %v287
  %v304 = vpack.c.b16 %v288, %v288
  %v305 = vpack.c.b16 %v289, %v289
  %v306 = vpack.c.b16 %v290, %v290
  %v307 = vpack.c.b16 %v291, %v291
  %v308 = vpack.c.b16 %v292, %v292
  %v309 = vpack.c.b16 %v293, %v293
  %v310 = vpack.c.b16 %v294, %v294
  %v311 = vpack.c.b16 %v295, %v295
  %v312 = vpack.c.b16 %v296, %v296
  %v313 = vpack.c.b16 %v297, %v297
  %v314 = vpack.c.b16 %v298, %v298
  %vm331 = vcmask 125952
  %332 = vst.msk [vmem:[%s4] sm:$0xf] %vm331, %v299
  %333 = vst.msk [vmem:[%s4 + $0x4] sm:$0xf] %vm331, %v300
  %334 = vst.msk [vmem:[%s4 + $0x8] sm:$0xf] %vm331, %v301
  %335 = vst.msk [vmem:[%s4 + $0xc] sm:$0xf] %vm331, %v302
  %336 = vst.msk [vmem:[%s4 + $0x10] sm:$0xf] %vm331, %v303
  %337 = vst.msk [vmem:[%s4 + $0x14] sm:$0xf] %vm331, %v304
  %338 = vst.msk [vmem:[%s4 + $0x18] sm:$0xf] %vm331, %v305
  %339 = vst.msk [vmem:[%s4 + $0x1c] sm:$0xf] %vm331, %v306
  %340 = vst.msk [vmem:[%s4 + $0x20] sm:$0xf] %vm331, %v307
  %341 = vst.msk [vmem:[%s4 + $0x24] sm:$0xf] %vm331, %v308
  %342 = vst.msk [vmem:[%s4 + $0x28] sm:$0xf] %vm331, %v309
  %343 = vst.msk [vmem:[%s4 + $0x2c] sm:$0xf] %vm331, %v310
  %344 = vst.msk [vmem:[%s4 + $0x30] sm:$0xf] %vm331, %v311
  %345 = vst.msk [vmem:[%s4 + $0x34] sm:$0xf] %vm331, %v312
  %346 = vst.msk [vmem:[%s4 + $0x38] sm:$0xf] %vm331, %v313
  %347 = vst.msk [vmem:[%s4 + $0x3c] sm:$0xf] %vm331, %v314
  // Predicated region
  $region18: #{img_embedder_forward.14} parent=0 // pred_check
    _
  $region19: #{img_embedder_forward.14} parent=0 // pred_check_branch
    %349 = sbr.rel (0) target = $region21
  $region20: #{img_embedder_forward.14} parent=0 // pred_region
    _
  $region21: #{img_embedder_forward.14} parent=0 // pred_fallthru
    _
  // Predicated region
  $region22: #{img_embedder_forward.14} parent=0 // pred_check
    _
  $region23: #{img_embedder_forward.14} parent=0 // pred_check_branch
    %351 = sbr.rel (0) target = $region25
  $region24: #{img_embedder_forward.14} parent=0 // pred_region
    _
  $region25: #{img_embedder_forward.14} parent=0 // pred_fallthru
    _

// kernel: img_embedder_forward.15
$region0: #{img_embedder_forward.15}
  #allocation0 [shape = 'u32[]', space=smem, size = 0x4, offset = 0x4, fixed_abs, tag = 'smem constant byte address 0x4 - core index']
  #allocation1 [shape = 'u32[144,128]{1,0:T(1,128)}', space=vmem, size = 0x12000, scoped, tag = 'internal scratch']
  %s0 = inlined_call_operand.vmem [shape: bf16[32,144], index: 0, kind: input, shape index: {}]
  %s1 = inlined_call_operand.vmem [shape: bf16[144,32], index: 1, kind: input, shape index: {}]
  %s2 = inlined_call_operand.vmem [shape: bf16[32,32], index: 2, kind: output, shape index: {}]
  %s3 = sld [smem:[#allocation0]]
  $region18: #{img_embedder_forward.15} parent=0
    _
  %s5 = ssub.s32 1, %s3
  %s6 = scalar_select 0, %s5, %s3
  // Predicated region
  $region2: #{img_embedder_forward.15} parent=0 // pred_check
    _
  $region3: #{img_embedder_forward.15} parent=0 // pred_check_branch
    %8 = sbr.rel (0) target = $region5
  $region4: #{img_embedder_forward.15} parent=0 // pred_region
    _
  $region5: #{img_embedder_forward.15} parent=0 // pred_fallthru
    _
  // Predicated region
  $region6: #{img_embedder_forward.15} parent=0 // pred_check
    _
  $region7: #{img_embedder_forward.15} parent=0 // pred_check_branch
    %10 = sbr.rel (0) target = $region9
  $region8: #{img_embedder_forward.15} parent=0 // pred_region
    _
  $region9: #{img_embedder_forward.15} parent=0 // pred_fallthru
    _
  %v12 = vld [vmem:[%s0] sm:$0xff]
  %v13 = vld [vmem:[%s0 + $0x8] sm:$0xff]
  %v14 = vld [vmem:[%s0 + $0x10] sm:$0xff]
  %v15 = vld [vmem:[%s0 + $0x18] sm:$0xff]
  %v16 = vld [vmem:[%s1] sm:$0xf]
  %v17 = vld [vmem:[%s1 + $0x4] sm:$0xf]
  %v18 = vld [vmem:[%s1 + $0x8] sm:$0xf]
  %v19 = vld [vmem:[%s1 + $0xc] sm:$0xf]
  %v20 = vld [vmem:[%s1 + $0x10] sm:$0xf]
  %v21 = vld [vmem:[%s1 + $0x14] sm:$0xf]
  %v22 = vld [vmem:[%s1 + $0x18] sm:$0xf]
  %v23 = vld [vmem:[%s1 + $0x1c] sm:$0xf]
  %v24 = vld [vmem:[%s1 + $0x20] sm:$0xf]
  %v25 = vld [vmem:[%s1 + $0x24] sm:$0xf]
  %v26 = vld [vmem:[%s1 + $0x28] sm:$0xf]
  %v27 = vld [vmem:[%s1 + $0x2c] sm:$0xf]
  %v28 = vld [vmem:[%s1 + $0x30] sm:$0xf]
  %v29 = vld [vmem:[%s1 + $0x34] sm:$0xf]
  %v30 = vld [vmem:[%s1 + $0x38] sm:$0xf]
  %v31 = vld [vmem:[%s1 + $0x3c] sm:$0xf]
  %v32 = vld [vmem:[%s1 + $0x40] sm:$0xf]
  %v33 = vld [vmem:[%s1 + $0x44] sm:$0xf]
  %v38 = vunpack.c.l.b16 %v12
  %v39 = vunpack.c.h.b16 %v12
  %v40 = vunpack.c.l.b16 %v13
  %v41 = vunpack.c.h.b16 %v13
  %v42 = vunpack.c.l.b16 %v14
  %v43 = vunpack.c.h.b16 %v14
  %v44 = vunpack.c.l.b16 %v15
  %v45 = vunpack.c.h.b16 %v15
  %v46 = vpack.c.b16 %v40, %v38
  %v47 = vpack.c.b16 %v41, %v39
  %v48 = vpack.c.b16 %v44, %v42
  %v49 = vpack.c.b16 %v45, %v43
  %v70 = vunpack.c.l.b16 %v16
  %v71 = vunpack.c.l.b16 %v17
  %v72 = vunpack.c.l.b16 %v18
  %v73 = vunpack.c.l.b16 %v19
  %v74 = vunpack.c.l.b16 %v20
  %v75 = vunpack.c.l.b16 %v21
  %v76 = vunpack.c.l.b16 %v22
  %v77 = vunpack.c.l.b16 %v23
  %v78 = vunpack.c.l.b16 %v24
  %v79 = vunpack.c.l.b16 %v25
  %v80 = vunpack.c.l.b16 %v26
  %v81 = vunpack.c.l.b16 %v27
  %v82 = vunpack.c.l.b16 %v28
  %v83 = vunpack.c.l.b16 %v29
  %v84 = vunpack.c.l.b16 %v30
  %v85 = vunpack.c.l.b16 %v31
  %v86 = vunpack.c.l.b16 %v32
  %v87 = vunpack.c.l.b16 %v33
  %v88 = vpack.c.b16 %v71, %v70
  %v89 = vpack.c.b16 %v73, %v72
  %v90 = vpack.c.b16 %v75, %v74
  %v91 = vpack.c.b16 %v77, %v76
  %v92 = vpack.c.b16 %v79, %v78
  %v93 = vpack.c.b16 %v81, %v80
  %v94 = vpack.c.b16 %v83, %v82
  %v95 = vpack.c.b16 %v85, %v84
  %v96 = vpack.c.b16 %v87, %v86
  %vm106 = vcmask 130048
  %v108 = vsel %vm106, %v47, 0
  %v111 = vsel %vm106, %v49, 0
  %113 = vmatprep.subr.bf16.mxu0 0
  %114 = vmatpush1.bf16.msra.mxu0 %v95
  %115 = vmatprep.subr.bf16.mxu0 0
  %116 = vmatpush1.bf16.msra.mxu0 %v94
  %117 = vmatprep.subr.bf16.mxu0 0
  %118 = vmatpush1.bf16.msra.mxu0 %v93
  %119 = vmatprep.subr.bf16.mxu0 0
  %120 = vmatpush1.bf16.msra.mxu0 %v92
  %121 = vmatprep.subr.bf16.mxu0 0
  %122 = vmatpush1.bf16.msra.mxu0 %v91
  %123 = vmatprep.subr.bf16.mxu0 0
  %124 = vmatpush1.bf16.msra.mxu0 %v90
  %125 = vmatprep.subr.bf16.mxu0 0
  %126 = vmatpush1.bf16.msra.mxu0 %v89
  %127 = vmatprep.subr.bf16.mxu0 0
  %128 = vmatpush1.bf16.msra.mxu0 %v88
  %129 = vmatprep.subr.bf16.mxu0 0
  %130 = vmatpush2.bf16.msra.mxu0 0
  %131 = vmatprep.subr.bf16.mxu0 0
  %132 = vmatpush2.bf16.msra.mxu0 0
  %133 = vmatprep.subr.bf16.mxu0 0
  %134 = vmatpush2.bf16.msra.mxu0 0
  %135 = vmatprep.subr.bf16.mxu0 0
  %136 = vmatpush2.bf16.msra.mxu0 0
  %137 = vmatprep.subr.bf16.mxu0 0
  %138 = vmatpush2.bf16.msra.mxu0 0
  %139 = vmatprep.subr.bf16.mxu0 0
  %140 = vmatpush2.bf16.msra.mxu0 0
  %141 = vmatprep.subr.bf16.mxu0 0
  %142 = vmatpush2.bf16.msra.mxu0 0
  %143 = vmatprep.subr.bf16.mxu0 0
  %144 = vmatpush2.bf16.msra.mxu0 %v96
  %145 = vmatprep.mubr.bf16.mxu0 %v108
  %146 = vmatmul.mubr.bf16.gmra.mxu0 %v46
  %v147 = vpop.f32.mrf.mxu0
  %v148 = vadd.f32 0.0, %v147
  %v149 = vpop.f32.mrf.mxu0
  %v150 = vpop.f32.mrf.mxu0
  %v151 = vadd.f32 0.0, %v150
  %v152 = vpop.f32.mrf.mxu0
  %153 = vmatprep.mubr.bf16.mxu0 %v111
  %154 = vmatmul.mubr.bf16.gmra.mxu0 %v48
  %v155 = vpop.f32.mrf.mxu0
  %v156 = vadd.f32 0.0, %v155
  %v157 = vpop.f32.mrf.mxu0
  %v158 = vpop.f32.mrf.mxu0
  %v159 = vadd.f32 0.0, %v158
  %v160 = vpop.f32.mrf.mxu0
  %161 = vdwg.mxu0
  %v162 = vpack.c.bf16 %v151, %v148
  %v163 = vpack.c.bf16 %v159, %v156
  %v166 = vunpack.c.l.b16 %v162
  %v167 = vunpack.c.h.b16 %v162
  %v168 = vunpack.c.l.b16 %v163
  %v169 = vunpack.c.h.b16 %v163
  %v170 = vpack.c.b16 %v166, %v166
  %v171 = vpack.c.b16 %v167, %v167
  %v172 = vpack.c.b16 %v168, %v168
  %v173 = vpack.c.b16 %v169, %v169
  %vm178 = vcmask 257024
  %179 = vst.msk [vmem:[%s2] sm:$0xf] %vm178, %v170
  %180 = vst.msk [vmem:[%s2 + $0x4] sm:$0xf] %vm178, %v171
  %181 = vst.msk [vmem:[%s2 + $0x8] sm:$0xf] %vm178, %v172
  %182 = vst.msk [vmem:[%s2 + $0xc] sm:$0xf] %vm178, %v173
  // Predicated region
  $region10: #{img_embedder_forward.15} parent=0 // pred_check
    _
  $region11: #{img_embedder_forward.15} parent=0 // pred_check_branch
    %184 = sbr.rel (0) target = $region13
  $region12: #{img_embedder_forward.15} parent=0 // pred_region
    _
  $region13: #{img_embedder_forward.15} parent=0 // pred_fallthru
    _
  // Predicated region
  $region14: #{img_embedder_forward.15} parent=0 // pred_check
    _
  $region15: #{img_embedder_forward.15} parent=0 // pred_check_branch
    %186 = sbr.rel (0) target = $region17
  $region16: #{img_embedder_forward.15} parent=0 // pred_region
    _
  $region17: #{img_embedder_forward.15} parent=0 // pred_fallthru
    _

// kernel: img_embedder_forward.17
$region0: #{img_embedder_forward.17}
  #allocation0 [shape = 'u32[]', space=smem, size = 0x4, offset = 0x4, fixed_abs, tag = 'smem constant byte address 0x4 - core index']
  #allocation1 [shape = 'u32[144,128]{1,0:T(1,128)}', space=vmem, size = 0x12000, scoped, tag = 'internal scratch']
  %s0 = inlined_call_operand.vmem [shape: bf16[32,32], index: 0, kind: input, shape index: {}]
  %s1 = inlined_call_operand.vmem [shape: bf16[32,64], index: 1, kind: input, shape index: {}]
  %s2 = inlined_call_operand.vmem [shape: f32[1,64], index: 2, kind: input, shape index: {}]
  %s3 = inlined_call_operand.vmem [shape: bf16[32,64], index: 3, kind: output, shape index: {}]
  %s4 = sld [smem:[#allocation0]]
  $region22: #{img_embedder_forward.17} parent=0
    _
  %s6 = ssub.s32 1, %s4
  %s7 = scalar_select 0, %s6, %s4
  // Predicated region
  $region2: #{img_embedder_forward.17} parent=0 // pred_check
    _
  $region3: #{img_embedder_forward.17} parent=0 // pred_check_branch
    %9 = sbr.rel (0) target = $region5
  $region4: #{img_embedder_forward.17} parent=0 // pred_region
    _
  $region5: #{img_embedder_forward.17} parent=0 // pred_fallthru
    _
  // Predicated region
  $region6: #{img_embedder_forward.17} parent=0 // pred_check
    _
  $region7: #{img_embedder_forward.17} parent=0 // pred_check_branch
    %11 = sbr.rel (0) target = $region9
  $region8: #{img_embedder_forward.17} parent=0 // pred_region
    _
  $region9: #{img_embedder_forward.17} parent=0 // pred_fallthru
    _
  // Predicated region
  $region10: #{img_embedder_forward.17} parent=0 // pred_check
    _
  $region11: #{img_embedder_forward.17} parent=0 // pred_check_branch
    %13 = sbr.rel (0) target = $region13
  $region12: #{img_embedder_forward.17} parent=0 // pred_region
    _
  $region13: #{img_embedder_forward.17} parent=0 // pred_fallthru
    _
  %v15 = vld [vmem:[%s0] sm:$0xf]
  %v16 = vld [vmem:[%s0 + $0x4] sm:$0xf]
  %v17 = vld [vmem:[%s0 + $0x8] sm:$0xf]
  %v18 = vld [vmem:[%s0 + $0xc] sm:$0xf]
  %v19 = vld [vmem:[%s1] sm:$0xf]
  %v20 = vld [vmem:[%s1 + $0x4] sm:$0xf]
  %v21 = vld [vmem:[%s1 + $0x8] sm:$0xf]
  %v22 = vld [vmem:[%s1 + $0xc] sm:$0xf]
  %v23 = vld [vmem:[%s2] sm:$0x1]
  %v25 = vlaneseq
  %v26 = vshrl.u32 %v25, 7
  %v27 = vsub.s32 0, %v26
  %v28 = vrot.slane %v23, %v27
  %v34 = vunpack.c.l.b16 %v15
  %v35 = vunpack.c.l.b16 %v16
  %v36 = vunpack.c.l.b16 %v17
  %v37 = vunpack.c.l.b16 %v18
  %v38 = vpack.c.b16 %v35, %v34
  %v39 = vpack.c.b16 %v37, %v36
  %v44 = vunpack.c.l.b16 %v19
  %v45 = vunpack.c.l.b16 %v20
  %v46 = vunpack.c.l.b16 %v21
  %v47 = vunpack.c.l.b16 %v22
  %v48 = vpack.c.b16 %v45, %v44
  %v49 = vpack.c.b16 %v47, %v46
  %vm52 = vcmask 261120
  %v54 = vsel %vm52, %v38, 0
  %v57 = vsel %vm52, %v39, 0
  %59 = vmatprep.subr.bf16.mxu0 0
  %60 = vmatpush1.bf16.msra.mxu0 0
  %61 = vmatprep.subr.bf16.mxu0 0
  %62 = vmatpush1.bf16.msra.mxu0 0
  %63 = vmatprep.subr.bf16.mxu0 0
  %64 = vmatpush1.bf16.msra.mxu0 0
  %65 = vmatprep.subr.bf16.mxu0 0
  %66 = vmatpush1.bf16.msra.mxu0 0
  %67 = vmatprep.subr.bf16.mxu0 0
  %68 = vmatpush1.bf16.msra.mxu0 0
  %69 = vmatprep.subr.bf16.mxu0 0
  %70 = vmatpush1.bf16.msra.mxu0 0
  %71 = vmatprep.subr.bf16.mxu0 0
  %72 = vmatpush1.bf16.msra.mxu0 %v49
  %73 = vmatprep.subr.bf16.mxu0 0
  %74 = vmatpush1.bf16.msra.mxu0 %v48
  %75 = vmatprep.subr.bf16.mxu0 0
  %76 = vmatpush2.bf16.msra.mxu0 0
  %77 = vmatprep.subr.bf16.mxu0 0
  %78 = vmatpush2.bf16.msra.mxu0 0
  %79 = vmatprep.subr.bf16.mxu0 0
  %80 = vmatpush2.bf16.msra.mxu0 0
  %81 = vmatprep.subr.bf16.mxu0 0
  %82 = vmatpush2.bf16.msra.mxu0 0
  %83 = vmatprep.subr.bf16.mxu0 0
  %84 = vmatpush2.bf16.msra.mxu0 0
  %85 = vmatprep.subr.bf16.mxu0 0
  %86 = vmatpush2.bf16.msra.mxu0 0
  %87 = vmatprep.subr.bf16.mxu0 0
  %88 = vmatpush2.bf16.msra.mxu0 0
  %89 = vmatprep.subr.bf16.mxu0 0
  %90 = vmatpush2.bf16.msra.mxu0 0
  %91 = vmatprep.mubr.bf16.mxu0 0
  %92 = vmatmul.mubr.bf16.gmra.mxu0 %v54
  %v93 = vpop.f32.mrf.mxu0
  %v94 = vadd.f32 %v28, %v93
  %v95 = vpop.f32.mrf.mxu0
  %v96 = vpop.f32.mrf.mxu0
  %v97 = vadd.f32 %v28, %v96
  %v98 = vpop.f32.mrf.mxu0
  %99 = vmatprep.mubr.bf16.mxu0 0
  %100 = vmatmul.mubr.bf16.gmra.mxu0 %v57
  %v101 = vpop.f32.mrf.mxu0
  %v102 = vadd.f32 %v28, %v101
  %v103 = vpop.f32.mrf.mxu0
  %v104 = vpop.f32.mrf.mxu0
  %v105 = vadd.f32 %v28, %v104
  %v106 = vpop.f32.mrf.mxu0
  %107 = vdwg.mxu0
  %v108 = vmul.f32 %v94, 0.5
  %v109 = vmul.f32 %v97, 0.5
  %v110 = vmul.f32 %v102, 0.5
  %v111 = vmul.f32 %v105, 0.5
  %v112 = vmul.f32 %v94, 0.044715
  %v113 = vmul.f32 %v97, 0.044715
  %v114 = vmul.f32 %v102, 0.044715
  %v115 = vmul.f32 %v105, 0.044715
  %v116 = vmul.f32 %v112, %v94
  %v117 = vmul.f32 %v113, %v97
  %v118 = vmul.f32 %v114, %v102
  %v119 = vmul.f32 %v115, %v105
  %v120 = vmul.f32 %v116, %v94
  %v121 = vmul.f32 %v117, %v97
  %v122 = vmul.f32 %v118, %v102
  %v123 = vmul.f32 %v119, %v105
  %v124 = vadd.f32 %v94, %v120
  %v125 = vadd.f32 %v97, %v121
  %v126 = vadd.f32 %v102, %v122
  %v127 = vadd.f32 %v105, %v123
  %v128 = vmul.f32 %v124, 0.7978846
  %v129 = vmul.f32 %v125, 0.7978846
  %v130 = vmul.f32 %v126, 0.7978846
  %v131 = vmul.f32 %v127, 0.7978846
  %v132 = vtanh.pop %v128
  %v133 = vtanh.pop %v129
  %v134 = vtanh.pop %v130
  %v135 = vtanh.pop %v131
  %v136 = vadd.f32 %v132, 1.0
  %v137 = vadd.f32 %v133, 1.0
  %v138 = vadd.f32 %v134, 1.0
  %v139 = vadd.f32 %v135, 1.0
  %v140 = vmul.f32 %v108, %v136
  %v141 = vmul.f32 %v109, %v137
  %v142 = vmul.f32 %v110, %v138
  %v143 = vmul.f32 %v111, %v139
  %v144 = vpack.c.bf16 %v141, %v140
  %v145 = vpack.c.bf16 %v143, %v142
  %v148 = vunpack.c.l.b16 %v144
  %v149 = vunpack.c.h.b16 %v144
  %v150 = vunpack.c.l.b16 %v145
  %v151 = vunpack.c.h.b16 %v145
  %v152 = vpack.c.b16 %v148, %v148
  %v153 = vpack.c.b16 %v149, %v149
  %v154 = vpack.c.b16 %v150, %v150
  %v155 = vpack.c.b16 %v151, %v151
  %vm160 = vcmask 519168
  %161 = vst.msk [vmem:[%s3] sm:$0xf] %vm160, %v152
  %162 = vst.msk [vmem:[%s3 + $0x4] sm:$0xf] %vm160, %v153
  %163 = vst.msk [vmem:[%s3 + $0x8] sm:$0xf] %vm160, %v154
  %164 = vst.msk [vmem:[%s3 + $0xc] sm:$0xf] %vm160, %v155
  // Predicated region
  $region14: #{img_embedder_forward.17} parent=0 // pred_check
    _
  $region15: #{img_embedder_forward.17} parent=0 // pred_check_branch
    %166 = sbr.rel (0) target = $region17
  $region16: #{img_embedder_forward.17} parent=0 // pred_region
    _
  $region17: #{img_embedder_forward.17} parent=0 // pred_fallthru
    _
  // Predicated region
  $region18: #{img_embedder_forward.17} parent=0 // pred_check
    _
  $region19: #{img_embedder_forward.17} parent=0 // pred_check_branch
    %168 = sbr.rel (0) target = $region21
  $region20: #{img_embedder_forward.17} parent=0 // pred_region
    _
  $region21: #{img_embedder_forward.17} parent=0 // pred_fallthru
    _

// kernel: img_embedder_forward.16
$region0: #{img_embedder_forward.16}
  #allocation0 [shape = 'u32[]', space=smem, size = 0x4, offset = 0x4, fixed_abs, tag = 'smem constant byte address 0x4 - core index']
  #allocation1 [shape = 'u32[144,128]{1,0:T(1,128)}', space=vmem, size = 0x12000, scoped, tag = 'internal scratch']
  #allocation2 [shape = 'f32[1,32]{1,0:T(1,128)}', space=vmem, size = 0x200, scoped, tag = 'scratch operand']
  #allocation3 [shape = 'f32[1,32]{1,0:T(1,128)}', space=vmem, size = 0x200, scoped, tag = 'scratch operand']
  %s0 = inlined_call_operand.vmem [shape: bf16[2,16,32], index: 0, kind: input, shape index: {}]
  %s1 = inlined_call_operand.vmem [shape: f32[1,1,32], index: 1, kind: input, shape index: {}]
  %s2 = inlined_call_operand.vmem [shape: f32[1,1,32], index: 2, kind: input, shape index: {}]
  %s3 = inlined_call_operand.vmem [shape: bf16[2,16,32], index: 3, kind: output, shape index: {}]
  %s4 = sld [smem:[#allocation0]]
  $region57: #{img_embedder_forward.16} parent=0
    _
  %s6 = ssub.s32 1, %s4
  %s7 = scalar_select 0, %s6, %s4
  loop: start=0, step=1, limit=6
  $region2: #{img_embedder_forward.16} parent=0 // loop_pre_header
    _
  $region3: #{img_embedder_forward.16} parent=0 // loop_header
    %s9 = sphi 0, %s13
    %p10 = scmp.ge.s32.totalorder %s9, 6
    %s16 = sphi 0, %s35
    %s17 = sphi 0, %s31
    %s18 = sphi 0, %s27
    %s19 = sphi 0, %s16
    %s20 = sphi 0, %s17
    %s21 = sphi 0, %s18
    %s22 = sphi 0, %s19
    %s23 = sphi 0, %s20
    %s24 = sphi 0, %s21
    %s40 = sphi 0, %s42
    %s43 = sphi 0, %s40
    %s44 = sphi 0, %s43
    %s60 = sphi 0, %s44
    %s64 = sphi 0, %s64
    %s66 = sphi 0, %s64
    %s67 = sphi 0, %s66
    %s81 = sphi 0, %s67
    %s85 = sphi 0, %s85
    %s87 = sphi 0, %s85
    %s88 = sphi 0, %s87
    %s102 = sphi 0, %s88
    %s112 = sphi 0, %s114
    %s115 = sphi 0, %s112
    %s116 = sphi 0, %s115
    %s132 = sphi 0, %s116
  $region4: #{img_embedder_forward.16} parent=0 // loop_header_branch
    %12 = sbr.rel (%p10) target = $region8
  $region5: #{img_embedder_forward.16} parent=0 // loop_body
    %s14 = ssub.s32 %s9, 1
    %s15 = ssub.s32 %s9, 2
    %s25 = sadd.s32 1, %s18
    %p26 = scmp.ge.s32.totalorder %s25, 1
    %s27 = scalar_select %p26, 0, %s25
    %s28 = sadd.s32 1, %s17
    %s29 = scalar_select %p26, %s28, %s17
    %p30 = scmp.ge.s32.totalorder %s29, 2
    %s31 = scalar_select %p30, 0, %s29
    %s32 = sadd.s32 1, %s16
    %s33 = scalar_select %p30, %s32, %s16
    %p34 = scmp.ge.s32.totalorder %s33, 2
    %s35 = scalar_select %p34, 0, %s33
    %s36 = ssub.s32 %s16, %s35
    %s37 = ssub.s32 %s18, %s27
    %s38 = sor.u32 %s36, %s37
    %p39 = scmp.eq.s32.totalorder %s38, 0
    %s41 = sadd.s32 %s40, 1
    %s42 = scalar_select %p39, %s40, %s41
    %p45 = pneg %p39
    %p46 = scmp.eq.s32.totalorder %s9, 3
    %p47 = por %p45, %p46
    %p48 = scmp.ne.s32.totalorder %s40, %s43
    %p49 = scmp.eq.s32.totalorder %s9, 0
    %p50 = por %p48, %p49
    %p51 = scmp.ne.s32.totalorder %s40, %s43
    %p52 = scmp.eq.s32.totalorder %s14, 3
    %p53 = por %p51, %p52
    %p54 = scmp.ne.s32.totalorder %s43, %s44
    %p55 = scmp.eq.s32.totalorder %s14, 0
    %p56 = por %p54, %p55
    %p57 = scmp.ne.s32.totalorder %s43, %s44
    %p58 = scmp.eq.s32.totalorder %s15, 3
    %p59 = por %p57, %p58
    %p61 = scmp.ne.s32.totalorder %s44, %s60
    %p62 = scmp.eq.s32.totalorder %s15, 0
    %p63 = por %p61, %p62
    %s65 = sadd.s32 %s64, 1
    %p68 = scmp.eq.s32.totalorder %s9, 3
    %p69 = scmp.ne.s32.totalorder %s64, %s66
    %p70 = scmp.eq.s32.totalorder %s9, 0
    %p71 = por %p69, %p70
    %p72 = scmp.ne.s32.totalorder %s64, %s66
    %p73 = scmp.eq.s32.totalorder %s14, 3
    %p74 = por %p72, %p73
    %p75 = scmp.ne.s32.totalorder %s66, %s67
    %p76 = scmp.eq.s32.totalorder %s14, 0
    %p77 = por %p75, %p76
    %p78 = scmp.ne.s32.totalorder %s66, %s67
    %p79 = scmp.eq.s32.totalorder %s15, 3
    %p80 = por %p78, %p79
    %p82 = scmp.ne.s32.totalorder %s67, %s81
    %p83 = scmp.eq.s32.totalorder %s15, 0
    %p84 = por %p82, %p83
    %s86 = sadd.s32 %s85, 1
    %p89 = scmp.eq.s32.totalorder %s9, 3
    %p90 = scmp.ne.s32.totalorder %s85, %s87
    %p91 = scmp.eq.s32.totalorder %s9, 0
    %p92 = por %p90, %p91
    %p93 = scmp.ne.s32.totalorder %s85, %s87
    %p94 = scmp.eq.s32.totalorder %s14, 3
    %p95 = por %p93, %p94
    %p96 = scmp.ne.s32.totalorder %s87, %s88
    %p97 = scmp.eq.s32.totalorder %s14, 0
    %p98 = por %p96, %p97
    %p99 = scmp.ne.s32.totalorder %s87, %s88
    %p100 = scmp.eq.s32.totalorder %s15, 3
    %p101 = por %p99, %p100
    %p103 = scmp.ne.s32.totalorder %s88, %s102
    %p104 = scmp.eq.s32.totalorder %s15, 0
    %p105 = por %p103, %p104
    %s106 = smul.u32 %s18, %s17
    %s107 = smul.u32 %s27, %s31
    %s108 = ssub.s32 %s16, %s35
    %s109 = ssub.s32 %s106, %s107
    %s110 = sor.u32 %s108, %s109
    %p111 = scmp.eq.s32.totalorder %s110, 0
    %s113 = sadd.s32 %s112, 1
    %s114 = scalar_select %p111, %s112, %s113
    %p117 = pneg %p111
    %p118 = scmp.eq.s32.totalorder %s9, 3
    %p119 = por %p117, %p118
    %p120 = scmp.ne.s32.totalorder %s112, %s115
    %p121 = scmp.eq.s32.totalorder %s9, 0
    %p122 = por %p120, %p121
    %p123 = scmp.ne.s32.totalorder %s112, %s115
    %p124 = scmp.eq.s32.totalorder %s14, 3
    %p125 = por %p123, %p124
    %p126 = scmp.ne.s32.totalorder %s115, %s116
    %p127 = scmp.eq.s32.totalorder %s14, 0
    %p128 = por %p126, %p127
    %p129 = scmp.ne.s32.totalorder %s115, %s116
    %p130 = scmp.eq.s32.totalorder %s15, 3
    %p131 = por %p129, %p130
    %p133 = scmp.ne.s32.totalorder %s116, %s132
    %p134 = scmp.eq.s32.totalorder %s15, 0
    %p135 = por %p133, %p134
    %p136 = scmp.le.s32.totalorder 1, %s9
    %p137 = scmp.lt.s32.totalorder %s9, 5
    %p138 = pnand %p136, %p137
    %p139 = pneg %p138
    // Predicated region
    $region9: #{img_embedder_forward.16} parent=5 // pred_check
      _
    $region10: #{img_embedder_forward.16} parent=5 // pred_check_branch
      %141 = sbr.rel (%p138) target = $region12
    $region11: #{img_embedder_forward.16} parent=5 // pred_region
      %s142 = ssub.s32 %s9, 1
      // Predicated region
      $region13: #{img_embedder_forward.16} parent=11 // pred_check
        %p143 = pneg %p77
      $region14: #{img_embedder_forward.16} parent=11 // pred_check_branch
        %145 = sbr.rel (%p143) target = $region16
      $region15: #{img_embedder_forward.16} parent=11 // pred_region
        _
      $region16: #{img_embedder_forward.16} parent=11 // pred_fallthru
        _
      // Predicated region
      $region17: #{img_embedder_forward.16} parent=11 // pred_check
        %p146 = pneg %p98
      $region18: #{img_embedder_forward.16} parent=11 // pred_check_branch
        %148 = sbr.rel (%p146) target = $region20
      $region19: #{img_embedder_forward.16} parent=11 // pred_region
        _
      $region20: #{img_embedder_forward.16} parent=11 // pred_fallthru
        _
    $region12: #{img_embedder_forward.16} parent=5 // pred_fallthru
      _
    %p149 = scmp.lt.s32.totalorder %s9, 4
    // Predicated region
    $region21: #{img_embedder_forward.16} parent=5 // pred_check
      %p150 = pneg %p149
    $region22: #{img_embedder_forward.16} parent=5 // pred_check_branch
      %152 = sbr.rel (%p150) target = $region24
    $region23: #{img_embedder_forward.16} parent=5 // pred_region
      // Predicated region
      $region25: #{img_embedder_forward.16} parent=23 // pred_check
        %p153 = pneg %p50
      $region26: #{img_embedder_forward.16} parent=23 // pred_check_branch
        %155 = sbr.rel (%p153) target = $region28
      $region27: #{img_embedder_forward.16} parent=23 // pred_region
        %s156 = smul.u32 2, %s18
        %p157 = scmp.lt.s32.totalorder %s16, 1
        %s158 = scalar_select %p157, %s16, 1
        %p159 = scmp.lt.s32.totalorder %s156, 1
        %s160 = scalar_select %p159, %s156, 1
        %s161 = smul.addr %s158, 2
        %s162 = sadd.s32 %s160, %s161
        %s163 = smul.addr %s162, 4
        %s164 = scalar_lea.vmem %s0, %s163
        %s165 = smul.u32 2, %s18
      $region28: #{img_embedder_forward.16} parent=23 // pred_fallthru
        _
    $region24: #{img_embedder_forward.16} parent=5 // pred_fallthru
      _
    %p166 = scmp.le.s32.totalorder 1, %s9
    %p167 = scmp.lt.s32.totalorder %s9, 5
    %p168 = pnand %p166, %p167
    %p169 = pneg %p168
    // Predicated region
    $region29: #{img_embedder_forward.16} parent=5 // pred_check
      _
    $region30: #{img_embedder_forward.16} parent=5 // pred_check_branch
      %171 = sbr.rel (%p168) target = $region32
    $region31: #{img_embedder_forward.16} parent=5 // pred_region
      %s172 = ssub.s32 %s9, 1
      %s173 = smul.u32 2, %s21
      %p174 = scmp.lt.s32.totalorder %s19, 1
      %s175 = scalar_select %p174, %s19, 1
      %p176 = scmp.lt.s32.totalorder %s173, 1
      %s177 = scalar_select %p176, %s173, 1
      %s178 = smul.addr %s175, 2
      %s179 = sadd.s32 %s177, %s178
      %s180 = smul.addr %s179, 4
      %s181 = scalar_lea.vmem %s0, %s180
      %p182 = pneg %p56
      %p183 = pneg %p53
      %p184 = pneg %p77
      %p185 = pneg %p74
      %p186 = pneg %p98
      %p187 = pneg %p95
      %p188 = pneg %p128
      %p189 = pneg %p125
      %s190 = smul.u32 %s21, %s20
      %s191 = smul.u32 2, %s190
      %p192 = scmp.lt.s32.totalorder %s19, 1
      %s193 = scalar_select %p192, %s19, 1
      %p194 = scmp.lt.s32.totalorder %s191, 1
      %s195 = scalar_select %p194, %s191, 1
      %s196 = smul.addr %s193, 2
      %s197 = sadd.s32 %s195, %s196
      %s198 = smul.addr %s197, 4
      %s199 = scalar_lea.vmem %s3, %s198
      %s200 = smul.u32 2, %s21
      %p201 = scmp.lt.s32.totalorder %s19, 1
      %s202 = scalar_select %p201, %s19, 1
      %p203 = scmp.lt.s32.totalorder %s200, 1
      %s204 = scalar_select %p203, %s200, 1
      %s205 = smul.addr %s202, 2
      %s206 = sadd.s32 %s204, %s205
      %s207 = smul.addr %s206, 4
      %s208 = scalar_lea.vmem %s0, %s207
      %s209 = smul.u32 2, %s21
      %s210 = smul.u32 %s21, %s20
      %s211 = smul.u32 2, %s210
      %p212 = scmp.lt.s32.totalorder %s19, 1
      %s213 = scalar_select %p212, %s19, 1
      %p214 = scmp.lt.s32.totalorder %s211, 1
      %s215 = scalar_select %p214, %s211, 1
      %s216 = smul.addr %s213, 2
      %s217 = sadd.s32 %s215, %s216
      %s218 = smul.addr %s217, 4
      %s219 = scalar_lea.vmem %s3, %s218
      %s220 = smul.u32 %s21, %s20
      %s221 = smul.u32 2, %s220
      %p222 = scmp.eq.s32.totalorder %s20, 0
      %p223 = scmp.eq.s32.totalorder %s21, 0
      %p224 = pnand %p222, %p223
      %p225 = pneg %p224
      // Predicated region
      $region33: #{img_embedder_forward.16} parent=31 // pred_check
        _
      $region34: #{img_embedder_forward.16} parent=31 // pred_check_branch
        %227 = sbr.rel (%p224) target = $region36
      $region35: #{img_embedder_forward.16} parent=31 // pred_region
        %vm228 = vcmask 253952
        %229 = vst.msk [vmem:[#allocation2] sm:$0x1] %vm228, 0.0
        %230 = vst.msk [vmem:[#allocation3] sm:$0x1] %vm228, 0.0
      $region36: #{img_embedder_forward.16} parent=31 // pred_fallthru
        _
      // Predicated region
      $region37: #{img_embedder_forward.16} parent=31 // pred_check
        %p231 = pneg %p222
      $region38: #{img_embedder_forward.16} parent=31 // pred_check_branch
        %233 = sbr.rel (%p231) target = $region40
      $region39: #{img_embedder_forward.16} parent=31 // pred_region
        %v234 = vld [vmem:[%s208] sm:$0xf]
        %v235 = vld [vmem:[%s208 + $0x4] sm:$0xf]
        %v236 = vunpack.c.l.bf16 %v234
        %v237 = vunpack.c.l.bf16 %v235
        %v238 = vld [vmem:[#allocation2] sm:$0x1]
        %vm239 = vcmask 130048
        %v241 = vsel %vm239, 1.0, 0
        %243 = vmatprep.subr.mxu0 0.0
        %244 = vmatpush1.msra.mxu0 0.0
        %245 = vmatprep.subr.mxu0 0.0
        %246 = vmatpush1.msra.mxu0 0.0
        %247 = vmatprep.subr.mxu0 0.0
        %248 = vmatpush1.msra.mxu0 0.0
        %249 = vmatprep.subr.mxu0 0.0
        %250 = vmatpush1.msra.mxu0 0.0
        %251 = vmatprep.subr.mxu0 0.0
        %252 = vmatpush1.msra.mxu0 0.0
        %253 = vmatprep.subr.mxu0 0.0
        %254 = vmatpush1.msra.mxu0 0.0
        %255 = vmatprep.subr.mxu0 0.0
        %256 = vmatpush1.msra.mxu0 0.0
        %257 = vmatprep.subr.mxu0 0.0
        %258 = vmatpush1.msra.mxu0 0.0
        %259 = vmatprep.subr.mxu0 0.0
        %260 = vmatpush1.msra.mxu0 0.0
        %261 = vmatprep.subr.mxu0 0.0
        %262 = vmatpush1.msra.mxu0 0.0
        %263 = vmatprep.subr.mxu0 0.0
        %264 = vmatpush1.msra.mxu0 0.0
        %265 = vmatprep.subr.mxu0 0.0
        %266 = vmatpush1.msra.mxu0 0.0
        %267 = vmatprep.subr.mxu0 0.0
        %268 = vmatpush1.msra.mxu0 0.0
        %269 = vmatprep.subr.mxu0 0.0
        %270 = vmatpush1.msra.mxu0 0.0
        %271 = vmatprep.subr.mxu0 0.0
        %272 = vmatpush1.msra.mxu0 %v237
        %273 = vmatprep.subr.mxu0 0.0
        %274 = vmatpush1.msra.mxu0 %v236
        %275 = vmatprep.subr.mxu0 0.0
        %276 = vmatpush2.msra.mxu0 0.0
        %277 = vmatprep.subr.mxu0 0.0
        %278 = vmatpush2.msra.mxu0 0.0
        %279 = vmatprep.subr.mxu0 0.0
        %280 = vmatpush2.msra.mxu0 0.0
        %281 = vmatprep.subr.mxu0 0.0
        %282 = vmatpush2.msra.mxu0 0.0
        %283 = vmatprep.subr.mxu0 0.0
        %284 = vmatpush2.msra.mxu0 0.0
        %285 = vmatprep.subr.mxu0 0.0
        %286 = vmatpush2.msra.mxu0 0.0
        %287 = vmatprep.subr.mxu0 0.0
        %288 = vmatpush2.msra.mxu0 0.0
        %289 = vmatprep.subr.mxu0 0.0
        %290 = vmatpush2.msra.mxu0 0.0
        %291 = vmatprep.subr.mxu0 0.0
        %292 = vmatpush2.msra.mxu0 0.0
        %293 = vmatprep.subr.mxu0 0.0
        %294 = vmatpush2.msra.mxu0 0.0
        %295 = vmatprep.subr.mxu0 0.0
        %296 = vmatpush2.msra.mxu0 0.0
        %297 = vmatprep.subr.mxu0 0.0
        %298 = vmatpush2.msra.mxu0 0.0
        %299 = vmatprep.subr.mxu0 0.0
        %300 = vmatpush2.msra.mxu0 0.0
        %301 = vmatprep.subr.mxu0 0.0
        %302 = vmatpush2.msra.mxu0 0.0
        %303 = vmatprep.subr.mxu0 0.0
        %304 = vmatpush2.msra.mxu0 0.0
        %305 = vmatprep.subr.mxu0 0.0
        %306 = vmatpush2.msra.mxu0 0.0
        %307 = vmatprep.mubr.f32.mxu0 0.0
        %308 = vmatmul.mubr.f32.gmra.mxu0 %v241
        %v309 = vpop.f32.mrf.mxu0
        %v310 = vadd.f32 0.0, %v309
        %v311 = vpop.f32.mrf.mxu0
        %312 = vdwg.mxu0
        %v313 = vadd.f32 %v238, %v310
        %vm314 = vcmask 253952
        %315 = vst.msk [vmem:[#allocation2] sm:$0x1] %vm314, %v313
        %v316 = vld [vmem:[#allocation3] sm:$0x1]
        %v317 = vmul.f32 %v236, %v236
        %v318 = vmul.f32 %v237, %v237
        %319 = vmatprep.subr.mxu0 0.0
        %320 = vmatpush1.msra.mxu0 0.0
        %321 = vmatprep.subr.mxu0 0.0
        %322 = vmatpush1.msra.mxu0 0.0
        %323 = vmatprep.subr.mxu0 0.0
        %324 = vmatpush1.msra.mxu0 0.0
        %325 = vmatprep.subr.mxu0 0.0
        %326 = vmatpush1.msra.mxu0 0.0
        %327 = vmatprep.subr.mxu0 0.0
        %328 = vmatpush1.msra.mxu0 0.0
        %329 = vmatprep.subr.mxu0 0.0
        %330 = vmatpush1.msra.mxu0 0.0
        %331 = vmatprep.subr.mxu0 0.0
        %332 = vmatpush1.msra.mxu0 0.0
        %333 = vmatprep.subr.mxu0 0.0
        %334 = vmatpush1.msra.mxu0 0.0
        %335 = vmatprep.subr.mxu0 0.0
        %336 = vmatpush1.msra.mxu0 0.0
        %337 = vmatprep.subr.mxu0 0.0
        %338 = vmatpush1.msra.mxu0 0.0
        %339 = vmatprep.subr.mxu0 0.0
        %340 = vmatpush1.msra.mxu0 0.0
        %341 = vmatprep.subr.mxu0 0.0
        %342 = vmatpush1.msra.mxu0 0.0
        %343 = vmatprep.subr.mxu0 0.0
        %344 = vmatpush1.msra.mxu0 0.0
        %345 = vmatprep.subr.mxu0 0.0
        %346 = vmatpush1.msra.mxu0 0.0
        %347 = vmatprep.subr.mxu0 0.0
        %348 = vmatpush1.msra.mxu0 %v318
        %349 = vmatprep.subr.mxu0 0.0
        %350 = vmatpush1.msra.mxu0 %v317
        %351 = vmatprep.subr.mxu0 0.0
        %352 = vmatpush2.msra.mxu0 0.0
        %353 = vmatprep.subr.mxu0 0.0
        %354 = vmatpush2.msra.mxu0 0.0
        %355 = vmatprep.subr.mxu0 0.0
        %356 = vmatpush2.msra.mxu0 0.0
        %357 = vmatprep.subr.mxu0 0.0
        %358 = vmatpush2.msra.mxu0 0.0
        %359 = vmatprep.subr.mxu0 0.0
        %360 = vmatpush2.msra.mxu0 0.0
        %361 = vmatprep.subr.mxu0 0.0
        %362 = vmatpush2.msra.mxu0 0.0
        %363 = vmatprep.subr.mxu0 0.0
        %364 = vmatpush2.msra.mxu0 0.0
        %365 = vmatprep.subr.mxu0 0.0
        %366 = vmatpush2.msra.mxu0 0.0
        %367 = vmatprep.subr.mxu0 0.0
        %368 = vmatpush2.msra.mxu0 0.0
        %369 = vmatprep.subr.mxu0 0.0
        %370 = vmatpush2.msra.mxu0 0.0
        %371 = vmatprep.subr.mxu0 0.0
        %372 = vmatpush2.msra.mxu0 0.0
        %373 = vmatprep.subr.mxu0 0.0
        %374 = vmatpush2.msra.mxu0 0.0
        %375 = vmatprep.subr.mxu0 0.0
        %376 = vmatpush2.msra.mxu0 0.0
        %377 = vmatprep.subr.mxu0 0.0
        %378 = vmatpush2.msra.mxu0 0.0
        %379 = vmatprep.subr.mxu0 0.0
        %380 = vmatpush2.msra.mxu0 0.0
        %381 = vmatprep.subr.mxu0 0.0
        %382 = vmatpush2.msra.mxu0 0.0
        %383 = vmatprep.mubr.f32.mxu0 0.0
        %384 = vmatmul.mubr.f32.gmra.mxu0 %v241
        %v385 = vpop.f32.mrf.mxu0
        %v386 = vadd.f32 0.0, %v385
        %v387 = vpop.f32.mrf.mxu0
        %388 = vdwg.mxu0
        %v389 = vadd.f32 %v316, %v386
        %390 = vst.msk [vmem:[#allocation3] sm:$0x1] %vm314, %v389
      $region40: #{img_embedder_forward.16} parent=31 // pred_fallthru
        _
      %p391 = scmp.eq.s32.totalorder %s20, 1
      // Predicated region
      $region41: #{img_embedder_forward.16} parent=31 // pred_check
        %p392 = pneg %p391
      $region42: #{img_embedder_forward.16} parent=31 // pred_check_branch
        %394 = sbr.rel (%p392) target = $region44
      $region43: #{img_embedder_forward.16} parent=31 // pred_region
        %v395 = vld [vmem:[#allocation2] sm:$0x1]
        %vm396 = vcmask 253952
        %v397 = vsel %vm396, %v395, 0.0
        %398 = vadd.xlane.f32.xlu0 %v397
        %v399 = vpop.xlane.xlu0 %398
        %v400 = vrot.slane %v399, 4
        %v401 = vadd.f32 %v399, %v400
        %v402 = vrot.slane %v401, 2
        %v403 = vadd.f32 %v401, %v402
        %v404 = vrot.slane %v403, 1
        %v405 = vadd.f32 %v403, %v404
        %s406 = vtos %v405
        %s407 = smul.f32 %s406, 0.001953125
        %v408 = vld [vmem:[#allocation3] sm:$0x1]
        %v409 = vsel %vm396, %v408, 0.0
        %410 = vadd.xlane.f32.xlu0 %v409
        %v411 = vpop.xlane.xlu0 %410
        %v412 = vrot.slane %v411, 4
        %v413 = vadd.f32 %v411, %v412
        %v414 = vrot.slane %v413, 2
        %v415 = vadd.f32 %v413, %v414
        %v416 = vrot.slane %v415, 1
        %v417 = vadd.f32 %v415, %v416
        %s418 = vtos %v417
        %s419 = smul.f32 %s418, 0.001953125
        %s420 = smul.f32 %s407, %s407
        %s421 = ssub.f32 %s419, %s420
        %s422 = smax.f32 %s421, 0.0
        %s423 = sadd.f32 %s422, 1e-05
        %v424 = vstv %s423
        %v425 = vrsqrt.pop %v424
        %s426 = vtos %v425
        %v427 = vld [vmem:[%s1] sm:$0x1]
        %v428 = vstv %s426
        %v429 = vmul.f32 %v427, %v428
        %v430 = vld [vmem:[%s2] sm:$0x1]
        %v431 = vstv %s407
        %v432 = vmul.f32 %v431, %v429
        %v433 = vsub.f32 %v430, %v432
        %v434 = vld [vmem:[%s208] sm:$0xf]
        %v435 = vld [vmem:[%s208 + $0x4] sm:$0xf]
        %v436 = vunpack.c.l.bf16 %v434
        %v437 = vunpack.c.l.bf16 %v435
        %v439 = vlaneseq
        %v440 = vshrl.u32 %v439, 7
        %v441 = vsub.s32 0, %v440
        %v442 = vrot.slane %v429, %v441
        %v444 = vmul.f32 %v436, %v442
        %v445 = vmul.f32 %v437, %v442
        %v447 = vlaneseq
        %v448 = vshrl.u32 %v447, 7
        %v449 = vsub.s32 0, %v448
        %v450 = vrot.slane %v433, %v449
        %v452 = vadd.f32 %v444, %v450
        %v453 = vadd.f32 %v445, %v450
        %v454 = vpack.c.bf16 %v453, %v452
        %v456 = vunpack.c.l.b16 %v454
        %v457 = vunpack.c.h.b16 %v454
        %v458 = vpack.c.b16 %v456, %v456
        %v459 = vpack.c.b16 %v457, %v457
        %vm462 = vcmask 257024
        %463 = vst.msk [vmem:[%s219] sm:$0xf] %vm462, %v458
        %464 = vst.msk [vmem:[%s219 + $0x4] sm:$0xf] %vm462, %v459
      $region44: #{img_embedder_forward.16} parent=31 // pred_fallthru
        _
      %s465 = smul.u32 %s21, %s20
      %s466 = smul.u32 2, %s465
      %p467 = scmp.lt.s32.totalorder %s19, 1
      %s468 = scalar_select %p467, %s19, 1
      %p469 = scmp.lt.s32.totalorder %s466, 1
      %s470 = scalar_select %p469, %s466, 1
      %s471 = smul.addr %s468, 2
      %s472 = sadd.s32 %s470, %s471
      %s473 = smul.addr %s472, 4
      %s474 = scalar_lea.vmem %s3, %s473
      // Predicated region
      $region45: #{img_embedder_forward.16} parent=31 // pred_check
        %p475 = pneg %p125
      $region46: #{img_embedder_forward.16} parent=31 // pred_check_branch
        %477 = sbr.rel (%p475) target = $region48
      $region47: #{img_embedder_forward.16} parent=31 // pred_region
        %s478 = smul.u32 %s21, %s20
        %s479 = smul.u32 2, %s478
      $region48: #{img_embedder_forward.16} parent=31 // pred_fallthru
        _
    $region32: #{img_embedder_forward.16} parent=5 // pred_fallthru
      _
    %p480 = scmp.le.s32.totalorder 2, %s9
    // Predicated region
    $region49: #{img_embedder_forward.16} parent=5 // pred_check
      %p481 = pneg %p480
    $region50: #{img_embedder_forward.16} parent=5 // pred_check_branch
      %483 = sbr.rel (%p481) target = $region52
    $region51: #{img_embedder_forward.16} parent=5 // pred_region
      %s484 = ssub.s32 %s9, 2
      // Predicated region
      $region53: #{img_embedder_forward.16} parent=51 // pred_check
        %p485 = pneg %p131
      $region54: #{img_embedder_forward.16} parent=51 // pred_check_branch
        %487 = sbr.rel (%p485) target = $region56
      $region55: #{img_embedder_forward.16} parent=51 // pred_region
        %s488 = smul.u32 %s24, %s23
        %s489 = smul.u32 2, %s488
        %p490 = scmp.lt.s32.totalorder %s22, 1
        %s491 = scalar_select %p490, %s22, 1
        %p492 = scmp.lt.s32.totalorder %s489, 1
        %s493 = scalar_select %p492, %s489, 1
        %s494 = smul.addr %s491, 2
        %s495 = sadd.s32 %s493, %s494
        %s496 = smul.addr %s495, 4
        %s497 = scalar_lea.vmem %s3, %s496
      $region56: #{img_embedder_forward.16} parent=51 // pred_fallthru
        _
    $region52: #{img_embedder_forward.16} parent=5 // pred_fallthru
      _
  $region6: #{img_embedder_forward.16} parent=0 // loop_footer
    %s13 = sadd.s32 1, %s9
  $region7: #{img_embedder_forward.16} parent=0 // loop_footer_branch
    %8 = sbr.rel target = $region3
  $region8: #{img_embedder_forward.16} parent=0 // loop_exit
    _

// kernel: img_embedder_forward.18
$region0: #{img_embedder_forward.18}
  #allocation0 [shape = 'u32[]', space=smem, size = 0x4, offset = 0x4, fixed_abs, tag = 'smem constant byte address 0x4 - core index']
  #allocation1 [shape = 'u32[144,128]{1,0:T(1,128)}', space=vmem, size = 0x12000, scoped, tag = 'internal scratch']
  %s0 = inlined_call_operand.vmem [shape: bf16[32,64], index: 0, kind: input, shape index: {}]
  %s1 = inlined_call_operand.vmem [shape: bf16[64,32], index: 1, kind: input, shape index: {}]
  %s2 = inlined_call_operand.vmem [shape: f32[1,32], index: 2, kind: input, shape index: {}]
  %s3 = inlined_call_operand.vmem [shape: bf16[32,32], index: 3, kind: input, shape index: {}]
  %s4 = inlined_call_operand.vmem [shape: bf16[32,32], index: 4, kind: output, shape index: {}]
  %s5 = sld [smem:[#allocation0]]
  $region26: #{img_embedder_forward.18} parent=0
    _
  %s7 = ssub.s32 1, %s5
  %s8 = scalar_select 0, %s7, %s5
  // Predicated region
  $region2: #{img_embedder_forward.18} parent=0 // pred_check
    _
  $region3: #{img_embedder_forward.18} parent=0 // pred_check_branch
    %10 = sbr.rel (0) target = $region5
  $region4: #{img_embedder_forward.18} parent=0 // pred_region
    _
  $region5: #{img_embedder_forward.18} parent=0 // pred_fallthru
    _
  // Predicated region
  $region6: #{img_embedder_forward.18} parent=0 // pred_check
    _
  $region7: #{img_embedder_forward.18} parent=0 // pred_check_branch
    %12 = sbr.rel (0) target = $region9
  $region8: #{img_embedder_forward.18} parent=0 // pred_region
    _
  $region9: #{img_embedder_forward.18} parent=0 // pred_fallthru
    _
  // Predicated region
  $region10: #{img_embedder_forward.18} parent=0 // pred_check
    _
  $region11: #{img_embedder_forward.18} parent=0 // pred_check_branch
    %14 = sbr.rel (0) target = $region13
  $region12: #{img_embedder_forward.18} parent=0 // pred_region
    _
  $region13: #{img_embedder_forward.18} parent=0 // pred_fallthru
    _
  // Predicated region
  $region14: #{img_embedder_forward.18} parent=0 // pred_check
    _
  $region15: #{img_embedder_forward.18} parent=0 // pred_check_branch
    %16 = sbr.rel (0) target = $region17
  $region16: #{img_embedder_forward.18} parent=0 // pred_region
    _
  $region17: #{img_embedder_forward.18} parent=0 // pred_fallthru
    _
  %v18 = vld [vmem:[%s0] sm:$0xf]
  %v19 = vld [vmem:[%s0 + $0x4] sm:$0xf]
  %v20 = vld [vmem:[%s0 + $0x8] sm:$0xf]
  %v21 = vld [vmem:[%s0 + $0xc] sm:$0xf]
  %v22 = vld [vmem:[%s1] sm:$0xf]
  %v23 = vld [vmem:[%s1 + $0x4] sm:$0xf]
  %v24 = vld [vmem:[%s1 + $0x8] sm:$0xf]
  %v25 = vld [vmem:[%s1 + $0xc] sm:$0xf]
  %v26 = vld [vmem:[%s1 + $0x10] sm:$0xf]
  %v27 = vld [vmem:[%s1 + $0x14] sm:$0xf]
  %v28 = vld [vmem:[%s1 + $0x18] sm:$0xf]
  %v29 = vld [vmem:[%s1 + $0x1c] sm:$0xf]
  %v30 = vld [vmem:[%s2] sm:$0x1]
  %v32 = vlaneseq
  %v33 = vshrl.u32 %v32, 7
  %v34 = vsub.s32 0, %v33
  %v35 = vrot.slane %v30, %v34
  %v41 = vunpack.c.l.b16 %v18
  %v42 = vunpack.c.l.b16 %v19
  %v43 = vunpack.c.l.b16 %v20
  %v44 = vunpack.c.l.b16 %v21
  %v45 = vpack.c.b16 %v42, %v41
  %v46 = vpack.c.b16 %v44, %v43
  %v55 = vunpack.c.l.b16 %v22
  %v56 = vunpack.c.l.b16 %v23
  %v57 = vunpack.c.l.b16 %v24
  %v58 = vunpack.c.l.b16 %v25
  %v59 = vunpack.c.l.b16 %v26
  %v60 = vunpack.c.l.b16 %v27
  %v61 = vunpack.c.l.b16 %v28
  %v62 = vunpack.c.l.b16 %v29
  %v63 = vpack.c.b16 %v56, %v55
  %v64 = vpack.c.b16 %v58, %v57
  %v65 = vpack.c.b16 %v60, %v59
  %v66 = vpack.c.b16 %v62, %v61
  %vm71 = vcmask 523264
  %v73 = vsel %vm71, %v45, 0
  %v76 = vsel %vm71, %v46, 0
  %78 = vmatprep.subr.bf16.mxu0 0
  %79 = vmatpush1.bf16.msra.mxu0 0
  %80 = vmatprep.subr.bf16.mxu0 0
  %81 = vmatpush1.bf16.msra.mxu0 0
  %82 = vmatprep.subr.bf16.mxu0 0
  %83 = vmatpush1.bf16.msra.mxu0 0
  %84 = vmatprep.subr.bf16.mxu0 0
  %85 = vmatpush1.bf16.msra.mxu0 0
  %86 = vmatprep.subr.bf16.mxu0 0
  %87 = vmatpush1.bf16.msra.mxu0 %v66
  %88 = vmatprep.subr.bf16.mxu0 0
  %89 = vmatpush1.bf16.msra.mxu0 %v65
  %90 = vmatprep.subr.bf16.mxu0 0
  %91 = vmatpush1.bf16.msra.mxu0 %v64
  %92 = vmatprep.subr.bf16.mxu0 0
  %93 = vmatpush1.bf16.msra.mxu0 %v63
  %94 = vmatprep.subr.bf16.mxu0 0
  %95 = vmatpush2.bf16.msra.mxu0 0
  %96 = vmatprep.subr.bf16.mxu0 0
  %97 = vmatpush2.bf16.msra.mxu0 0
  %98 = vmatprep.subr.bf16.mxu0 0
  %99 = vmatpush2.bf16.msra.mxu0 0
  %100 = vmatprep.subr.bf16.mxu0 0
  %101 = vmatpush2.bf16.msra.mxu0 0
  %102 = vmatprep.subr.bf16.mxu0 0
  %103 = vmatpush2.bf16.msra.mxu0 0
  %104 = vmatprep.subr.bf16.mxu0 0
  %105 = vmatpush2.bf16.msra.mxu0 0
  %106 = vmatprep.subr.bf16.mxu0 0
  %107 = vmatpush2.bf16.msra.mxu0 0
  %108 = vmatprep.subr.bf16.mxu0 0
  %109 = vmatpush2.bf16.msra.mxu0 0
  %110 = vmatprep.mubr.bf16.mxu0 0
  %111 = vmatmul.mubr.bf16.gmra.mxu0 %v73
  %v112 = vpop.f32.mrf.mxu0
  %v113 = vadd.f32 %v35, %v112
  %v114 = vpop.f32.mrf.mxu0
  %v115 = vpop.f32.mrf.mxu0
  %v116 = vadd.f32 %v35, %v115
  %v117 = vpop.f32.mrf.mxu0
  %118 = vmatprep.mubr.bf16.mxu0 0
  %119 = vmatmul.mubr.bf16.gmra.mxu0 %v76
  %v120 = vpop.f32.mrf.mxu0
  %v121 = vadd.f32 %v35, %v120
  %v122 = vpop.f32.mrf.mxu0
  %v123 = vpop.f32.mrf.mxu0
  %v124 = vadd.f32 %v35, %v123
  %v125 = vpop.f32.mrf.mxu0
  %126 = vdwg.mxu0
  %v127 = vld [vmem:[%s3] sm:$0xf]
  %v128 = vld [vmem:[%s3 + $0x4] sm:$0xf]
  %v129 = vld [vmem:[%s3 + $0x8] sm:$0xf]
  %v130 = vld [vmem:[%s3 + $0xc] sm:$0xf]
  %v131 = vunpack.c.l.bf16 %v127
  %v132 = vunpack.c.l.bf16 %v128
  %v133 = vunpack.c.l.bf16 %v129
  %v134 = vunpack.c.l.bf16 %v130
  %v135 = vadd.f32 %v113, %v131
  %v136 = vadd.f32 %v116, %v132
  %v137 = vadd.f32 %v121, %v133
  %v138 = vadd.f32 %v124, %v134
  %v139 = vpack.c.bf16 %v136, %v135
  %v140 = vpack.c.bf16 %v138, %v137
  %v143 = vunpack.c.l.b16 %v139
  %v144 = vunpack.c.h.b16 %v139
  %v145 = vunpack.c.l.b16 %v140
  %v146 = vunpack.c.h.b16 %v140
  %v147 = vpack.c.b16 %v143, %v143
  %v148 = vpack.c.b16 %v144, %v144
  %v149 = vpack.c.b16 %v145, %v145
  %v150 = vpack.c.b16 %v146, %v146
  %vm155 = vcmask 257024
  %156 = vst.msk [vmem:[%s4] sm:$0xf] %vm155, %v147
  %157 = vst.msk [vmem:[%s4 + $0x4] sm:$0xf] %vm155, %v148
  %158 = vst.msk [vmem:[%s4 + $0x8] sm:$0xf] %vm155, %v149
  %159 = vst.msk [vmem:[%s4 + $0xc] sm:$0xf] %vm155, %v150
  // Predicated region
  $region18: #{img_embedder_forward.18} parent=0 // pred_check
    _
  $region19: #{img_embedder_forward.18} parent=0 // pred_check_branch
    %161 = sbr.rel (0) target = $region21
  $region20: #{img_embedder_forward.18} parent=0 // pred_region
    _
  $region21: #{img_embedder_forward.18} parent=0 // pred_fallthru
    _
  // Predicated region
  $region22: #{img_embedder_forward.18} parent=0 // pred_check
    _
  $region23: #{img_embedder_forward.18} parent=0 // pred_check_branch
    %163 = sbr.rel (0) target = $region25
  $region24: #{img_embedder_forward.18} parent=0 // pred_region
    _
  $region25: #{img_embedder_forward.18} parent=0 // pred_fallthru
    _

// kernel: img_embedder_forward.19
$region0: #{img_embedder_forward.19}
  #allocation0 [shape = 'u32[]', space=smem, size = 0x4, offset = 0x4, fixed_abs, tag = 'smem constant byte address 0x4 - core index']
  #allocation1 [shape = 'u32[144,128]{1,0:T(1,128)}', space=vmem, size = 0x12000, scoped, tag = 'internal scratch']
  #allocation2 [shape = 'f32[2,32]{1,0:T(2,128)}', space=vmem, size = 0x400, scoped, tag = 'scratch operand']
  %s0 = inlined_call_operand.vmem [shape: bf16[2,16,32], index: 0, kind: input, shape index: {}]
  %s1 = inlined_call_operand.vmem [shape: f32[1,32], index: 1, kind: input, shape index: {}]
  %s2 = inlined_call_operand.vmem [shape: f32[1,32], index: 2, kind: input, shape index: {}]
  %s3 = inlined_call_operand.vmem [shape: bf16[32,32], index: 3, kind: input, shape index: {}]
  %s4 = inlined_call_operand.vmem [shape: f32[1,32], index: 4, kind: input, shape index: {}]
  %s5 = inlined_call_operand.hbm [shape: f32[2,32], index: 5, kind: output, shape index: {}]
  %s6 = sld [smem:[#allocation0]]
  $region38: #{img_embedder_forward.19} parent=0
    _
  %s8 = ssub.s32 1, %s6
  %s9 = scalar_select 0, %s8, %s6
  $region1: #{img_embedder_forward.19} parent=0
    #allocation3 [shape = 'u8[1024]{0}', space=vmem, size = 0x400, scoped, tag = 'output window, operand 0, single buffered']
    #allocation4 [shape = 's32[1]{0}', space=sflag, size = 0x4, scoped, tag = 'scoped memory for img_embedder_forward.19']
    %10 = vsyncpa [#allocation4], 0
    // Predicated region
    $region2: #{img_embedder_forward.19} parent=1 // pred_check
      _
    $region3: #{img_embedder_forward.19} parent=1 // pred_check_branch
      %12 = sbr.rel (0) target = $region5
    $region4: #{img_embedder_forward.19} parent=1 // pred_region
      _
    $region5: #{img_embedder_forward.19} parent=1 // pred_fallthru
      _
    // Predicated region
    $region6: #{img_embedder_forward.19} parent=1 // pred_check
      _
    $region7: #{img_embedder_forward.19} parent=1 // pred_check_branch
      %14 = sbr.rel (0) target = $region9
    $region8: #{img_embedder_forward.19} parent=1 // pred_region
      _
    $region9: #{img_embedder_forward.19} parent=1 // pred_fallthru
      _
    // Predicated region
    $region10: #{img_embedder_forward.19} parent=1 // pred_check
      _
    $region11: #{img_embedder_forward.19} parent=1 // pred_check_branch
      %16 = sbr.rel (0) target = $region13
    $region12: #{img_embedder_forward.19} parent=1 // pred_region
      _
    $region13: #{img_embedder_forward.19} parent=1 // pred_fallthru
      _
    // Predicated region
    $region14: #{img_embedder_forward.19} parent=1 // pred_check
      _
    $region15: #{img_embedder_forward.19} parent=1 // pred_check_branch
      %18 = sbr.rel (0) target = $region17
    $region16: #{img_embedder_forward.19} parent=1 // pred_region
      _
    $region17: #{img_embedder_forward.19} parent=1 // pred_fallthru
      _
    // Predicated region
    $region18: #{img_embedder_forward.19} parent=1 // pred_check
      _
    $region19: #{img_embedder_forward.19} parent=1 // pred_check_branch
      %20 = sbr.rel (0) target = $region21
    $region20: #{img_embedder_forward.19} parent=1 // pred_region
      _
    $region21: #{img_embedder_forward.19} parent=1 // pred_fallthru
      _
    %p22 = scmp.eq.s32.totalorder 0, 0
    // Predicated region
    $region22: #{img_embedder_forward.19} parent=1 // pred_check
      %p23 = pneg %p22
    $region23: #{img_embedder_forward.19} parent=1 // pred_check_branch
      %25 = sbr.rel (%p23) target = $region25
    $region24: #{img_embedder_forward.19} parent=1 // pred_region
      %vm26 = vcmask 254976
      %27 = vst.msk [vmem:[#allocation2] sm:$0x3] %vm26, 0.0
    $region25: #{img_embedder_forward.19} parent=1 // pred_fallthru
      _
    %v28 = vld [vmem:[#allocation2] sm:$0x3]
    %v29 = vld [vmem:[%s0] sm:$0xf]
    %v30 = vld [vmem:[%s0 + $0x4] sm:$0xf]
    %v31 = vld [vmem:[%s0 + $0x8] sm:$0xf]
    %v32 = vld [vmem:[%s0 + $0xc] sm:$0xf]
    %v33 = vunpack.c.l.bf16 %v29
    %v34 = vunpack.c.l.bf16 %v30
    %v35 = vunpack.c.l.bf16 %v31
    %v36 = vunpack.c.l.bf16 %v32
    %vm37 = vcmask 261120
    %v38 = vsel %vm37, %v33, 0.0
    %v39 = vsel %vm37, %v34, 0.0
    %v40 = vadd.f32 %v38, %v39
    %v41 = vrot.slane %v40, 4
    %v42 = vadd.f32 %v40, %v41
    %v43 = vrot.slane %v42, 2
    %v44 = vadd.f32 %v42, %v43
    %v45 = vrot.slane %v44, 1
    %v46 = vadd.f32 %v44, %v45
    %v47 = vsel %vm37, %v35, 0.0
    %v48 = vsel %vm37, %v36, 0.0
    %v49 = vadd.f32 %v47, %v48
    %v50 = vrot.slane %v49, 4
    %v51 = vadd.f32 %v49, %v50
    %v52 = vrot.slane %v51, 2
    %v53 = vadd.f32 %v51, %v52
    %v54 = vrot.slane %v53, 1
    %v55 = vadd.f32 %v53, %v54
    %vm58 = vcmask 1041409
    %v59 = vsel %vm58, %v55, %v46
    %v61 = vadd.f32 %v28, %v59
    %vm62 = vcmask 254976
    %63 = vst.msk [vmem:[#allocation2] sm:$0x3] %vm62, %v61
    // Predicated region
    $region26: #{img_embedder_forward.19} parent=1 // pred_check
      %p64 = pneg %p22
    $region27: #{img_embedder_forward.19} parent=1 // pred_check_branch
      %66 = sbr.rel (%p64) target = $region29
    $region28: #{img_embedder_forward.19} parent=1 // pred_region
      %v67 = vld [vmem:[#allocation2] sm:$0x3]
      %v68 = vmul.f32 %v67, 0.0625
      %v69 = vsel %vm62, %v68, 0.0
      %70 = vadd.xlane.f32.xlu0 %v69
      %v71 = vpop.xlane.xlu0 %70
      %v72 = vmul.f32 %v71, 0.03125
      %v73 = vmul.f32 %v68, %v68
      %v74 = vsel %vm62, %v73, 0.0
      %75 = vadd.xlane.f32.xlu0 %v74
      %v76 = vpop.xlane.xlu0 %75
      %v77 = vmul.f32 %v76, 0.03125
      %v78 = vmul.f32 %v72, %v72
      %v79 = vsub.f32 %v77, %v78
      %v80 = vmax.f32 %v79, 0.0
      %v81 = vld [vmem:[%s1] sm:$0x1]
      %v82 = vadd.f32 %v80, 1e-05
      %v83 = vrsqrt.pop %v82
      %v85 = vlaneseq
      %v86 = vshrl.u32 %v85, 7
      %v87 = vsub.s32 0, %v86
      %v88 = vrot.slane %v81, %v87
      %v90 = vmul.f32 %v88, %v83
      %v91 = vmul.f32 %v68, %v90
      %v92 = vld [vmem:[%s2] sm:$0x1]
      %v93 = vmul.f32 %v72, %v90
      %v95 = vlaneseq
      %v96 = vshrl.u32 %v95, 7
      %v97 = vsub.s32 0, %v96
      %v98 = vrot.slane %v92, %v97
      %v100 = vsub.f32 %v98, %v93
      %v101 = vadd.f32 %v91, %v100
      %v102 = vpack.c.bf16 %v101, %v101
      %v103 = vld [vmem:[%s3] sm:$0xf]
      %v104 = vld [vmem:[%s3 + $0x4] sm:$0xf]
      %v105 = vld [vmem:[%s3 + $0x8] sm:$0xf]
      %v106 = vld [vmem:[%s3 + $0xc] sm:$0xf]
      %v107 = vld [vmem:[%s4] sm:$0x1]
      %v109 = vlaneseq
      %v110 = vshrl.u32 %v109, 7
      %v111 = vsub.s32 0, %v110
      %v112 = vrot.slane %v107, %v111
      %v118 = vunpack.c.l.b16 %v103
      %v119 = vunpack.c.l.b16 %v104
      %v120 = vunpack.c.l.b16 %v105
      %v121 = vunpack.c.l.b16 %v106
      %v122 = vpack.c.b16 %v119, %v118
      %v123 = vpack.c.b16 %v121, %v120
      %v127 = vsel %vm37, %v102, 0
      %129 = vmatprep.subr.bf16.mxu0 0
      %130 = vmatpush1.bf16.msra.mxu0 0
      %131 = vmatprep.subr.bf16.mxu0 0
      %132 = vmatpush1.bf16.msra.mxu0 0
      %133 = vmatprep.subr.bf16.mxu0 0
      %134 = vmatpush1.bf16.msra.mxu0 0
      %135 = vmatprep.subr.bf16.mxu0 0
      %136 = vmatpush1.bf16.msra.mxu0 0
      %137 = vmatprep.subr.bf16.mxu0 0
      %138 = vmatpush1.bf16.msra.mxu0 0
      %139 = vmatprep.subr.bf16.mxu0 0
      %140 = vmatpush1.bf16.msra.mxu0 0
      %141 = vmatprep.subr.bf16.mxu0 0
      %142 = vmatpush1.bf16.msra.mxu0 %v123
      %143 = vmatprep.subr.bf16.mxu0 0
      %144 = vmatpush1.bf16.msra.mxu0 %v122
      %145 = vmatprep.subr.bf16.mxu0 0
      %146 = vmatpush2.bf16.msra.mxu0 0
      %147 = vmatprep.subr.bf16.mxu0 0
      %148 = vmatpush2.bf16.msra.mxu0 0
      %149 = vmatprep.subr.bf16.mxu0 0
      %150 = vmatpush2.bf16.msra.mxu0 0
      %151 = vmatprep.subr.bf16.mxu0 0
      %152 = vmatpush2.bf16.msra.mxu0 0
      %153 = vmatprep.subr.bf16.mxu0 0
      %154 = vmatpush2.bf16.msra.mxu0 0
      %155 = vmatprep.subr.bf16.mxu0 0
      %156 = vmatpush2.bf16.msra.mxu0 0
      %157 = vmatprep.subr.bf16.mxu0 0
      %158 = vmatpush2.bf16.msra.mxu0 0
      %159 = vmatprep.subr.bf16.mxu0 0
      %160 = vmatpush2.bf16.msra.mxu0 0
      %161 = vmatprep.mubr.bf16.mxu0 0
      %162 = vmatmul.mubr.bf16.gmra.mxu0 %v127
      %v163 = vpop.f32.mrf.mxu0
      %v164 = vadd.f32 %v112, %v163
      %v165 = vpop.f32.mrf.mxu0
      %v166 = vpop.f32.mrf.mxu0
      %v167 = vpop.f32.mrf.mxu0
      %168 = vdwg.mxu0
      %169 = vst.msk [vmem:[#allocation3] sm:$0x3] %vm62, %v164
    $region29: #{img_embedder_forward.19} parent=1 // pred_fallthru
      _
    // Predicated region
    $region30: #{img_embedder_forward.19} parent=1 // pred_check
      _
    $region31: #{img_embedder_forward.19} parent=1 // pred_check_branch
      %171 = sbr.rel (0) target = $region33
    $region32: #{img_embedder_forward.19} parent=1 // pred_region
      %s173 = ssub.s32 32, 32
      %174 = vsyncadd [#allocation4], %s173
      %s176 = sshll.u32 [#allocation3], 4
      %s177 = int_to_ptr.vmem [resolvable:$true] %s176
      %179 = dma.vmem_to_hbm [thread:$0]  %s177, 32, %s5, [#allocation4]
    $region33: #{img_embedder_forward.19} parent=1 // pred_fallthru
      _
    // Predicated region
    $region34: #{img_embedder_forward.19} parent=1 // pred_check
      _
    $region35: #{img_embedder_forward.19} parent=1 // pred_check_branch
      %181 = sbr.rel (0) target = $region37
    $region36: #{img_embedder_forward.19} parent=1 // pred_region
      %182 = dma.done [#allocation4], 32
    $region37: #{img_embedder_forward.19} parent=1 // pred_fallthru
      _
    %183 = vsyncpa [#allocation4], 1

</llo_original>
